<compile_context>
chip_gen: v6e
topology: v6e:2x2x1
jax: 0.10.0
libtpu: 0.0.40
codegen_flags: <defaults>
</compile_context>

<pallas_src>
import functools

import numpy as np
import jax
import jax.numpy as jnp
from jax.experimental import pallas as pl
from jax.experimental.pallas import tpu as pltpu


def _silu(x):
    return x * jax.nn.sigmoid(x)


# ------------------------------- Pallas kernel --------------------------------
def cib_kernel(x_ref,
               w_dw_in, b_dw_in,
               w_pw1, b_pw1,
               w_dw_mid, b_dw_mid,
               w_pw2, b_pw2,
               w_dw_out, b_dw_out,
               out_ref,
               buf_ref,
               *, H, W, k_mid, add, pad_rows, r_max):
    f32 = jnp.float32
    bf16 = jnp.bfloat16
    N = H * W

    # Zero the halo rows of the staging buffer. The middle N rows are the only ones ever
    # rewritten below, so the halo stays zero for every depthwise conv in this step.
    # (Kept per-iteration rather than @pl.when(program_id==0) for megacore correctness —
    # see header note; cost is ~2*pad_rows*C stores, i.e. a few vregs per image.)
    cbuf = buf_ref.shape[1]
    zero_halo = jnp.zeros((pad_rows, cbuf), f32)
    buf_ref[0:pad_rows, :] = zero_halo
    buf_ref[pad_rows + N:pad_rows + N + pad_rows, :] = zero_halo

    # Horizontal (left/right image border) validity masks, one per dx, hoisted and shared
    # by all three depthwise convs.
    col = jax.lax.broadcasted_iota(jnp.int32, (N, 1), 0) % W
    masks = {dx: ((col + dx >= 0) & (col + dx < W)).astype(f32)
             for dx in range(-r_max, r_max + 1) if dx != 0}

    def dw_conv_silu(v, w_ref, b_ref, K):
        """Depthwise KxK conv (BN folded) + SiLU on an (N, C) channel-last tile.

        Accumulation is grouped by dx:
            out = sum_dx mask[dx] * roll( sum_dy row[dy] * w[dy, dx], -dx )
        where row[dy] is a sublane-aligned (N, C) window load at offset pad_rows + dy*W.
        Rows wrapped by the circular roll are exactly the rows zeroed by mask[dx].
        """
        C = v.shape[1]
        r = K // 2
        # Stage the activation: buffer row pad_rows + n  <->  flattened pixel n.
        buf_ref[pad_rows:pad_rows + N, 0:C] = v
        acc = None
        for kx in range(K):                                        # static, fully unrolled
            dx = kx - r
            grp = None
            for ky in range(K):
                dy = ky - r
                start = pad_rows + dy * W                          # multiple of 8 when W%8==0
                row = buf_ref[start:start + N, 0:C]                # aligned (N, C) load
                term = row * w_ref[ky * K + kx:ky * K + kx + 1, :]  # per-channel tap weight
                grp = term if grp is None else grp + term
            if dx != 0:
                grp = pltpu.roll(grp, (-dx) % N, 0)                # out[n] = grp[(n+dx) % N]
                grp = grp * masks[dx]                              # one mask mul per dx group
            acc = grp if acc is None else acc + grp
        return _silu(acc + b_ref[...])

    # cv1[0]: depthwise 3x3 on c1  (x re-read later for the residual; not kept live)
    h = dw_conv_silu(x_ref[...].astype(f32), w_dw_in, b_dw_in, 3)
    # cv1[1]: pointwise 1x1, c1 -> 2*c_   (bf16 operands, f32 accumulation)
    h = _silu(jnp.dot(h.astype(bf16), w_pw1[...], preferred_element_type=f32) + b_pw1[...])
    # cv1[2]: depthwise 3x3 (lk=False) or RepVGGDW fused into a single depthwise 7x7 (lk=True)
    h = dw_conv_silu(h, w_dw_mid, b_dw_mid, k_mid)
    # cv1[3]: pointwise 1x1, 2*c_ -> c2
    h = _silu(jnp.dot(h.astype(bf16), w_pw2[...], preferred_element_type=f32) + b_pw2[...])
    # cv1[4]: depthwise 3x3 on c2
    h = dw_conv_silu(h, w_dw_out, b_dw_out, 3)

    if add:
        h = h + x_ref[...].astype(f32)
    out_ref[...] = h.astype(out_ref.dtype)


# --------------------------------- wrapper -------------------------------------
_PARAM_ORDER = ('w_dw_in', 'b_dw_in', 'w_pw1', 'b_pw1', 'w_dw_mid', 'b_dw_mid',
                'w_pw2', 'b_pw2', 'w_dw_out', 'b_dw_out')
_BF16_WEIGHTS = ('w_pw1', 'w_pw2')          # 1x1 matmul operands: bf16 on the MXU


def cib_forward(x_nchw, params):
    B, C1, H, W = x_nchw.shape
    N = H * W
    k_mid = int(params['k_mid'])
    add = bool(params['add'])
    c_hidden = params['w_pw1'].shape[1]
    C2 = params['w_pw2'].shape[1]
    cmax = max(C1, c_hidden, C2)
    r_max = max(1, k_mid // 2)
    pad_rows = -(-(r_max * W) // 8) * 8          # halo rows, rounded up to a sublane tile

    x_bnc = jnp.transpose(x_nchw, (0, 2, 3, 1)).reshape(B, N, C1)
    weights = []
    for k in _PARAM_ORDER:
        w = params[k]
        if k in _BF16_WEIGHTS:
            w = w.astype(jnp.bfloat16)
        weights.append(w)

    in_specs = [pl.BlockSpec((None, N, C1), lambda i: (i, 0, 0))]
    for w in weights:
        in_specs.append(pl.BlockSpec(w.shape, lambda i, _nd=w.ndim: (0,) * _nd))

    # Explicit VMEM budget: double-buffered in/out tiles + scratch + weights + headroom.
    io_bytes = 2 * (N * C1 * 4 + N * C2 * 4)                      # 2x double-buffered
    scratch_bytes = (N + 2 * pad_rows) * cmax * 4
    weight_bytes = sum(int(np.prod(w.shape)) * w.dtype.itemsize for w in weights)
    vmem_limit = int(min(max(2 * (io_bytes + scratch_bytes + weight_bytes) + (4 << 20),
                             16 << 20), 48 << 20))

    out_bnc = pl.pallas_call(
        functools.partial(cib_kernel, H=H, W=W, k_mid=k_mid, add=add,
                          pad_rows=pad_rows, r_max=r_max),
        out_shape=jax.ShapeDtypeStruct((B, N, C2), x_bnc.dtype),
        grid_spec=pltpu.PrefetchScalarGridSpec(
            num_scalar_prefetch=0,
            grid=(B,),
            in_specs=in_specs,
            out_specs=pl.BlockSpec((None, N, C2), lambda i: (i, 0, 0)),
            scratch_shapes=[pltpu.VMEM((N + 2 * pad_rows, cmax), jnp.float32)],
        ),
        # "parallel": the batch grid is sharded across the two TensorCores on v7x;
        # harmless on single-TC v5e/v6e.
        compiler_params=pltpu.CompilerParams(dimension_semantics=("parallel",),
                                             vmem_limit_bytes=vmem_limit),
    )(x_bnc, *weights)

    return jnp.transpose(out_bnc.reshape(B, H, W, C2), (0, 3, 1, 2))


# --------------------- deterministic parameter construction --------------------
_BN_EPS = 1e-3  # ultralytics Conv uses BatchNorm2d(eps=0.001)


def _fold_bn(key, cout):
    k1, k2, k3, k4 = jax.random.split(key, 4)
    gamma = jax.random.uniform(k1, (cout,), minval=0.5, maxval=1.5)
    beta = 0.1 * jax.random.normal(k2, (cout,))
    mean = 0.1 * jax.random.normal(k3, (cout,))
    var = jax.random.uniform(k4, (cout,), minval=0.5, maxval=1.5)
    s = gamma / jnp.sqrt(var + _BN_EPS)
    t = beta - mean * s
    return s, t


def make_conv1x1(key, cin, cout):
    """Conv2d(cin, cout, 1, bias=False) + BN folded -> (cin, cout) weight, (1, cout) bias."""
    kw, kb = jax.random.split(key)
    w = 0.05 * jax.random.normal(kw, (cout, cin))          # torch weight (cout, cin, 1, 1)
    s, t = _fold_bn(kb, cout)
    w_eff = (w * s[:, None]).T                             # (cin, cout)
    return w_eff.astype(jnp.float32), t[None, :].astype(jnp.float32)


def _taps_from_chw(w_chw):
    """(ch, K, K) depthwise kernel -> tap-major (K*K, ch)."""
    K = w_chw.shape[-1]
    return jnp.transpose(w_chw, (1, 2, 0)).reshape(K * K, w_chw.shape[0])


def make_dwconv(key, ch, K):
    """Depthwise Conv2d(ch, ch, K, pad=K//2, groups=ch, bias=False) + BN folded."""
    kw, kb = jax.random.split(key)
    w = 0.05 * jax.random.normal(kw, (ch, K, K))           # torch weight (ch, 1, K, K)
    s, t = _fold_bn(kb, ch)
    w_f = (w * s[:, None, None]).astype(jnp.float32)       # BN-folded (ch, K, K)
    return w_f, _taps_from_chw(w_f), t[None, :].astype(jnp.float32)


def build_cib_params(key, c1, c2, shortcut=True, e=0.5, lk=False):
    c_ = int(c2 * e)
    ks = jax.random.split(key, 8)
    _, w_dw_in, b_dw_in = make_dwconv(ks[0], c1, 3)
    w_pw1, b_pw1 = make_conv1x1(ks[1], c1, 2 * c_)
    if lk:
        # RepVGGDW(2c_): SiLU(BN(dw7(x)) + BN(dw3(x)))  ==  SiLU(fused dw7(x))  (exact)
        w7, taps7, b7 = make_dwconv(ks[2], 2 * c_, 7)
        w3, taps3, b3 = make_dwconv(ks[3], 2 * c_, 3)
        w_fused = w7 + jnp.pad(w3, ((0, 0), (2, 2), (2, 2)))
        w_dw_mid, b_dw_mid = _taps_from_chw(w_fused), b7 + b3
        k_mid = 7
        ref_mid = dict(taps7=taps7, b7=b7, taps3=taps3, b3=b3)   # unfused, for the reference
    else:
        _, w_dw_mid, b_dw_mid = make_dwconv(ks[2], 2 * c_, 3)
        k_mid = 3
        ref_mid = None
    w_pw2, b_pw2 = make_conv1x1(ks[4], 2 * c_, c2)
    _, w_dw_out, b_dw_out = make_dwconv(ks[5], c2, 3)
    params = dict(w_dw_in=w_dw_in, b_dw_in=b_dw_in, w_pw1=w_pw1, b_pw1=b_pw1,
                  w_dw_mid=w_dw_mid, b_dw_mid=b_dw_mid, w_pw2=w_pw2, b_pw2=b_pw2,
                  w_dw_out=w_dw_out, b_dw_out=b_dw_out,
                  k_mid=k_mid, add=bool(shortcut and c1 == c2))
    return params, ref_mid


# ------------------------------ pure-JAX reference ------------------------------
def _dwconv_ref(xhwc, taps, bias, K):
    H, W, _ = xhwc.shape
    r = K // 2
    padded = jnp.pad(xhwc, ((r, r), (r, r), (0, 0)))
    out = jnp.zeros_like(xhwc)
    for ky in range(K):
        for kx in range(K):
            out = out + padded[ky:ky + H, kx:kx + W, :] * taps[ky * K + kx]
    return out + bias


def cib_ref(x_nchw, params, ref_mid):
    p = params
    x = jnp.transpose(x_nchw, (0, 2, 3, 1))                  # (B, H, W, C1)

    def one(img):
        h = _silu(_dwconv_ref(img, p['w_dw_in'], p['b_dw_in'], 3))
        h = _silu(h @ p['w_pw1'] + p['b_pw1'])
        if ref_mid is not None:                              # RepVGGDW, unfused branches
            h = _silu(_dwconv_ref(h, ref_mid['taps7'], ref_mid['b7'], 7)
                      + _dwconv_ref(h, ref_mid['taps3'], ref_mid['b3'], 3))
        else:
            h = _silu(_dwconv_ref(h, p['w_dw_mid'], p['b_dw_mid'], 3))
        h = _silu(h @ p['w_pw2'] + p['b_pw2'])
        h = _silu(_dwconv_ref(h, p['w_dw_out'], p['b_dw_out'], 3))
        return img + h if p['add'] else h

    out = jax.vmap(one)(x)
    return jnp.transpose(out, (0, 3, 1, 2))


# ------------------------------------ main --------------------------------------
if __name__ == "__main__":
    # CIB(c1=128, c2=128, shortcut=True, e=0.5) -> c_ = 64, hidden width 2*c_ = 128
    # (all channel widths lane-dense), H = W = 16 -> N = 256 rows per image.
    B, C1, H, W = 2, 128, 16, 16
    C2 = C1

    key = jax.random.PRNGKey(0)
    k_x, k_p0, k_p1 = jax.random.split(key, 3)
    x = jax.random.normal(k_x, (B, C1, H, W), jnp.float32)

    # lk=False (plain depthwise 3x3 middle layer) and lk=True (RepVGGDW, exact 7x7+3x3
    # fusion into one depthwise 7x7) share the same kernel.
    for lk, kp in ((False, k_p0), (True, k_p1)):
        params, ref_mid = build_cib_params(kp, C1, C2, shortcut=True, e=0.5, lk=lk)
        out = jax.block_until_ready(cib_forward(x, params))
        ref = cib_ref(x, params, ref_mid)
        np.testing.assert_allclose(np.asarray(out), np.asarray(ref), rtol=2e-3, atol=2e-3)

    print("KERNEL_OK")
</pallas_src>

<mosaic_0001>
module attributes {stable_mosaic.version = 11 : i64} {
  func.func @cib_kernel(%arg0: i32, %arg1: memref<1x256x128xf32, #tpu.memory_space<vmem>>, %arg2: memref<9x128xf32, #tpu.memory_space<vmem>>, %arg3: memref<1x128xf32, #tpu.memory_space<vmem>>, %arg4: memref<128x128xbf16, #tpu.memory_space<vmem>>, %arg5: memref<1x128xf32, #tpu.memory_space<vmem>>, %arg6: memref<9x128xf32, #tpu.memory_space<vmem>>, %arg7: memref<1x128xf32, #tpu.memory_space<vmem>>, %arg8: memref<128x128xbf16, #tpu.memory_space<vmem>>, %arg9: memref<1x128xf32, #tpu.memory_space<vmem>>, %arg10: memref<9x128xf32, #tpu.memory_space<vmem>>, %arg11: memref<1x128xf32, #tpu.memory_space<vmem>>, %arg12: memref<1x256x128xf32, #tpu.memory_space<vmem>>, %arg13: memref<288x128xf32, #tpu.memory_space<vmem>>) attributes {dimension_semantics = [#tpu.dimension_semantics<parallel>], iteration_bounds = array<i64: 2>, scalar_prefetch = 0 : i64, scratch_operands = 1 : i64, tpu.core_type = #tpu.core_type<tc>, window_params = [{transform_indices = @transform_0, window_bounds = array<i64: 1, 256, 128>}, {pipeline_mode = #tpu.pipeline_mode<synchronous>, transform_indices = @transform_1, window_bounds = array<i64: 9, 128>}, {pipeline_mode = #tpu.pipeline_mode<synchronous>, transform_indices = @transform_2, window_bounds = array<i64: 1, 128>}, {pipeline_mode = #tpu.pipeline_mode<synchronous>, transform_indices = @transform_3, window_bounds = array<i64: 128, 128>}, {pipeline_mode = #tpu.pipeline_mode<synchronous>, transform_indices = @transform_4, window_bounds = array<i64: 1, 128>}, {pipeline_mode = #tpu.pipeline_mode<synchronous>, transform_indices = @transform_5, window_bounds = array<i64: 9, 128>}, {pipeline_mode = #tpu.pipeline_mode<synchronous>, transform_indices = @transform_6, window_bounds = array<i64: 1, 128>}, {pipeline_mode = #tpu.pipeline_mode<synchronous>, transform_indices = @transform_7, window_bounds = array<i64: 128, 128>}, {pipeline_mode = #tpu.pipeline_mode<synchronous>, transform_indices = @transform_8, window_bounds = array<i64: 1, 128>}, {pipeline_mode = #tpu.pipeline_mode<synchronous>, transform_indices = @transform_9, window_bounds = array<i64: 9, 128>}, {pipeline_mode = #tpu.pipeline_mode<synchronous>, transform_indices = @transform_10, window_bounds = array<i64: 1, 128>}, {transform_indices = @transform_11, window_bounds = array<i64: 1, 256, 128>}]} {
    %cst = arith.constant 0.000000e+00 : f32
    %0 = vector.broadcast %cst : f32 to vector<16x128xf32>
    %c0 = arith.constant 0 : index
    %c0_0 = arith.constant 0 : index
    %1 = vector.load %arg13[%c0, %c0_0] : memref<288x128xf32, #tpu.memory_space<vmem>>, vector<16x128xf32>
    tpu.vector_store %arg13[%c0, %c0_0], %0 {strides = array<i32>} : memref<288x128xf32, #tpu.memory_space<vmem>>, vector<16x128xf32>,
    %c272 = arith.constant 272 : index
    %c0_1 = arith.constant 0 : index
    %2 = vector.load %arg13[%c272, %c0_1] : memref<288x128xf32, #tpu.memory_space<vmem>>, vector<16x128xf32>
    tpu.vector_store %arg13[%c272, %c0_1], %0 {strides = array<i32>} : memref<288x128xf32, #tpu.memory_space<vmem>>, vector<16x128xf32>,
    %3 = tpu.iota {dimensions = array<i32: 0>} : vector<256x1xi32>
    %c16_i32 = arith.constant 16 : i32
    %c0_i32 = arith.constant 0 : i32
    %4 = arith.cmpi eq, %c16_i32, %c0_i32 : i32
    %c1_i32 = arith.constant 1 : i32
    %5 = arith.select %4, %c1_i32, %c16_i32 : i32
    %6 = vector.broadcast %5 : i32 to vector<256x1xi32>
    %7 = arith.remsi %3, %6 : vector<256x1xi32>
    %c0_i32_2 = arith.constant 0 : i32
    %8 = vector.broadcast %c0_i32_2 : i32 to vector<256x1xi32>
    %9 = arith.cmpi ne, %7, %8 : vector<256x1xi32>
    %c0_i32_3 = arith.constant 0 : i32
    %10 = vector.broadcast %c0_i32_3 : i32 to vector<256x1xi32>
    %11 = arith.cmpi slt, %7, %10 : vector<256x1xi32>
    %c0_i32_4 = arith.constant 0 : i32
    %12 = arith.cmpi slt, %5, %c0_i32_4 : i32
    %13 = vector.broadcast %12 : i1 to vector<256x1xi1>
    %14 = vector.broadcast %13 : vector<256x1xi1> to vector<256x1xi1>
    %15 = arith.xori %11, %14 : vector<256x1xi1>
    %16 = arith.andi %15, %9 : vector<256x1xi1>
    %17 = vector.broadcast %5 : i32 to vector<256x1xi32>
    %18 = arith.addi %7, %17 : vector<256x1xi32>
    %19 = arith.select %16, %18, %7 : vector<256x1xi1>, vector<256x1xi32>
    %c-1_i32 = arith.constant -1 : i32
    %20 = vector.broadcast %c-1_i32 : i32 to vector<256x1xi32>
    %21 = arith.addi %19, %20 : vector<256x1xi32>
    %c0_i32_5 = arith.constant 0 : i32
    %22 = vector.broadcast %c0_i32_5 : i32 to vector<256x1xi32>
    %23 = arith.cmpi sge, %21, %22 : vector<256x1xi32>
    %c-1_i32_6 = arith.constant -1 : i32
    %24 = vector.broadcast %c-1_i32_6 : i32 to vector<256x1xi32>
    %25 = arith.addi %19, %24 : vector<256x1xi32>
    %c16_i32_7 = arith.constant 16 : i32
    %26 = vector.broadcast %c16_i32_7 : i32 to vector<256x1xi32>
    %27 = arith.cmpi slt, %25, %26 : vector<256x1xi32>
    %28 = arith.andi %23, %27 : vector<256x1xi1>
    %29 = arith.extui %28 : vector<256x1xi1> to vector<256x1xi32>
    %30 = arith.sitofp %29 : vector<256x1xi32> to vector<256x1xf32>
    %c1_i32_8 = arith.constant 1 : i32
    %31 = vector.broadcast %c1_i32_8 : i32 to vector<256x1xi32>
    %32 = arith.addi %19, %31 : vector<256x1xi32>
    %c0_i32_9 = arith.constant 0 : i32
    %33 = vector.broadcast %c0_i32_9 : i32 to vector<256x1xi32>
    %34 = arith.cmpi sge, %32, %33 : vector<256x1xi32>
    %c1_i32_10 = arith.constant 1 : i32
    %35 = vector.broadcast %c1_i32_10 : i32 to vector<256x1xi32>
    %36 = arith.addi %19, %35 : vector<256x1xi32>
    %c16_i32_11 = arith.constant 16 : i32
    %37 = vector.broadcast %c16_i32_11 : i32 to vector<256x1xi32>
    %38 = arith.cmpi slt, %36, %37 : vector<256x1xi32>
    %39 = arith.andi %34, %38 : vector<256x1xi1>
    %40 = arith.extui %39 : vector<256x1xi1> to vector<256x1xi32>
    %41 = arith.sitofp %40 : vector<256x1xi32> to vector<256x1xf32>
    %c0_12 = arith.constant 0 : index
    %c0_13 = arith.constant 0 : index
    %c0_14 = arith.constant 0 : index
    %42 = vector.load %arg1[%c0_12, %c0_13, %c0_14] : memref<1x256x128xf32, #tpu.memory_space<vmem>>, vector<1x256x128xf32>
    %43 = vector.shape_cast %42 : vector<1x256x128xf32> to vector<256x128xf32>
    %c16 = arith.constant 16 : index
    %c0_15 = arith.constant 0 : index
    %44 = vector.load %arg13[%c16, %c0_15] : memref<288x128xf32, #tpu.memory_space<vmem>>, vector<256x128xf32>
    tpu.vector_store %arg13[%c16, %c0_15], %43 {strides = array<i32>} : memref<288x128xf32, #tpu.memory_space<vmem>>, vector<256x128xf32>,
    %c0_16 = arith.constant 0 : index
    %c0_17 = arith.constant 0 : index
    %45 = vector.load %arg13[%c0_16, %c0_17] : memref<288x128xf32, #tpu.memory_space<vmem>>, vector<256x128xf32>
    %c0_18 = arith.constant 0 : index
    %c0_19 = arith.constant 0 : index
    %46 = vector.load %arg2[%c0_18, %c0_19] : memref<9x128xf32, #tpu.memory_space<vmem>>, vector<1x128xf32>
    %47 = vector.broadcast %46 : vector<1x128xf32> to vector<256x128xf32>
    %48 = arith.mulf %45, %47 : vector<256x128xf32>
    %c16_20 = arith.constant 16 : index
    %c0_21 = arith.constant 0 : index
    %49 = vector.load %arg13[%c16_20, %c0_21] : memref<288x128xf32, #tpu.memory_space<vmem>>, vector<256x128xf32>
    %c3 = arith.constant 3 : index
    %c0_22 = arith.constant 0 : index
    %50 = vector.load %arg2[%c3, %c0_22] : memref<9x128xf32, #tpu.memory_space<vmem>>, vector<1x128xf32>
    %51 = vector.broadcast %50 : vector<1x128xf32> to vector<256x128xf32>
    %52 = arith.mulf %49, %51 : vector<256x128xf32>
    %53 = arith.addf %48, %52 : vector<256x128xf32>
    %c32 = arith.constant 32 : index
    %c0_23 = arith.constant 0 : index
    %54 = vector.load %arg13[%c32, %c0_23] : memref<288x128xf32, #tpu.memory_space<vmem>>, vector<256x128xf32>
    %c6 = arith.constant 6 : index
    %c0_24 = arith.constant 0 : index
    %55 = vector.load %arg2[%c6, %c0_24] : memref<9x128xf32, #tpu.memory_space<vmem>>, vector<1x128xf32>
    %56 = vector.broadcast %55 : vector<1x128xf32> to vector<256x128xf32>
    %57 = arith.mulf %54, %56 : vector<256x128xf32>
    %58 = arith.addf %53, %57 : vector<256x128xf32>
    %c1_i32_25 = arith.constant 1 : i32
    %59 = tpu.dynamic_rotate %58 by %c1_i32_25 dim 0 : vector<256x128xf32>, i32 -> vector<256x128xf32>
    %60 = vector.broadcast %30 : vector<256x1xf32> to vector<256x128xf32>
    %61 = arith.mulf %59, %60 : vector<256x128xf32>
    %c0_26 = arith.constant 0 : index
    %c0_27 = arith.constant 0 : index
    %62 = vector.load %arg13[%c0_26, %c0_27] : memref<288x128xf32, #tpu.memory_space<vmem>>, vector<256x128xf32>
    %c1 = arith.constant 1 : index
    %c0_28 = arith.constant 0 : index
    %63 = vector.load %arg2[%c1, %c0_28] : memref<9x128xf32, #tpu.memory_space<vmem>>, vector<1x128xf32>
    %64 = vector.broadcast %63 : vector<1x128xf32> to vector<256x128xf32>
    %65 = arith.mulf %62, %64 : vector<256x128xf32>
    %c16_29 = arith.constant 16 : index
    %c0_30 = arith.constant 0 : index
    %66 = vector.load %arg13[%c16_29, %c0_30] : memref<288x128xf32, #tpu.memory_space<vmem>>, vector<256x128xf32>
    %c4 = arith.constant 4 : index
    %c0_31 = arith.constant 0 : index
    %67 = vector.load %arg2[%c4, %c0_31] : memref<9x128xf32, #tpu.memory_space<vmem>>, vector<1x128xf32>
    %68 = vector.broadcast %67 : vector<1x128xf32> to vector<256x128xf32>
    %69 = arith.mulf %66, %68 : vector<256x128xf32>
    %70 = arith.addf %65, %69 : vector<256x128xf32>
    %c32_32 = arith.constant 32 : index
    %c0_33 = arith.constant 0 : index
    %71 = vector.load %arg13[%c32_32, %c0_33] : memref<288x128xf32, #tpu.memory_space<vmem>>, vector<256x128xf32>
    %c7 = arith.constant 7 : index
    %c0_34 = arith.constant 0 : index
    %72 = vector.load %arg2[%c7, %c0_34] : memref<9x128xf32, #tpu.memory_space<vmem>>, vector<1x128xf32>
    %73 = vector.broadcast %72 : vector<1x128xf32> to vector<256x128xf32>
    %74 = arith.mulf %71, %73 : vector<256x128xf32>
    %75 = arith.addf %70, %74 : vector<256x128xf32>
    %76 = arith.addf %61, %75 : vector<256x128xf32>
    %c0_35 = arith.constant 0 : index
    %c0_36 = arith.constant 0 : index
    %77 = vector.load %arg13[%c0_35, %c0_36] : memref<288x128xf32, #tpu.memory_space<vmem>>, vector<256x128xf32>
    %c2 = arith.constant 2 : index
    %c0_37 = arith.constant 0 : index
    %78 = vector.load %arg2[%c2, %c0_37] : memref<9x128xf32, #tpu.memory_space<vmem>>, vector<1x128xf32>
    %79 = vector.broadcast %78 : vector<1x128xf32> to vector<256x128xf32>
    %80 = arith.mulf %77, %79 : vector<256x128xf32>
    %c16_38 = arith.constant 16 : index
    %c0_39 = arith.constant 0 : index
    %81 = vector.load %arg13[%c16_38, %c0_39] : memref<288x128xf32, #tpu.memory_space<vmem>>, vector<256x128xf32>
    %c5 = arith.constant 5 : index
    %c0_40 = arith.constant 0 : index
    %82 = vector.load %arg2[%c5, %c0_40] : memref<9x128xf32, #tpu.memory_space<vmem>>, vector<1x128xf32>
    %83 = vector.broadcast %82 : vector<1x128xf32> to vector<256x128xf32>
    %84 = arith.mulf %81, %83 : vector<256x128xf32>
    %85 = arith.addf %80, %84 : vector<256x128xf32>
    %c32_41 = arith.constant 32 : index
    %c0_42 = arith.constant 0 : index
    %86 = vector.load %arg13[%c32_41, %c0_42] : memref<288x128xf32, #tpu.memory_space<vmem>>, vector<256x128xf32>
    %c8 = arith.constant 8 : index
    %c0_43 = arith.constant 0 : index
    %87 = vector.load %arg2[%c8, %c0_43] : memref<9x128xf32, #tpu.memory_space<vmem>>, vector<1x128xf32>
    %88 = vector.broadcast %87 : vector<1x128xf32> to vector<256x128xf32>
    %89 = arith.mulf %86, %88 : vector<256x128xf32>
    %90 = arith.addf %85, %89 : vector<256x128xf32>
    %c255_i32 = arith.constant 255 : i32
    %91 = tpu.dynamic_rotate %90 by %c255_i32 dim 0 : vector<256x128xf32>, i32 -> vector<256x128xf32>
    %92 = vector.broadcast %41 : vector<256x1xf32> to vector<256x128xf32>
    %93 = arith.mulf %91, %92 : vector<256x128xf32>
    %94 = arith.addf %76, %93 : vector<256x128xf32>
    %c0_44 = arith.constant 0 : index
    %c0_45 = arith.constant 0 : index
    %95 = vector.load %arg3[%c0_44, %c0_45] : memref<1x128xf32, #tpu.memory_space<vmem>>, vector<1x128xf32>
    %96 = vector.broadcast %95 : vector<1x128xf32> to vector<256x128xf32>
    %97 = arith.addf %94, %96 : vector<256x128xf32>
    %98 = arith.negf %97 : vector<256x128xf32>
    %99 = math.exp %98 : vector<256x128xf32>
    %cst_46 = arith.constant 1.000000e+00 : f32
    %100 = vector.broadcast %cst_46 : f32 to vector<256x128xf32>
    %101 = arith.addf %100, %99 : vector<256x128xf32>
    %102 = arith.divf %100, %101 : vector<256x128xf32>
    %103 = arith.mulf %97, %102 : vector<256x128xf32>
    %104 = arith.truncf %103 : vector<256x128xf32> to vector<256x128xbf16>
    %c0_47 = arith.constant 0 : index
    %c0_48 = arith.constant 0 : index
    %105 = vector.load %arg4[%c0_47, %c0_48] : memref<128x128xbf16, #tpu.memory_space<vmem>>, vector<128x128xbf16>
    %cst_49 = arith.constant dense<0.000000e+00> : vector<256x128xf32>
    %106 = tpu.matmul %104, %105, %cst_49 {dimension_numbers = #tpu.dot_dimension_numbers<[1], [0], [0], [1], [0, 0, 1, 1], [], []>} : vector<256x128xbf16>, vector<128x128xbf16>, vector<256x128xf32> -> vector<256x128xf32>
    %c0_50 = arith.constant 0 : index
    %c0_51 = arith.constant 0 : index
    %107 = vector.load %arg5[%c0_50, %c0_51] : memref<1x128xf32, #tpu.memory_space<vmem>>, vector<1x128xf32>
    %108 = vector.broadcast %107 : vector<1x128xf32> to vector<256x128xf32>
    %109 = arith.addf %106, %108 : vector<256x128xf32>
    %110 = arith.negf %109 : vector<256x128xf32>
    %111 = math.exp %110 : vector<256x128xf32>
    %cst_52 = arith.constant 1.000000e+00 : f32
    %112 = vector.broadcast %cst_52 : f32 to vector<256x128xf32>
    %113 = arith.addf %112, %111 : vector<256x128xf32>
    %114 = arith.divf %112, %113 : vector<256x128xf32>
    %115 = arith.mulf %109, %114 : vector<256x128xf32>
    %c16_53 = arith.constant 16 : index
    %c0_54 = arith.constant 0 : index
    %116 = vector.load %arg13[%c16_53, %c0_54] : memref<288x128xf32, #tpu.memory_space<vmem>>, vector<256x128xf32>
    tpu.vector_store %arg13[%c16_53, %c0_54], %115 {strides = array<i32>} : memref<288x128xf32, #tpu.memory_space<vmem>>, vector<256x128xf32>,
    %c0_55 = arith.constant 0 : index
    %c0_56 = arith.constant 0 : index
    %117 = vector.load %arg13[%c0_55, %c0_56] : memref<288x128xf32, #tpu.memory_space<vmem>>, vector<256x128xf32>
    %c0_57 = arith.constant 0 : index
    %c0_58 = arith.constant 0 : index
    %118 = vector.load %arg6[%c0_57, %c0_58] : memref<9x128xf32, #tpu.memory_space<vmem>>, vector<1x128xf32>
    %119 = vector.broadcast %118 : vector<1x128xf32> to vector<256x128xf32>
    %120 = arith.mulf %117, %119 : vector<256x128xf32>
    %c16_59 = arith.constant 16 : index
    %c0_60 = arith.constant 0 : index
    %121 = vector.load %arg13[%c16_59, %c0_60] : memref<288x128xf32, #tpu.memory_space<vmem>>, vector<256x128xf32>
    %c3_61 = arith.constant 3 : index
    %c0_62 = arith.constant 0 : index
    %122 = vector.load %arg6[%c3_61, %c0_62] : memref<9x128xf32, #tpu.memory_space<vmem>>, vector<1x128xf32>
    %123 = vector.broadcast %122 : vector<1x128xf32> to vector<256x128xf32>
    %124 = arith.mulf %121, %123 : vector<256x128xf32>
    %125 = arith.addf %120, %124 : vector<256x128xf32>
    %c32_63 = arith.constant 32 : index
    %c0_64 = arith.constant 0 : index
    %126 = vector.load %arg13[%c32_63, %c0_64] : memref<288x128xf32, #tpu.memory_space<vmem>>, vector<256x128xf32>
    %c6_65 = arith.constant 6 : index
    %c0_66 = arith.constant 0 : index
    %127 = vector.load %arg6[%c6_65, %c0_66] : memref<9x128xf32, #tpu.memory_space<vmem>>, vector<1x128xf32>
    %128 = vector.broadcast %127 : vector<1x128xf32> to vector<256x128xf32>
    %129 = arith.mulf %126, %128 : vector<256x128xf32>
    %130 = arith.addf %125, %129 : vector<256x128xf32>
    %c1_i32_67 = arith.constant 1 : i32
    %131 = tpu.dynamic_rotate %130 by %c1_i32_67 dim 0 : vector<256x128xf32>, i32 -> vector<256x128xf32>
    %132 = vector.broadcast %30 : vector<256x1xf32> to vector<256x128xf32>
    %133 = arith.mulf %131, %132 : vector<256x128xf32>
    %c0_68 = arith.constant 0 : index
    %c0_69 = arith.constant 0 : index
    %134 = vector.load %arg13[%c0_68, %c0_69] : memref<288x128xf32, #tpu.memory_space<vmem>>, vector<256x128xf32>
    %c1_70 = arith.constant 1 : index
    %c0_71 = arith.constant 0 : index
    %135 = vector.load %arg6[%c1_70, %c0_71] : memref<9x128xf32, #tpu.memory_space<vmem>>, vector<1x128xf32>
    %136 = vector.broadcast %135 : vector<1x128xf32> to vector<256x128xf32>
    %137 = arith.mulf %134, %136 : vector<256x128xf32>
    %c16_72 = arith.constant 16 : index
    %c0_73 = arith.constant 0 : index
    %138 = vector.load %arg13[%c16_72, %c0_73] : memref<288x128xf32, #tpu.memory_space<vmem>>, vector<256x128xf32>
    %c4_74 = arith.constant 4 : index
    %c0_75 = arith.constant 0 : index
    %139 = vector.load %arg6[%c4_74, %c0_75] : memref<9x128xf32, #tpu.memory_space<vmem>>, vector<1x128xf32>
    %140 = vector.broadcast %139 : vector<1x128xf32> to vector<256x128xf32>
    %141 = arith.mulf %138, %140 : vector<256x128xf32>
    %142 = arith.addf %137, %141 : vector<256x128xf32>
    %c32_76 = arith.constant 32 : index
    %c0_77 = arith.constant 0 : index
    %143 = vector.load %arg13[%c32_76, %c0_77] : memref<288x128xf32, #tpu.memory_space<vmem>>, vector<256x128xf32>
    %c7_78 = arith.constant 7 : index
    %c0_79 = arith.constant 0 : index
    %144 = vector.load %arg6[%c7_78, %c0_79] : memref<9x128xf32, #tpu.memory_space<vmem>>, vector<1x128xf32>
    %145 = vector.broadcast %144 : vector<1x128xf32> to vector<256x128xf32>
    %146 = arith.mulf %143, %145 : vector<256x128xf32>
    %147 = arith.addf %142, %146 : vector<256x128xf32>
    %148 = arith.addf %133, %147 : vector<256x128xf32>
    %c0_80 = arith.constant 0 : index
    %c0_81 = arith.constant 0 : index
    %149 = vector.load %arg13[%c0_80, %c0_81] : memref<288x128xf32, #tpu.memory_space<vmem>>, vector<256x128xf32>
    %c2_82 = arith.constant 2 : index
    %c0_83 = arith.constant 0 : index
    %150 = vector.load %arg6[%c2_82, %c0_83] : memref<9x128xf32, #tpu.memory_space<vmem>>, vector<1x128xf32>
    %151 = vector.broadcast %150 : vector<1x128xf32> to vector<256x128xf32>
    %152 = arith.mulf %149, %151 : vector<256x128xf32>
    %c16_84 = arith.constant 16 : index
    %c0_85 = arith.constant 0 : index
    %153 = vector.load %arg13[%c16_84, %c0_85] : memref<288x128xf32, #tpu.memory_space<vmem>>, vector<256x128xf32>
    %c5_86 = arith.constant 5 : index
    %c0_87 = arith.constant 0 : index
    %154 = vector.load %arg6[%c5_86, %c0_87] : memref<9x128xf32, #tpu.memory_space<vmem>>, vector<1x128xf32>
    %155 = vector.broadcast %154 : vector<1x128xf32> to vector<256x128xf32>
    %156 = arith.mulf %153, %155 : vector<256x128xf32>
    %157 = arith.addf %152, %156 : vector<256x128xf32>
    %c32_88 = arith.constant 32 : index
    %c0_89 = arith.constant 0 : index
    %158 = vector.load %arg13[%c32_88, %c0_89] : memref<288x128xf32, #tpu.memory_space<vmem>>, vector<256x128xf32>
    %c8_90 = arith.constant 8 : index
    %c0_91 = arith.constant 0 : index
    %159 = vector.load %arg6[%c8_90, %c0_91] : memref<9x128xf32, #tpu.memory_space<vmem>>, vector<1x128xf32>
    %160 = vector.broadcast %159 : vector<1x128xf32> to vector<256x128xf32>
    %161 = arith.mulf %158, %160 : vector<256x128xf32>
    %162 = arith.addf %157, %161 : vector<256x128xf32>
    %c255_i32_92 = arith.constant 255 : i32
    %163 = tpu.dynamic_rotate %162 by %c255_i32_92 dim 0 : vector<256x128xf32>, i32 -> vector<256x128xf32>
    %164 = vector.broadcast %41 : vector<256x1xf32> to vector<256x128xf32>
    %165 = arith.mulf %163, %164 : vector<256x128xf32>
    %166 = arith.addf %148, %165 : vector<256x128xf32>
    %c0_93 = arith.constant 0 : index
    %c0_94 = arith.constant 0 : index
    %167 = vector.load %arg7[%c0_93, %c0_94] : memref<1x128xf32, #tpu.memory_space<vmem>>, vector<1x128xf32>
    %168 = vector.broadcast %167 : vector<1x128xf32> to vector<256x128xf32>
    %169 = arith.addf %166, %168 : vector<256x128xf32>
    %170 = arith.negf %169 : vector<256x128xf32>
    %171 = math.exp %170 : vector<256x128xf32>
    %cst_95 = arith.constant 1.000000e+00 : f32
    %172 = vector.broadcast %cst_95 : f32 to vector<256x128xf32>
    %173 = arith.addf %172, %171 : vector<256x128xf32>
    %174 = arith.divf %172, %173 : vector<256x128xf32>
    %175 = arith.mulf %169, %174 : vector<256x128xf32>
    %176 = arith.truncf %175 : vector<256x128xf32> to vector<256x128xbf16>
    %c0_96 = arith.constant 0 : index
    %c0_97 = arith.constant 0 : index
    %177 = vector.load %arg8[%c0_96, %c0_97] : memref<128x128xbf16, #tpu.memory_space<vmem>>, vector<128x128xbf16>
    %cst_98 = arith.constant dense<0.000000e+00> : vector<256x128xf32>
    %178 = tpu.matmul %176, %177, %cst_98 {dimension_numbers = #tpu.dot_dimension_numbers<[1], [0], [0], [1], [0, 0, 1, 1], [], []>} : vector<256x128xbf16>, vector<128x128xbf16>, vector<256x128xf32> -> vector<256x128xf32>
    %c0_99 = arith.constant 0 : index
    %c0_100 = arith.constant 0 : index
    %179 = vector.load %arg9[%c0_99, %c0_100] : memref<1x128xf32, #tpu.memory_space<vmem>>, vector<1x128xf32>
    %180 = vector.broadcast %179 : vector<1x128xf32> to vector<256x128xf32>
    %181 = arith.addf %178, %180 : vector<256x128xf32>
    %182 = arith.negf %181 : vector<256x128xf32>
    %183 = math.exp %182 : vector<256x128xf32>
    %cst_101 = arith.constant 1.000000e+00 : f32
    %184 = vector.broadcast %cst_101 : f32 to vector<256x128xf32>
    %185 = arith.addf %184, %183 : vector<256x128xf32>
    %186 = arith.divf %184, %185 : vector<256x128xf32>
    %187 = arith.mulf %181, %186 : vector<256x128xf32>
    %c16_102 = arith.constant 16 : index
    %c0_103 = arith.constant 0 : index
    %188 = vector.load %arg13[%c16_102, %c0_103] : memref<288x128xf32, #tpu.memory_space<vmem>>, vector<256x128xf32>
    tpu.vector_store %arg13[%c16_102, %c0_103], %187 {strides = array<i32>} : memref<288x128xf32, #tpu.memory_space<vmem>>, vector<256x128xf32>,
    %c0_104 = arith.constant 0 : index
    %c0_105 = arith.constant 0 : index
    %189 = vector.load %arg13[%c0_104, %c0_105] : memref<288x128xf32, #tpu.memory_space<vmem>>, vector<256x128xf32>
    %c0_106 = arith.constant 0 : index
    %c0_107 = arith.constant 0 : index
    %190 = vector.load %arg10[%c0_106, %c0_107] : memref<9x128xf32, #tpu.memory_space<vmem>>, vector<1x128xf32>
    %191 = vector.broadcast %190 : vector<1x128xf32> to vector<256x128xf32>
    %192 = arith.mulf %189, %191 : vector<256x128xf32>
    %c16_108 = arith.constant 16 : index
    %c0_109 = arith.constant 0 : index
    %193 = vector.load %arg13[%c16_108, %c0_109] : memref<288x128xf32, #tpu.memory_space<vmem>>, vector<256x128xf32>
    %c3_110 = arith.constant 3 : index
    %c0_111 = arith.constant 0 : index
    %194 = vector.load %arg10[%c3_110, %c0_111] : memref<9x128xf32, #tpu.memory_space<vmem>>, vector<1x128xf32>
    %195 = vector.broadcast %194 : vector<1x128xf32> to vector<256x128xf32>
    %196 = arith.mulf %193, %195 : vector<256x128xf32>
    %197 = arith.addf %192, %196 : vector<256x128xf32>
    %c32_112 = arith.constant 32 : index
    %c0_113 = arith.constant 0 : index
    %198 = vector.load %arg13[%c32_112, %c0_113] : memref<288x128xf32, #tpu.memory_space<vmem>>, vector<256x128xf32>
    %c6_114 = arith.constant 6 : index
    %c0_115 = arith.constant 0 : index
    %199 = vector.load %arg10[%c6_114, %c0_115] : memref<9x128xf32, #tpu.memory_space<vmem>>, vector<1x128xf32>
    %200 = vector.broadcast %199 : vector<1x128xf32> to vector<256x128xf32>
    %201 = arith.mulf %198, %200 : vector<256x128xf32>
    %202 = arith.addf %197, %201 : vector<256x128xf32>
    %c1_i32_116 = arith.constant 1 : i32
    %203 = tpu.dynamic_rotate %202 by %c1_i32_116 dim 0 : vector<256x128xf32>, i32 -> vector<256x128xf32>
    %204 = vector.broadcast %30 : vector<256x1xf32> to vector<256x128xf32>
    %205 = arith.mulf %203, %204 : vector<256x128xf32>
    %c0_117 = arith.constant 0 : index
    %c0_118 = arith.constant 0 : index
    %206 = vector.load %arg13[%c0_117, %c0_118] : memref<288x128xf32, #tpu.memory_space<vmem>>, vector<256x128xf32>
    %c1_119 = arith.constant 1 : index
    %c0_120 = arith.constant 0 : index
    %207 = vector.load %arg10[%c1_119, %c0_120] : memref<9x128xf32, #tpu.memory_space<vmem>>, vector<1x128xf32>
    %208 = vector.broadcast %207 : vector<1x128xf32> to vector<256x128xf32>
    %209 = arith.mulf %206, %208 : vector<256x128xf32>
    %c16_121 = arith.constant 16 : index
    %c0_122 = arith.constant 0 : index
    %210 = vector.load %arg13[%c16_121, %c0_122] : memref<288x128xf32, #tpu.memory_space<vmem>>, vector<256x128xf32>
    %c4_123 = arith.constant 4 : index
    %c0_124 = arith.constant 0 : index
    %211 = vector.load %arg10[%c4_123, %c0_124] : memref<9x128xf32, #tpu.memory_space<vmem>>, vector<1x128xf32>
    %212 = vector.broadcast %211 : vector<1x128xf32> to vector<256x128xf32>
    %213 = arith.mulf %210, %212 : vector<256x128xf32>
    %214 = arith.addf %209, %213 : vector<256x128xf32>
    %c32_125 = arith.constant 32 : index
    %c0_126 = arith.constant 0 : index
    %215 = vector.load %arg13[%c32_125, %c0_126] : memref<288x128xf32, #tpu.memory_space<vmem>>, vector<256x128xf32>
    %c7_127 = arith.constant 7 : index
    %c0_128 = arith.constant 0 : index
    %216 = vector.load %arg10[%c7_127, %c0_128] : memref<9x128xf32, #tpu.memory_space<vmem>>, vector<1x128xf32>
    %217 = vector.broadcast %216 : vector<1x128xf32> to vector<256x128xf32>
    %218 = arith.mulf %215, %217 : vector<256x128xf32>
    %219 = arith.addf %214, %218 : vector<256x128xf32>
    %220 = arith.addf %205, %219 : vector<256x128xf32>
    %c0_129 = arith.constant 0 : index
    %c0_130 = arith.constant 0 : index
    %221 = vector.load %arg13[%c0_129, %c0_130] : memref<288x128xf32, #tpu.memory_space<vmem>>, vector<256x128xf32>
    %c2_131 = arith.constant 2 : index
    %c0_132 = arith.constant 0 : index
    %222 = vector.load %arg10[%c2_131, %c0_132] : memref<9x128xf32, #tpu.memory_space<vmem>>, vector<1x128xf32>
    %223 = vector.broadcast %222 : vector<1x128xf32> to vector<256x128xf32>
    %224 = arith.mulf %221, %223 : vector<256x128xf32>
    %c16_133 = arith.constant 16 : index
    %c0_134 = arith.constant 0 : index
    %225 = vector.load %arg13[%c16_133, %c0_134] : memref<288x128xf32, #tpu.memory_space<vmem>>, vector<256x128xf32>
    %c5_135 = arith.constant 5 : index
    %c0_136 = arith.constant 0 : index
    %226 = vector.load %arg10[%c5_135, %c0_136] : memref<9x128xf32, #tpu.memory_space<vmem>>, vector<1x128xf32>
    %227 = vector.broadcast %226 : vector<1x128xf32> to vector<256x128xf32>
    %228 = arith.mulf %225, %227 : vector<256x128xf32>
    %229 = arith.addf %224, %228 : vector<256x128xf32>
    %c32_137 = arith.constant 32 : index
    %c0_138 = arith.constant 0 : index
    %230 = vector.load %arg13[%c32_137, %c0_138] : memref<288x128xf32, #tpu.memory_space<vmem>>, vector<256x128xf32>
    %c8_139 = arith.constant 8 : index
    %c0_140 = arith.constant 0 : index
    %231 = vector.load %arg10[%c8_139, %c0_140] : memref<9x128xf32, #tpu.memory_space<vmem>>, vector<1x128xf32>
    %232 = vector.broadcast %231 : vector<1x128xf32> to vector<256x128xf32>
    %233 = arith.mulf %230, %232 : vector<256x128xf32>
    %234 = arith.addf %229, %233 : vector<256x128xf32>
    %c255_i32_141 = arith.constant 255 : i32
    %235 = tpu.dynamic_rotate %234 by %c255_i32_141 dim 0 : vector<256x128xf32>, i32 -> vector<256x128xf32>
    %236 = vector.broadcast %41 : vector<256x1xf32> to vector<256x128xf32>
    %237 = arith.mulf %235, %236 : vector<256x128xf32>
    %238 = arith.addf %220, %237 : vector<256x128xf32>
    %c0_142 = arith.constant 0 : index
    %c0_143 = arith.constant 0 : index
    %239 = vector.load %arg11[%c0_142, %c0_143] : memref<1x128xf32, #tpu.memory_space<vmem>>, vector<1x128xf32>
    %240 = vector.broadcast %239 : vector<1x128xf32> to vector<256x128xf32>
    %241 = arith.addf %238, %240 : vector<256x128xf32>
    %242 = arith.negf %241 : vector<256x128xf32>
    %243 = math.exp %242 : vector<256x128xf32>
    %cst_144 = arith.constant 1.000000e+00 : f32
    %244 = vector.broadcast %cst_144 : f32 to vector<256x128xf32>
    %245 = arith.addf %244, %243 : vector<256x128xf32>
    %246 = arith.divf %244, %245 : vector<256x128xf32>
    %247 = arith.mulf %241, %246 : vector<256x128xf32>
    %c0_145 = arith.constant 0 : index
    %c0_146 = arith.constant 0 : index
    %c0_147 = arith.constant 0 : index
    %248 = vector.load %arg1[%c0_145, %c0_146, %c0_147] : memref<1x256x128xf32, #tpu.memory_space<vmem>>, vector<1x256x128xf32>
    %249 = vector.shape_cast %248 : vector<1x256x128xf32> to vector<256x128xf32>
    %250 = arith.addf %247, %249 : vector<256x128xf32>
    %c0_148 = arith.constant 0 : index
    %c0_149 = arith.constant 0 : index
    %c0_150 = arith.constant 0 : index
    %251 = vector.load %arg12[%c0_148, %c0_149, %c0_150] : memref<1x256x128xf32, #tpu.memory_space<vmem>>, vector<1x256x128xf32>
    %252 = vector.shape_cast %251 : vector<1x256x128xf32> to vector<256x128xf32>
    %253 = vector.shape_cast %250 : vector<256x128xf32> to vector<1x256x128xf32>
    tpu.vector_store %arg12[%c0_148, %c0_149, %c0_150], %253 {strides = array<i32>} : memref<1x256x128xf32, #tpu.memory_space<vmem>>, vector<1x256x128xf32>,
    return
  }
  func.func @transform_0(%arg0: i32) -> (i32, i32, i32) {
    %c0_i32 = arith.constant 0 : i32
    %c0_i32_0 = arith.constant 0 : i32
    %c0_i32_1 = arith.constant 0 : i32
    return %arg0, %c0_i32, %c0_i32_0 : i32, i32, i32
  }
  func.func @transform_1(%arg0: i32) -> (i32, i32) {
    %c0_i32 = arith.constant 0 : i32
    %c0_i32_0 = arith.constant 0 : i32
    %c0_i32_1 = arith.constant 0 : i32
    return %c0_i32, %c0_i32_0 : i32, i32
  }
  func.func @transform_2(%arg0: i32) -> (i32, i32) {
    %c0_i32 = arith.constant 0 : i32
    %c0_i32_0 = arith.constant 0 : i32
    %c0_i32_1 = arith.constant 0 : i32
    return %c0_i32, %c0_i32_0 : i32, i32
  }
  func.func @transform_3(%arg0: i32) -> (i32, i32) {
    %c0_i32 = arith.constant 0 : i32
    %c0_i32_0 = arith.constant 0 : i32
    %c0_i32_1 = arith.constant 0 : i32
    return %c0_i32, %c0_i32_0 : i32, i32
  }
  func.func @transform_4(%arg0: i32) -> (i32, i32) {
    %c0_i32 = arith.constant 0 : i32
    %c0_i32_0 = arith.constant 0 : i32
    %c0_i32_1 = arith.constant 0 : i32
    return %c0_i32, %c0_i32_0 : i32, i32
  }
  func.func @transform_5(%arg0: i32) -> (i32, i32) {
    %c0_i32 = arith.constant 0 : i32
    %c0_i32_0 = arith.constant 0 : i32
    %c0_i32_1 = arith.constant 0 : i32
    return %c0_i32, %c0_i32_0 : i32, i32
  }
  func.func @transform_6(%arg0: i32) -> (i32, i32) {
    %c0_i32 = arith.constant 0 : i32
    %c0_i32_0 = arith.constant 0 : i32
    %c0_i32_1 = arith.constant 0 : i32
    return %c0_i32, %c0_i32_0 : i32, i32
  }
  func.func @transform_7(%arg0: i32) -> (i32, i32) {
    %c0_i32 = arith.constant 0 : i32
    %c0_i32_0 = arith.constant 0 : i32
    %c0_i32_1 = arith.constant 0 : i32
    return %c0_i32, %c0_i32_0 : i32, i32
  }
  func.func @transform_8(%arg0: i32) -> (i32, i32) {
    %c0_i32 = arith.constant 0 : i32
    %c0_i32_0 = arith.constant 0 : i32
    %c0_i32_1 = arith.constant 0 : i32
    return %c0_i32, %c0_i32_0 : i32, i32
  }
  func.func @transform_9(%arg0: i32) -> (i32, i32) {
    %c0_i32 = arith.constant 0 : i32
    %c0_i32_0 = arith.constant 0 : i32
    %c0_i32_1 = arith.constant 0 : i32
    return %c0_i32, %c0_i32_0 : i32, i32
  }
  func.func @transform_10(%arg0: i32) -> (i32, i32) {
    %c0_i32 = arith.constant 0 : i32
    %c0_i32_0 = arith.constant 0 : i32
    %c0_i32_1 = arith.constant 0 : i32
    return %c0_i32, %c0_i32_0 : i32, i32
  }
  func.func @transform_11(%arg0: i32) -> (i32, i32, i32) {
    %c0_i32 = arith.constant 0 : i32
    %c0_i32_0 = arith.constant 0 : i32
    %c0_i32_1 = arith.constant 0 : i32
    return %arg0, %c0_i32, %c0_i32_0 : i32, i32, i32
  }
}

</mosaic_0001>

<llo_original>
// kernel: tpu_custom_call.1
$region0: #{tpu_custom_call.1}
  #allocation0 [shape = 'u32[]', space=smem, size = 0x4, offset = 0x4, fixed_abs, tag = 'smem constant byte address 0x4 - core index']
  #allocation1 [shape = 'u32[144,128]{1,0:T(1,128)}', space=vmem, size = 0x12000, scoped, tag = 'internal scratch']
  #allocation2 [shape = 'f32[288,128]{1,0:T(8,128)}', space=vmem, size = 0x24000, scoped, tag = 'scratch operand']
  %s0 = inlined_call_operand.hbm [shape: f32[2,256,128], index: 0, kind: input, shape index: {}]
  %s1 = inlined_call_operand.hbm [shape: f32[9,128], index: 1, kind: input, shape index: {}]
  %s2 = inlined_call_operand.hbm [shape: f32[1,128], index: 2, kind: input, shape index: {}]
  %s3 = inlined_call_operand.hbm [shape: bf16[128,128], index: 3, kind: input, shape index: {}]
  %s4 = inlined_call_operand.hbm [shape: f32[1,128], index: 4, kind: input, shape index: {}]
  %s5 = inlined_call_operand.hbm [shape: f32[9,128], index: 5, kind: input, shape index: {}]
  %s6 = inlined_call_operand.hbm [shape: f32[1,128], index: 6, kind: input, shape index: {}]
  %s7 = inlined_call_operand.hbm [shape: bf16[128,128], index: 7, kind: input, shape index: {}]
  %s8 = inlined_call_operand.hbm [shape: f32[1,128], index: 8, kind: input, shape index: {}]
  %s9 = inlined_call_operand.vmem [shape: f32[9,128], index: 9, kind: input, shape index: {}]
  %s10 = inlined_call_operand.vmem [shape: f32[1,128], index: 10, kind: input, shape index: {}]
  %s11 = inlined_call_operand.hbm [shape: f32[2,256,128], index: 11, kind: output, shape index: {}]
  %s12 = sld [smem:[#allocation0]]
  $region113: #{tpu_custom_call.1} parent=0
    _
  %s14 = ssub.s32 1, %s12
  %s15 = scalar_select 0, %s14, %s12
  $region1: #{tpu_custom_call.1} parent=0
    #allocation3 [shape = 'u8[262144]{0}', space=vmem, size = 0x40000, scoped, tag = 'input window, operand 0']
    #allocation4 [shape = 's32[2]{0}', space=sflag, size = 0x8, scoped, tag = 'scoped memory for tpu_custom_call.1']
    #allocation5 [shape = 's32[2]{0}', space=sflag, size = 0x8, scoped, tag = 'scoped memory for tpu_custom_call.1']
    #allocation6 [shape = 'u8[8192]{0}', space=vmem, size = 0x2000, scoped, tag = 'input window, operand 1, single buffered']
    #allocation7 [shape = 's32[1]{0}', space=sflag, size = 0x4, scoped, tag = 'scoped memory for tpu_custom_call.1']
    #allocation8 [shape = 'u8[512]{0}', space=vmem, size = 0x400, scoped, tag = 'input window, operand 2, single buffered']
    #allocation9 [shape = 'u8[32768]{0}', space=vmem, size = 0x8000, scoped, tag = 'input window, operand 3, single buffered']
    #allocation10 [shape = 's32[1]{0}', space=sflag, size = 0x4, scoped, tag = 'scoped memory for tpu_custom_call.1']
    #allocation11 [shape = 'u8[512]{0}', space=vmem, size = 0x400, scoped, tag = 'input window, operand 4, single buffered']
    #allocation12 [shape = 'u8[8192]{0}', space=vmem, size = 0x2000, scoped, tag = 'input window, operand 5, single buffered']
    #allocation13 [shape = 's32[1]{0}', space=sflag, size = 0x4, scoped, tag = 'scoped memory for tpu_custom_call.1']
    #allocation14 [shape = 'u8[512]{0}', space=vmem, size = 0x400, scoped, tag = 'input window, operand 6, single buffered']
    #allocation15 [shape = 'u8[32768]{0}', space=vmem, size = 0x8000, scoped, tag = 'input window, operand 7, single buffered']
    #allocation16 [shape = 's32[1]{0}', space=sflag, size = 0x4, scoped, tag = 'scoped memory for tpu_custom_call.1']
    #allocation17 [shape = 'u8[512]{0}', space=vmem, size = 0x400, scoped, tag = 'input window, operand 8, single buffered']
    #allocation18 [shape = 'u8[262144]{0}', space=vmem, size = 0x40000, scoped, tag = 'output window, operand 0']
    %16 = vsyncpa [#allocation4], 0
    %s17 = scalar_lea.sflag [#allocation4], 1
    %18 = vsyncpa %s17, 0
    %19 = vsyncpa [#allocation7], 0
    %20 = vsyncpa [#allocation10], 0
    %21 = vsyncpa [#allocation13], 0
    %22 = vsyncpa [#allocation16], 0
    %23 = vsyncpa [#allocation5], 0
    %s24 = scalar_lea.sflag [#allocation5], 1
    %25 = vsyncpa %s24, 0
    loop: start=0, step=1, limit=4
    $region2: #{tpu_custom_call.1} parent=1 // loop_pre_header
      _
    $region3: #{tpu_custom_call.1} parent=1 // loop_header
      %s27 = sphi 0, %s31
      %p28 = scmp.ge.s32.totalorder %s27, 4
      %s37 = sphi 0, %s39
      %s40 = sphi 0, %s37
      %s41 = sphi 0, %s40
      %s57 = sphi 0, %s41
      %s61 = sphi 0, %s61
      %s63 = sphi 0, %s61
      %s64 = sphi 0, %s63
      %s78 = sphi 0, %s64
      %s82 = sphi 0, %s82
      %s84 = sphi 0, %s82
      %s85 = sphi 0, %s84
      %s99 = sphi 0, %s85
      %s103 = sphi 0, %s103
      %s105 = sphi 0, %s103
      %s106 = sphi 0, %s105
      %s120 = sphi 0, %s106
      %s124 = sphi 0, %s124
      %s126 = sphi 0, %s124
      %s127 = sphi 0, %s126
      %s141 = sphi 0, %s127
      %s145 = sphi 0, %s145
      %s147 = sphi 0, %s145
      %s148 = sphi 0, %s147
      %s162 = sphi 0, %s148
      %s166 = sphi 0, %s166
      %s168 = sphi 0, %s166
      %s169 = sphi 0, %s168
      %s183 = sphi 0, %s169
      %s187 = sphi 0, %s187
      %s189 = sphi 0, %s187
      %s190 = sphi 0, %s189
      %s204 = sphi 0, %s190
      %s208 = sphi 0, %s208
      %s210 = sphi 0, %s208
      %s211 = sphi 0, %s210
      %s225 = sphi 0, %s211
      %s229 = sphi 0, %s229
      %s231 = sphi 0, %s229
      %s232 = sphi 0, %s231
      %s246 = sphi 0, %s232
      %s250 = sphi 0, %s250
      %s252 = sphi 0, %s250
      %s253 = sphi 0, %s252
      %s267 = sphi 0, %s253
      %s273 = sphi 0, %s275
      %s276 = sphi 0, %s273
      %s277 = sphi 0, %s276
      %s293 = sphi 0, %s277
    $region4: #{tpu_custom_call.1} parent=1 // loop_header_branch
      %30 = sbr.rel (%p28) target = $region8
    $region5: #{tpu_custom_call.1} parent=1 // loop_body
      %s32 = ssub.s32 %s27, 1
      %s33 = ssub.s32 %s27, 2
      %s34 = sadd.s32 %s27, 1
      %s35 = ssub.s32 %s27, %s34
      %p36 = scmp.eq.s32.totalorder %s35, 0
      %s38 = sadd.s32 %s37, 1
      %s39 = scalar_select %p36, %s37, %s38
      %p42 = pneg %p36
      %p43 = scmp.eq.s32.totalorder %s27, 1
      %p44 = por %p42, %p43
      %p45 = scmp.ne.s32.totalorder %s37, %s40
      %p46 = scmp.eq.s32.totalorder %s27, 0
      %p47 = por %p45, %p46
      %p48 = scmp.ne.s32.totalorder %s37, %s40
      %p49 = scmp.eq.s32.totalorder %s32, 1
      %p50 = por %p48, %p49
      %p51 = scmp.ne.s32.totalorder %s40, %s41
      %p52 = scmp.eq.s32.totalorder %s32, 0
      %p53 = por %p51, %p52
      %p54 = scmp.ne.s32.totalorder %s40, %s41
      %p55 = scmp.eq.s32.totalorder %s33, 1
      %p56 = por %p54, %p55
      %p58 = scmp.ne.s32.totalorder %s41, %s57
      %p59 = scmp.eq.s32.totalorder %s33, 0
      %p60 = por %p58, %p59
      %s62 = sadd.s32 %s61, 1
      %p65 = scmp.eq.s32.totalorder %s27, 1
      %p66 = scmp.ne.s32.totalorder %s61, %s63
      %p67 = scmp.eq.s32.totalorder %s27, 0
      %p68 = por %p66, %p67
      %p69 = scmp.ne.s32.totalorder %s61, %s63
      %p70 = scmp.eq.s32.totalorder %s32, 1
      %p71 = por %p69, %p70
      %p72 = scmp.ne.s32.totalorder %s63, %s64
      %p73 = scmp.eq.s32.totalorder %s32, 0
      %p74 = por %p72, %p73
      %p75 = scmp.ne.s32.totalorder %s63, %s64
      %p76 = scmp.eq.s32.totalorder %s33, 1
      %p77 = por %p75, %p76
      %p79 = scmp.ne.s32.totalorder %s64, %s78
      %p80 = scmp.eq.s32.totalorder %s33, 0
      %p81 = por %p79, %p80
      %s83 = sadd.s32 %s82, 1
      %p86 = scmp.eq.s32.totalorder %s27, 1
      %p87 = scmp.ne.s32.totalorder %s82, %s84
      %p88 = scmp.eq.s32.totalorder %s27, 0
      %p89 = por %p87, %p88
      %p90 = scmp.ne.s32.totalorder %s82, %s84
      %p91 = scmp.eq.s32.totalorder %s32, 1
      %p92 = por %p90, %p91
      %p93 = scmp.ne.s32.totalorder %s84, %s85
      %p94 = scmp.eq.s32.totalorder %s32, 0
      %p95 = por %p93, %p94
      %p96 = scmp.ne.s32.totalorder %s84, %s85
      %p97 = scmp.eq.s32.totalorder %s33, 1
      %p98 = por %p96, %p97
      %p100 = scmp.ne.s32.totalorder %s85, %s99
      %p101 = scmp.eq.s32.totalorder %s33, 0
      %p102 = por %p100, %p101
      %s104 = sadd.s32 %s103, 1
      %p107 = scmp.eq.s32.totalorder %s27, 1
      %p108 = scmp.ne.s32.totalorder %s103, %s105
      %p109 = scmp.eq.s32.totalorder %s27, 0
      %p110 = por %p108, %p109
      %p111 = scmp.ne.s32.totalorder %s103, %s105
      %p112 = scmp.eq.s32.totalorder %s32, 1
      %p113 = por %p111, %p112
      %p114 = scmp.ne.s32.totalorder %s105, %s106
      %p115 = scmp.eq.s32.totalorder %s32, 0
      %p116 = por %p114, %p115
      %p117 = scmp.ne.s32.totalorder %s105, %s106
      %p118 = scmp.eq.s32.totalorder %s33, 1
      %p119 = por %p117, %p118
      %p121 = scmp.ne.s32.totalorder %s106, %s120
      %p122 = scmp.eq.s32.totalorder %s33, 0
      %p123 = por %p121, %p122
      %s125 = sadd.s32 %s124, 1
      %p128 = scmp.eq.s32.totalorder %s27, 1
      %p129 = scmp.ne.s32.totalorder %s124, %s126
      %p130 = scmp.eq.s32.totalorder %s27, 0
      %p131 = por %p129, %p130
      %p132 = scmp.ne.s32.totalorder %s124, %s126
      %p133 = scmp.eq.s32.totalorder %s32, 1
      %p134 = por %p132, %p133
      %p135 = scmp.ne.s32.totalorder %s126, %s127
      %p136 = scmp.eq.s32.totalorder %s32, 0
      %p137 = por %p135, %p136
      %p138 = scmp.ne.s32.totalorder %s126, %s127
      %p139 = scmp.eq.s32.totalorder %s33, 1
      %p140 = por %p138, %p139
      %p142 = scmp.ne.s32.totalorder %s127, %s141
      %p143 = scmp.eq.s32.totalorder %s33, 0
      %p144 = por %p142, %p143
      %s146 = sadd.s32 %s145, 1
      %p149 = scmp.eq.s32.totalorder %s27, 1
      %p150 = scmp.ne.s32.totalorder %s145, %s147
      %p151 = scmp.eq.s32.totalorder %s27, 0
      %p152 = por %p150, %p151
      %p153 = scmp.ne.s32.totalorder %s145, %s147
      %p154 = scmp.eq.s32.totalorder %s32, 1
      %p155 = por %p153, %p154
      %p156 = scmp.ne.s32.totalorder %s147, %s148
      %p157 = scmp.eq.s32.totalorder %s32, 0
      %p158 = por %p156, %p157
      %p159 = scmp.ne.s32.totalorder %s147, %s148
      %p160 = scmp.eq.s32.totalorder %s33, 1
      %p161 = por %p159, %p160
      %p163 = scmp.ne.s32.totalorder %s148, %s162
      %p164 = scmp.eq.s32.totalorder %s33, 0
      %p165 = por %p163, %p164
      %s167 = sadd.s32 %s166, 1
      %p170 = scmp.eq.s32.totalorder %s27, 1
      %p171 = scmp.ne.s32.totalorder %s166, %s168
      %p172 = scmp.eq.s32.totalorder %s27, 0
      %p173 = por %p171, %p172
      %p174 = scmp.ne.s32.totalorder %s166, %s168
      %p175 = scmp.eq.s32.totalorder %s32, 1
      %p176 = por %p174, %p175
      %p177 = scmp.ne.s32.totalorder %s168, %s169
      %p178 = scmp.eq.s32.totalorder %s32, 0
      %p179 = por %p177, %p178
      %p180 = scmp.ne.s32.totalorder %s168, %s169
      %p181 = scmp.eq.s32.totalorder %s33, 1
      %p182 = por %p180, %p181
      %p184 = scmp.ne.s32.totalorder %s169, %s183
      %p185 = scmp.eq.s32.totalorder %s33, 0
      %p186 = por %p184, %p185
      %s188 = sadd.s32 %s187, 1
      %p191 = scmp.eq.s32.totalorder %s27, 1
      %p192 = scmp.ne.s32.totalorder %s187, %s189
      %p193 = scmp.eq.s32.totalorder %s27, 0
      %p194 = por %p192, %p193
      %p195 = scmp.ne.s32.totalorder %s187, %s189
      %p196 = scmp.eq.s32.totalorder %s32, 1
      %p197 = por %p195, %p196
      %p198 = scmp.ne.s32.totalorder %s189, %s190
      %p199 = scmp.eq.s32.totalorder %s32, 0
      %p200 = por %p198, %p199
      %p201 = scmp.ne.s32.totalorder %s189, %s190
      %p202 = scmp.eq.s32.totalorder %s33, 1
      %p203 = por %p201, %p202
      %p205 = scmp.ne.s32.totalorder %s190, %s204
      %p206 = scmp.eq.s32.totalorder %s33, 0
      %p207 = por %p205, %p206
      %s209 = sadd.s32 %s208, 1
      %p212 = scmp.eq.s32.totalorder %s27, 1
      %p213 = scmp.ne.s32.totalorder %s208, %s210
      %p214 = scmp.eq.s32.totalorder %s27, 0
      %p215 = por %p213, %p214
      %p216 = scmp.ne.s32.totalorder %s208, %s210
      %p217 = scmp.eq.s32.totalorder %s32, 1
      %p218 = por %p216, %p217
      %p219 = scmp.ne.s32.totalorder %s210, %s211
      %p220 = scmp.eq.s32.totalorder %s32, 0
      %p221 = por %p219, %p220
      %p222 = scmp.ne.s32.totalorder %s210, %s211
      %p223 = scmp.eq.s32.totalorder %s33, 1
      %p224 = por %p222, %p223
      %p226 = scmp.ne.s32.totalorder %s211, %s225
      %p227 = scmp.eq.s32.totalorder %s33, 0
      %p228 = por %p226, %p227
      %s230 = sadd.s32 %s229, 1
      %p233 = scmp.eq.s32.totalorder %s27, 1
      %p234 = scmp.ne.s32.totalorder %s229, %s231
      %p235 = scmp.eq.s32.totalorder %s27, 0
      %p236 = por %p234, %p235
      %p237 = scmp.ne.s32.totalorder %s229, %s231
      %p238 = scmp.eq.s32.totalorder %s32, 1
      %p239 = por %p237, %p238
      %p240 = scmp.ne.s32.totalorder %s231, %s232
      %p241 = scmp.eq.s32.totalorder %s32, 0
      %p242 = por %p240, %p241
      %p243 = scmp.ne.s32.totalorder %s231, %s232
      %p244 = scmp.eq.s32.totalorder %s33, 1
      %p245 = por %p243, %p244
      %p247 = scmp.ne.s32.totalorder %s232, %s246
      %p248 = scmp.eq.s32.totalorder %s33, 0
      %p249 = por %p247, %p248
      %s251 = sadd.s32 %s250, 1
      %p254 = scmp.eq.s32.totalorder %s27, 1
      %p255 = scmp.ne.s32.totalorder %s250, %s252
      %p256 = scmp.eq.s32.totalorder %s27, 0
      %p257 = por %p255, %p256
      %p258 = scmp.ne.s32.totalorder %s250, %s252
      %p259 = scmp.eq.s32.totalorder %s32, 1
      %p260 = por %p258, %p259
      %p261 = scmp.ne.s32.totalorder %s252, %s253
      %p262 = scmp.eq.s32.totalorder %s32, 0
      %p263 = por %p261, %p262
      %p264 = scmp.ne.s32.totalorder %s252, %s253
      %p265 = scmp.eq.s32.totalorder %s33, 1
      %p266 = por %p264, %p265
      %p268 = scmp.ne.s32.totalorder %s253, %s267
      %p269 = scmp.eq.s32.totalorder %s33, 0
      %p270 = por %p268, %p269
      %s271 = ssub.s32 %s27, %s34
      %p272 = scmp.eq.s32.totalorder %s271, 0
      %s274 = sadd.s32 %s273, 1
      %s275 = scalar_select %p272, %s273, %s274
      %p278 = pneg %p272
      %p279 = scmp.eq.s32.totalorder %s27, 1
      %p280 = por %p278, %p279
      %p281 = scmp.ne.s32.totalorder %s273, %s276
      %p282 = scmp.eq.s32.totalorder %s27, 0
      %p283 = por %p281, %p282
      %p284 = scmp.ne.s32.totalorder %s273, %s276
      %p285 = scmp.eq.s32.totalorder %s32, 1
      %p286 = por %p284, %p285
      %p287 = scmp.ne.s32.totalorder %s276, %s277
      %p288 = scmp.eq.s32.totalorder %s32, 0
      %p289 = por %p287, %p288
      %p290 = scmp.ne.s32.totalorder %s276, %s277
      %p291 = scmp.eq.s32.totalorder %s33, 1
      %p292 = por %p290, %p291
      %p294 = scmp.ne.s32.totalorder %s277, %s293
      %p295 = scmp.eq.s32.totalorder %s33, 0
      %p296 = por %p294, %p295
      %p297 = scmp.le.s32.totalorder 1, %s27
      %p298 = scmp.lt.s32.totalorder %s27, 3
      %p299 = pnand %p297, %p298
      %p300 = pneg %p299
      // Predicated region
      $region9: #{tpu_custom_call.1} parent=5 // pred_check
        _
      $region10: #{tpu_custom_call.1} parent=5 // pred_check_branch
        %302 = sbr.rel (%p299) target = $region12
      $region11: #{tpu_custom_call.1} parent=5 // pred_region
        %s303 = ssub.s32 %s27, 1
        // Predicated region
        $region13: #{tpu_custom_call.1} parent=11 // pred_check
          %p304 = pneg %p74
        $region14: #{tpu_custom_call.1} parent=11 // pred_check_branch
          %306 = sbr.rel (%p304) target = $region16
        $region15: #{tpu_custom_call.1} parent=11 // pred_region
          %s308 = ssub.s32 256, 256
          %309 = vsyncadd [#allocation7], %s308
          %s310 = sshll.u32 [#allocation6], 4
          %s311 = int_to_ptr.vmem [resolvable:$true] %s310
          %316 = dma.hbm_to_vmem [thread:$0]  %s1, 256, %s311, [#allocation7], 128, 128, 8
        $region16: #{tpu_custom_call.1} parent=11 // pred_fallthru
          _
        // Predicated region
        $region17: #{tpu_custom_call.1} parent=11 // pred_check
          %p317 = pneg %p95
        $region18: #{tpu_custom_call.1} parent=11 // pred_check_branch
          %319 = sbr.rel (%p317) target = $region20
        $region19: #{tpu_custom_call.1} parent=11 // pred_region
          %s321 = ssub.s32 16, 16
          %322 = vsyncadd [#allocation7], %s321
          %s324 = sshll.u32 [#allocation8], 4
          %s325 = int_to_ptr.vmem [resolvable:$true] %s324
          %327 = dma.hbm_to_vmem [thread:$0]  %s2, 16, %s325, [#allocation7]
        $region20: #{tpu_custom_call.1} parent=11 // pred_fallthru
          _
        // Predicated region
        $region21: #{tpu_custom_call.1} parent=11 // pred_check
          %p328 = pneg %p116
        $region22: #{tpu_custom_call.1} parent=11 // pred_check_branch
          %330 = sbr.rel (%p328) target = $region24
        $region23: #{tpu_custom_call.1} parent=11 // pred_region
          %s332 = ssub.s32 1024, 1024
          %333 = vsyncadd [#allocation10], %s332
          %s334 = sshll.u32 [#allocation9], 4
          %s335 = int_to_ptr.vmem [resolvable:$true] %s334
          %340 = dma.hbm_to_vmem [thread:$0]  %s3, 1024, %s335, [#allocation10], 64, 64, 4
        $region24: #{tpu_custom_call.1} parent=11 // pred_fallthru
          _
        // Predicated region
        $region25: #{tpu_custom_call.1} parent=11 // pred_check
          %p341 = pneg %p137
        $region26: #{tpu_custom_call.1} parent=11 // pred_check_branch
          %343 = sbr.rel (%p341) target = $region28
        $region27: #{tpu_custom_call.1} parent=11 // pred_region
          %s345 = ssub.s32 16, 16
          %346 = vsyncadd [#allocation10], %s345
          %s348 = sshll.u32 [#allocation11], 4
          %s349 = int_to_ptr.vmem [resolvable:$true] %s348
          %351 = dma.hbm_to_vmem [thread:$0]  %s4, 16, %s349, [#allocation10]
        $region28: #{tpu_custom_call.1} parent=11 // pred_fallthru
          _
        // Predicated region
        $region29: #{tpu_custom_call.1} parent=11 // pred_check
          %p352 = pneg %p158
        $region30: #{tpu_custom_call.1} parent=11 // pred_check_branch
          %354 = sbr.rel (%p352) target = $region32
        $region31: #{tpu_custom_call.1} parent=11 // pred_region
          %s356 = ssub.s32 256, 256
          %357 = vsyncadd [#allocation13], %s356
          %s358 = sshll.u32 [#allocation12], 4
          %s359 = int_to_ptr.vmem [resolvable:$true] %s358
          %364 = dma.hbm_to_vmem [thread:$0]  %s5, 256, %s359, [#allocation13], 128, 128, 8
        $region32: #{tpu_custom_call.1} parent=11 // pred_fallthru
          _
        // Predicated region
        $region33: #{tpu_custom_call.1} parent=11 // pred_check
          %p365 = pneg %p179
        $region34: #{tpu_custom_call.1} parent=11 // pred_check_branch
          %367 = sbr.rel (%p365) target = $region36
        $region35: #{tpu_custom_call.1} parent=11 // pred_region
          %s369 = ssub.s32 16, 16
          %370 = vsyncadd [#allocation13], %s369
          %s372 = sshll.u32 [#allocation14], 4
          %s373 = int_to_ptr.vmem [resolvable:$true] %s372
          %375 = dma.hbm_to_vmem [thread:$0]  %s6, 16, %s373, [#allocation13]
        $region36: #{tpu_custom_call.1} parent=11 // pred_fallthru
          _
        // Predicated region
        $region37: #{tpu_custom_call.1} parent=11 // pred_check
          %p376 = pneg %p200
        $region38: #{tpu_custom_call.1} parent=11 // pred_check_branch
          %378 = sbr.rel (%p376) target = $region40
        $region39: #{tpu_custom_call.1} parent=11 // pred_region
          %s380 = ssub.s32 1024, 1024
          %381 = vsyncadd [#allocation16], %s380
          %s382 = sshll.u32 [#allocation15], 4
          %s383 = int_to_ptr.vmem [resolvable:$true] %s382
          %388 = dma.hbm_to_vmem [thread:$0]  %s7, 1024, %s383, [#allocation16], 64, 64, 4
        $region40: #{tpu_custom_call.1} parent=11 // pred_fallthru
          _
        // Predicated region
        $region41: #{tpu_custom_call.1} parent=11 // pred_check
          %p389 = pneg %p221
        $region42: #{tpu_custom_call.1} parent=11 // pred_check_branch
          %391 = sbr.rel (%p389) target = $region44
        $region43: #{tpu_custom_call.1} parent=11 // pred_region
          %s393 = ssub.s32 16, 16
          %394 = vsyncadd [#allocation16], %s393
          %s396 = sshll.u32 [#allocation17], 4
          %s397 = int_to_ptr.vmem [resolvable:$true] %s396
          %399 = dma.hbm_to_vmem [thread:$0]  %s8, 16, %s397, [#allocation16]
        $region44: #{tpu_custom_call.1} parent=11 // pred_fallthru
          _
        // Predicated region
        $region45: #{tpu_custom_call.1} parent=11 // pred_check
          %p400 = pneg %p242
        $region46: #{tpu_custom_call.1} parent=11 // pred_check_branch
          %402 = sbr.rel (%p400) target = $region48
        $region47: #{tpu_custom_call.1} parent=11 // pred_region
          _
        $region48: #{tpu_custom_call.1} parent=11 // pred_fallthru
          _
        // Predicated region
        $region49: #{tpu_custom_call.1} parent=11 // pred_check
          %p403 = pneg %p263
        $region50: #{tpu_custom_call.1} parent=11 // pred_check_branch
          %405 = sbr.rel (%p403) target = $region52
        $region51: #{tpu_custom_call.1} parent=11 // pred_region
          _
        $region52: #{tpu_custom_call.1} parent=11 // pred_fallthru
          _
      $region12: #{tpu_custom_call.1} parent=5 // pred_fallthru
        _
      %p406 = scmp.lt.s32.totalorder %s27, 2
      // Predicated region
      $region53: #{tpu_custom_call.1} parent=5 // pred_check
        %p407 = pneg %p406
      $region54: #{tpu_custom_call.1} parent=5 // pred_check_branch
        %409 = sbr.rel (%p407) target = $region56
      $region55: #{tpu_custom_call.1} parent=5 // pred_region
        // Predicated region
        $region57: #{tpu_custom_call.1} parent=55 // pred_check
          %p410 = pneg %p47
        $region58: #{tpu_custom_call.1} parent=55 // pred_check_branch
          %412 = sbr.rel (%p410) target = $region60
        $region59: #{tpu_custom_call.1} parent=55 // pred_region
          %s413 = sand.u32 %s37, 1
          %s414 = scalar_lea.sflag [#allocation4], %s413
          %s415 = sand.u32 %s37, 1
          %s416 = smul.addr %s415, 256
          %s417 = scalar_lea.vmem [#allocation3], %s416
          %s419 = ssub.s32 4096, 4096
          %420 = vsyncadd %s414, %s419
          %s421 = smul.addr %s27, 32
          %s422 = smul.addr %s421, 128
          %s423 = scalar_lea.hbm %s0, %s422
          %s424 = sshll.u32 %s417, 4
          %s425 = int_to_ptr.vmem [resolvable:$true] %s424
          %430 = dma.hbm_to_vmem [thread:$0]  %s423, 4096, %s425, %s414, 128, 128, 8
        $region60: #{tpu_custom_call.1} parent=55 // pred_fallthru
          _
      $region56: #{tpu_custom_call.1} parent=5 // pred_fallthru
        _
      %p431 = scmp.le.s32.totalorder 1, %s27
      %p432 = scmp.lt.s32.totalorder %s27, 3
      %p433 = pnand %p431, %p432
      %p434 = pneg %p433
      // Predicated region
      $region61: #{tpu_custom_call.1} parent=5 // pred_check
        _
      $region62: #{tpu_custom_call.1} parent=5 // pred_check_branch
        %436 = sbr.rel (%p433) target = $region64
      $region63: #{tpu_custom_call.1} parent=5 // pred_region
        %s437 = ssub.s32 %s27, 1
        %s438 = sand.u32 %s40, 1
        %s439 = scalar_lea.sflag [#allocation4], %s438
        %s440 = sand.u32 %s40, 1
        %s441 = smul.addr %s440, 256
        %s442 = scalar_lea.vmem [#allocation3], %s441
        // Predicated region
        $region65: #{tpu_custom_call.1} parent=63 // pred_check
          %p443 = pneg %p53
        $region66: #{tpu_custom_call.1} parent=63 // pred_check_branch
          %445 = sbr.rel (%p443) target = $region68
        $region67: #{tpu_custom_call.1} parent=63 // pred_region
          %446 = dma.done %s439, 4096
        $region68: #{tpu_custom_call.1} parent=63 // pred_fallthru
          _
        // Predicated region
        $region69: #{tpu_custom_call.1} parent=63 // pred_check
          %p447 = pneg %p74
        $region70: #{tpu_custom_call.1} parent=63 // pred_check_branch
          %449 = sbr.rel (%p447) target = $region72
        $region71: #{tpu_custom_call.1} parent=63 // pred_region
          %450 = dma.done [#allocation7], 256
        $region72: #{tpu_custom_call.1} parent=63 // pred_fallthru
          _
        // Predicated region
        $region73: #{tpu_custom_call.1} parent=63 // pred_check
          %p451 = pneg %p95
        $region74: #{tpu_custom_call.1} parent=63 // pred_check_branch
          %453 = sbr.rel (%p451) target = $region76
        $region75: #{tpu_custom_call.1} parent=63 // pred_region
          %454 = dma.done [#allocation7], 16
        $region76: #{tpu_custom_call.1} parent=63 // pred_fallthru
          _
        // Predicated region
        $region77: #{tpu_custom_call.1} parent=63 // pred_check
          %p455 = pneg %p116
        $region78: #{tpu_custom_call.1} parent=63 // pred_check_branch
          %457 = sbr.rel (%p455) target = $region80
        $region79: #{tpu_custom_call.1} parent=63 // pred_region
          %458 = dma.done [#allocation10], 1024
        $region80: #{tpu_custom_call.1} parent=63 // pred_fallthru
          _
        // Predicated region
        $region81: #{tpu_custom_call.1} parent=63 // pred_check
          %p459 = pneg %p137
        $region82: #{tpu_custom_call.1} parent=63 // pred_check_branch
          %461 = sbr.rel (%p459) target = $region84
        $region83: #{tpu_custom_call.1} parent=63 // pred_region
          %462 = dma.done [#allocation10], 16
        $region84: #{tpu_custom_call.1} parent=63 // pred_fallthru
          _
        // Predicated region
        $region85: #{tpu_custom_call.1} parent=63 // pred_check
          %p463 = pneg %p158
        $region86: #{tpu_custom_call.1} parent=63 // pred_check_branch
          %465 = sbr.rel (%p463) target = $region88
        $region87: #{tpu_custom_call.1} parent=63 // pred_region
          %466 = dma.done [#allocation13], 256
        $region88: #{tpu_custom_call.1} parent=63 // pred_fallthru
          _
        // Predicated region
        $region89: #{tpu_custom_call.1} parent=63 // pred_check
          %p467 = pneg %p179
        $region90: #{tpu_custom_call.1} parent=63 // pred_check_branch
          %469 = sbr.rel (%p467) target = $region92
        $region91: #{tpu_custom_call.1} parent=63 // pred_region
          %470 = dma.done [#allocation13], 16
        $region92: #{tpu_custom_call.1} parent=63 // pred_fallthru
          _
        // Predicated region
        $region93: #{tpu_custom_call.1} parent=63 // pred_check
          %p471 = pneg %p200
        $region94: #{tpu_custom_call.1} parent=63 // pred_check_branch
          %473 = sbr.rel (%p471) target = $region96
        $region95: #{tpu_custom_call.1} parent=63 // pred_region
          %474 = dma.done [#allocation16], 1024
        $region96: #{tpu_custom_call.1} parent=63 // pred_fallthru
          _
        // Predicated region
        $region97: #{tpu_custom_call.1} parent=63 // pred_check
          %p475 = pneg %p221
        $region98: #{tpu_custom_call.1} parent=63 // pred_check_branch
          %477 = sbr.rel (%p475) target = $region100
        $region99: #{tpu_custom_call.1} parent=63 // pred_region
          %478 = dma.done [#allocation16], 16
        $region100: #{tpu_custom_call.1} parent=63 // pred_fallthru
          _
        %s479 = sand.u32 %s40, 1
        %s480 = scalar_lea.sflag [#allocation4], %s479
        %s481 = sand.u32 %s40, 1
        %s482 = smul.addr %s481, 256
        %s483 = scalar_lea.vmem [#allocation3], %s482
        %p484 = pneg %p53
        %p485 = pneg %p50
        %p486 = pneg %p74
        %p487 = pneg %p71
        %p488 = pneg %p95
        %p489 = pneg %p92
        %p490 = pneg %p116
        %p491 = pneg %p113
        %p492 = pneg %p137
        %p493 = pneg %p134
        %p494 = pneg %p158
        %p495 = pneg %p155
        %p496 = pneg %p179
        %p497 = pneg %p176
        %p498 = pneg %p200
        %p499 = pneg %p197
        %p500 = pneg %p221
        %p501 = pneg %p218
        %p502 = pneg %p242
        %p503 = pneg %p239
        %p504 = pneg %p263
        %p505 = pneg %p260
        %p506 = pneg %p289
        %p507 = pneg %p286
        %s508 = sand.u32 %s276, 1
        %s509 = scalar_lea.sflag [#allocation5], %s508
        %s510 = sand.u32 %s276, 1
        %s511 = smul.addr %s510, 256
        %s512 = scalar_lea.vmem [#allocation18], %s511
        %514 = vst [vmem:[#allocation2] sm:$0xff] 0.0
        %515 = vst [vmem:[#allocation2 + $0x8] sm:$0xff] 0.0
        %516 = vst [vmem:[#allocation2 + $0x110] sm:$0xff] 0.0
        %517 = vst [vmem:[#allocation2 + $0x118] sm:$0xff] 0.0
        %v518 = vlaneseq
        %v519 = vshrl.u32 %v518, 7
        %v520 = vadd.s32 %v519, 8
        %v521 = vadd.s32 %v519, 16
        %v522 = vadd.s32 %v519, 24
        %v523 = vadd.s32 %v519, 32
        %v524 = vadd.s32 %v519, 40
        %v525 = vadd.s32 %v519, 48
        %v526 = vadd.s32 %v519, 56
        %v527 = vadd.s32 %v519, 64
        %v528 = vadd.s32 %v519, 72
        %v529 = vadd.s32 %v519, 80
        %v530 = vadd.s32 %v519, 88
        %v531 = vadd.s32 %v519, 96
        %v532 = vadd.s32 %v519, 104
        %v533 = vadd.s32 %v519, 112
        %v534 = vadd.s32 %v519, 120
        %v535 = vadd.s32 %v519, 128
        %v536 = vadd.s32 %v519, 136
        %v537 = vadd.s32 %v519, 144
        %v538 = vadd.s32 %v519, 152
        %v539 = vadd.s32 %v519, 160
        %v540 = vadd.s32 %v519, 168
        %v541 = vadd.s32 %v519, 176
        %v542 = vadd.s32 %v519, 184
        %v543 = vadd.s32 %v519, 192
        %v544 = vadd.s32 %v519, 200
        %v545 = vadd.s32 %v519, 208
        %v546 = vadd.s32 %v519, 216
        %v547 = vadd.s32 %v519, 224
        %v548 = vadd.s32 %v519, 232
        %v549 = vadd.s32 %v519, 240
        %v550 = vadd.s32 %v519, 248
        %vm551 = vcmp.lt.s32.totalorder %v519, 0
        %v552 = vsub.s32 0, %v519
        %v553 = vsel %vm551, %v552, %v519
        %v554 = vshrl.u32 %v553, 4
        %v555 = vand.u32 %v553, 15
        %v556 = vsub.s32 0, %v555
        %v557 = vsel %vm551, %v556, %v555
        %vm558 = vcmp.lt.s32.totalorder %v520, 0
        %v559 = vsub.s32 0, %v520
        %v560 = vsel %vm558, %v559, %v520
        %v561 = vshrl.u32 %v560, 4
        %v562 = vand.u32 %v560, 15
        %v563 = vsub.s32 0, %v562
        %v564 = vsel %vm558, %v563, %v562
        %vm565 = vcmp.lt.s32.totalorder %v521, 0
        %v566 = vsub.s32 0, %v521
        %v567 = vsel %vm565, %v566, %v521
        %v568 = vshrl.u32 %v567, 4
        %v569 = vand.u32 %v567, 15
        %v570 = vsub.s32 0, %v569
        %v571 = vsel %vm565, %v570, %v569
        %vm572 = vcmp.lt.s32.totalorder %v522, 0
        %v573 = vsub.s32 0, %v522
        %v574 = vsel %vm572, %v573, %v522
        %v575 = vshrl.u32 %v574, 4
        %v576 = vand.u32 %v574, 15
        %v577 = vsub.s32 0, %v576
        %v578 = vsel %vm572, %v577, %v576
        %vm579 = vcmp.lt.s32.totalorder %v523, 0
        %v580 = vsub.s32 0, %v523
        %v581 = vsel %vm579, %v580, %v523
        %v582 = vshrl.u32 %v581, 4
        %v583 = vand.u32 %v581, 15
        %v584 = vsub.s32 0, %v583
        %v585 = vsel %vm579, %v584, %v583
        %vm586 = vcmp.lt.s32.totalorder %v524, 0
        %v587 = vsub.s32 0, %v524
        %v588 = vsel %vm586, %v587, %v524
        %v589 = vshrl.u32 %v588, 4
        %v590 = vand.u32 %v588, 15
        %v591 = vsub.s32 0, %v590
        %v592 = vsel %vm586, %v591, %v590
        %vm593 = vcmp.lt.s32.totalorder %v525, 0
        %v594 = vsub.s32 0, %v525
        %v595 = vsel %vm593, %v594, %v525
        %v596 = vshrl.u32 %v595, 4
        %v597 = vand.u32 %v595, 15
        %v598 = vsub.s32 0, %v597
        %v599 = vsel %vm593, %v598, %v597
        %vm600 = vcmp.lt.s32.totalorder %v526, 0
        %v601 = vsub.s32 0, %v526
        %v602 = vsel %vm600, %v601, %v526
        %v603 = vshrl.u32 %v602, 4
        %v604 = vand.u32 %v602, 15
        %v605 = vsub.s32 0, %v604
        %v606 = vsel %vm600, %v605, %v604
        %vm607 = vcmp.lt.s32.totalorder %v527, 0
        %v608 = vsub.s32 0, %v527
        %v609 = vsel %vm607, %v608, %v527
        %v610 = vshrl.u32 %v609, 4
        %v611 = vand.u32 %v609, 15
        %v612 = vsub.s32 0, %v611
        %v613 = vsel %vm607, %v612, %v611
        %vm614 = vcmp.lt.s32.totalorder %v528, 0
        %v615 = vsub.s32 0, %v528
        %v616 = vsel %vm614, %v615, %v528
        %v617 = vshrl.u32 %v616, 4
        %v618 = vand.u32 %v616, 15
        %v619 = vsub.s32 0, %v618
        %v620 = vsel %vm614, %v619, %v618
        %vm621 = vcmp.lt.s32.totalorder %v529, 0
        %v622 = vsub.s32 0, %v529
        %v623 = vsel %vm621, %v622, %v529
        %v624 = vshrl.u32 %v623, 4
        %v625 = vand.u32 %v623, 15
        %v626 = vsub.s32 0, %v625
        %v627 = vsel %vm621, %v626, %v625
        %vm628 = vcmp.lt.s32.totalorder %v530, 0
        %v629 = vsub.s32 0, %v530
        %v630 = vsel %vm628, %v629, %v530
        %v631 = vshrl.u32 %v630, 4
        %v632 = vand.u32 %v630, 15
        %v633 = vsub.s32 0, %v632
        %v634 = vsel %vm628, %v633, %v632
        %vm635 = vcmp.lt.s32.totalorder %v531, 0
        %v636 = vsub.s32 0, %v531
        %v637 = vsel %vm635, %v636, %v531
        %v638 = vshrl.u32 %v637, 4
        %v639 = vand.u32 %v637, 15
        %v640 = vsub.s32 0, %v639
        %v641 = vsel %vm635, %v640, %v639
        %vm642 = vcmp.lt.s32.totalorder %v532, 0
        %v643 = vsub.s32 0, %v532
        %v644 = vsel %vm642, %v643, %v532
        %v645 = vshrl.u32 %v644, 4
        %v646 = vand.u32 %v644, 15
        %v647 = vsub.s32 0, %v646
        %v648 = vsel %vm642, %v647, %v646
        %vm649 = vcmp.lt.s32.totalorder %v533, 0
        %v650 = vsub.s32 0, %v533
        %v651 = vsel %vm649, %v650, %v533
        %v652 = vshrl.u32 %v651, 4
        %v653 = vand.u32 %v651, 15
        %v654 = vsub.s32 0, %v653
        %v655 = vsel %vm649, %v654, %v653
        %vm656 = vcmp.lt.s32.totalorder %v534, 0
        %v657 = vsub.s32 0, %v534
        %v658 = vsel %vm656, %v657, %v534
        %v659 = vshrl.u32 %v658, 4
        %v660 = vand.u32 %v658, 15
        %v661 = vsub.s32 0, %v660
        %v662 = vsel %vm656, %v661, %v660
        %vm663 = vcmp.lt.s32.totalorder %v535, 0
        %v664 = vsub.s32 0, %v535
        %v665 = vsel %vm663, %v664, %v535
        %v666 = vshrl.u32 %v665, 4
        %v667 = vand.u32 %v665, 15
        %v668 = vsub.s32 0, %v667
        %v669 = vsel %vm663, %v668, %v667
        %vm670 = vcmp.lt.s32.totalorder %v536, 0
        %v671 = vsub.s32 0, %v536
        %v672 = vsel %vm670, %v671, %v536
        %v673 = vshrl.u32 %v672, 4
        %v674 = vand.u32 %v672, 15
        %v675 = vsub.s32 0, %v674
        %v676 = vsel %vm670, %v675, %v674
        %vm677 = vcmp.lt.s32.totalorder %v537, 0
        %v678 = vsub.s32 0, %v537
        %v679 = vsel %vm677, %v678, %v537
        %v680 = vshrl.u32 %v679, 4
        %v681 = vand.u32 %v679, 15
        %v682 = vsub.s32 0, %v681
        %v683 = vsel %vm677, %v682, %v681
        %vm684 = vcmp.lt.s32.totalorder %v538, 0
        %v685 = vsub.s32 0, %v538
        %v686 = vsel %vm684, %v685, %v538
        %v687 = vshrl.u32 %v686, 4
        %v688 = vand.u32 %v686, 15
        %v689 = vsub.s32 0, %v688
        %v690 = vsel %vm684, %v689, %v688
        %vm691 = vcmp.lt.s32.totalorder %v539, 0
        %v692 = vsub.s32 0, %v539
        %v693 = vsel %vm691, %v692, %v539
        %v694 = vshrl.u32 %v693, 4
        %v695 = vand.u32 %v693, 15
        %v696 = vsub.s32 0, %v695
        %v697 = vsel %vm691, %v696, %v695
        %vm698 = vcmp.lt.s32.totalorder %v540, 0
        %v699 = vsub.s32 0, %v540
        %v700 = vsel %vm698, %v699, %v540
        %v701 = vshrl.u32 %v700, 4
        %v702 = vand.u32 %v700, 15
        %v703 = vsub.s32 0, %v702
        %v704 = vsel %vm698, %v703, %v702
        %vm705 = vcmp.lt.s32.totalorder %v541, 0
        %v706 = vsub.s32 0, %v541
        %v707 = vsel %vm705, %v706, %v541
        %v708 = vshrl.u32 %v707, 4
        %v709 = vand.u32 %v707, 15
        %v710 = vsub.s32 0, %v709
        %v711 = vsel %vm705, %v710, %v709
        %vm712 = vcmp.lt.s32.totalorder %v542, 0
        %v713 = vsub.s32 0, %v542
        %v714 = vsel %vm712, %v713, %v542
        %v715 = vshrl.u32 %v714, 4
        %v716 = vand.u32 %v714, 15
        %v717 = vsub.s32 0, %v716
        %v718 = vsel %vm712, %v717, %v716
        %vm719 = vcmp.lt.s32.totalorder %v543, 0
        %v720 = vsub.s32 0, %v543
        %v721 = vsel %vm719, %v720, %v543
        %v722 = vshrl.u32 %v721, 4
        %v723 = vand.u32 %v721, 15
        %v724 = vsub.s32 0, %v723
        %v725 = vsel %vm719, %v724, %v723
        %vm726 = vcmp.lt.s32.totalorder %v544, 0
        %v727 = vsub.s32 0, %v544
        %v728 = vsel %vm726, %v727, %v544
        %v729 = vshrl.u32 %v728, 4
        %v730 = vand.u32 %v728, 15
        %v731 = vsub.s32 0, %v730
        %v732 = vsel %vm726, %v731, %v730
        %vm733 = vcmp.lt.s32.totalorder %v545, 0
        %v734 = vsub.s32 0, %v545
        %v735 = vsel %vm733, %v734, %v545
        %v736 = vshrl.u32 %v735, 4
        %v737 = vand.u32 %v735, 15
        %v738 = vsub.s32 0, %v737
        %v739 = vsel %vm733, %v738, %v737
        %vm740 = vcmp.lt.s32.totalorder %v546, 0
        %v741 = vsub.s32 0, %v546
        %v742 = vsel %vm740, %v741, %v546
        %v743 = vshrl.u32 %v742, 4
        %v744 = vand.u32 %v742, 15
        %v745 = vsub.s32 0, %v744
        %v746 = vsel %vm740, %v745, %v744
        %vm747 = vcmp.lt.s32.totalorder %v547, 0
        %v748 = vsub.s32 0, %v547
        %v749 = vsel %vm747, %v748, %v547
        %v750 = vshrl.u32 %v749, 4
        %v751 = vand.u32 %v749, 15
        %v752 = vsub.s32 0, %v751
        %v753 = vsel %vm747, %v752, %v751
        %vm754 = vcmp.lt.s32.totalorder %v548, 0
        %v755 = vsub.s32 0, %v548
        %v756 = vsel %vm754, %v755, %v548
        %v757 = vshrl.u32 %v756, 4
        %v758 = vand.u32 %v756, 15
        %v759 = vsub.s32 0, %v758
        %v760 = vsel %vm754, %v759, %v758
        %vm761 = vcmp.lt.s32.totalorder %v549, 0
        %v762 = vsub.s32 0, %v549
        %v763 = vsel %vm761, %v762, %v549
        %v764 = vshrl.u32 %v763, 4
        %v765 = vand.u32 %v763, 15
        %v766 = vsub.s32 0, %v765
        %v767 = vsel %vm761, %v766, %v765
        %vm768 = vcmp.lt.s32.totalorder %v550, 0
        %v769 = vsub.s32 0, %v550
        %v770 = vsel %vm768, %v769, %v550
        %v771 = vshrl.u32 %v770, 4
        %v772 = vand.u32 %v770, 15
        %v773 = vsub.s32 0, %v772
        %v774 = vsel %vm768, %v773, %v772
        %vm775 = vcmp.ne.s32.totalorder %v557, 0
        %vm776 = vcmp.ne.s32.totalorder %v564, 0
        %vm777 = vcmp.ne.s32.totalorder %v571, 0
        %vm778 = vcmp.ne.s32.totalorder %v578, 0
        %vm779 = vcmp.ne.s32.totalorder %v585, 0
        %vm780 = vcmp.ne.s32.totalorder %v592, 0
        %vm781 = vcmp.ne.s32.totalorder %v599, 0
        %vm782 = vcmp.ne.s32.totalorder %v606, 0
        %vm783 = vcmp.ne.s32.totalorder %v613, 0
        %vm784 = vcmp.ne.s32.totalorder %v620, 0
        %vm785 = vcmp.ne.s32.totalorder %v627, 0
        %vm786 = vcmp.ne.s32.totalorder %v634, 0
        %vm787 = vcmp.ne.s32.totalorder %v641, 0
        %vm788 = vcmp.ne.s32.totalorder %v648, 0
        %vm789 = vcmp.ne.s32.totalorder %v655, 0
        %vm790 = vcmp.ne.s32.totalorder %v662, 0
        %vm791 = vcmp.ne.s32.totalorder %v669, 0
        %vm792 = vcmp.ne.s32.totalorder %v676, 0
        %vm793 = vcmp.ne.s32.totalorder %v683, 0
        %vm794 = vcmp.ne.s32.totalorder %v690, 0
        %vm795 = vcmp.ne.s32.totalorder %v697, 0
        %vm796 = vcmp.ne.s32.totalorder %v704, 0
        %vm797 = vcmp.ne.s32.totalorder %v711, 0
        %vm798 = vcmp.ne.s32.totalorder %v718, 0
        %vm799 = vcmp.ne.s32.totalorder %v725, 0
        %vm800 = vcmp.ne.s32.totalorder %v732, 0
        %vm801 = vcmp.ne.s32.totalorder %v739, 0
        %vm802 = vcmp.ne.s32.totalorder %v746, 0
        %vm803 = vcmp.ne.s32.totalorder %v753, 0
        %vm804 = vcmp.ne.s32.totalorder %v760, 0
        %vm805 = vcmp.ne.s32.totalorder %v767, 0
        %vm806 = vcmp.ne.s32.totalorder %v774, 0
        %vm807 = vcmp.lt.s32.totalorder %v557, 0
        %vm808 = vcmp.lt.s32.totalorder %v564, 0
        %vm809 = vcmp.lt.s32.totalorder %v571, 0
        %vm810 = vcmp.lt.s32.totalorder %v578, 0
        %vm811 = vcmp.lt.s32.totalorder %v585, 0
        %vm812 = vcmp.lt.s32.totalorder %v592, 0
        %vm813 = vcmp.lt.s32.totalorder %v599, 0
        %vm814 = vcmp.lt.s32.totalorder %v606, 0
        %vm815 = vcmp.lt.s32.totalorder %v613, 0
        %vm816 = vcmp.lt.s32.totalorder %v620, 0
        %vm817 = vcmp.lt.s32.totalorder %v627, 0
        %vm818 = vcmp.lt.s32.totalorder %v634, 0
        %vm819 = vcmp.lt.s32.totalorder %v641, 0
        %vm820 = vcmp.lt.s32.totalorder %v648, 0
        %vm821 = vcmp.lt.s32.totalorder %v655, 0
        %vm822 = vcmp.lt.s32.totalorder %v662, 0
        %vm823 = vcmp.lt.s32.totalorder %v669, 0
        %vm824 = vcmp.lt.s32.totalorder %v676, 0
        %vm825 = vcmp.lt.s32.totalorder %v683, 0
        %vm826 = vcmp.lt.s32.totalorder %v690, 0
        %vm827 = vcmp.lt.s32.totalorder %v697, 0
        %vm828 = vcmp.lt.s32.totalorder %v704, 0
        %vm829 = vcmp.lt.s32.totalorder %v711, 0
        %vm830 = vcmp.lt.s32.totalorder %v718, 0
        %vm831 = vcmp.lt.s32.totalorder %v725, 0
        %vm832 = vcmp.lt.s32.totalorder %v732, 0
        %vm833 = vcmp.lt.s32.totalorder %v739, 0
        %vm834 = vcmp.lt.s32.totalorder %v746, 0
        %vm835 = vcmp.lt.s32.totalorder %v753, 0
        %vm836 = vcmp.lt.s32.totalorder %v760, 0
        %vm837 = vcmp.lt.s32.totalorder %v767, 0
        %vm838 = vcmp.lt.s32.totalorder %v774, 0
        %vm839 = vmand %vm807, %vm775
        %vm840 = vmand %vm808, %vm776
        %vm841 = vmand %vm809, %vm777
        %vm842 = vmand %vm810, %vm778
        %vm843 = vmand %vm811, %vm779
        %vm844 = vmand %vm812, %vm780
        %vm845 = vmand %vm813, %vm781
        %vm846 = vmand %vm814, %vm782
        %vm847 = vmand %vm815, %vm783
        %vm848 = vmand %vm816, %vm784
        %vm849 = vmand %vm817, %vm785
        %vm850 = vmand %vm818, %vm786
        %vm851 = vmand %vm819, %vm787
        %vm852 = vmand %vm820, %vm788
        %vm853 = vmand %vm821, %vm789
        %vm854 = vmand %vm822, %vm790
        %vm855 = vmand %vm823, %vm791
        %vm856 = vmand %vm824, %vm792
        %vm857 = vmand %vm825, %vm793
        %vm858 = vmand %vm826, %vm794
        %vm859 = vmand %vm827, %vm795
        %vm860 = vmand %vm828, %vm796
        %vm861 = vmand %vm829, %vm797
        %vm862 = vmand %vm830, %vm798
        %vm863 = vmand %vm831, %vm799
        %vm864 = vmand %vm832, %vm800
        %vm865 = vmand %vm833, %vm801
        %vm866 = vmand %vm834, %vm802
        %vm867 = vmand %vm835, %vm803
        %vm868 = vmand %vm836, %vm804
        %vm869 = vmand %vm837, %vm805
        %vm870 = vmand %vm838, %vm806
        %v871 = vadd.s32 %v557, 16
        %v872 = vadd.s32 %v564, 16
        %v873 = vadd.s32 %v571, 16
        %v874 = vadd.s32 %v578, 16
        %v875 = vadd.s32 %v585, 16
        %v876 = vadd.s32 %v592, 16
        %v877 = vadd.s32 %v599, 16
        %v878 = vadd.s32 %v606, 16
        %v879 = vadd.s32 %v613, 16
        %v880 = vadd.s32 %v620, 16
        %v881 = vadd.s32 %v627, 16
        %v882 = vadd.s32 %v634, 16
        %v883 = vadd.s32 %v641, 16
        %v884 = vadd.s32 %v648, 16
        %v885 = vadd.s32 %v655, 16
        %v886 = vadd.s32 %v662, 16
        %v887 = vadd.s32 %v669, 16
        %v888 = vadd.s32 %v676, 16
        %v889 = vadd.s32 %v683, 16
        %v890 = vadd.s32 %v690, 16
        %v891 = vadd.s32 %v697, 16
        %v892 = vadd.s32 %v704, 16
        %v893 = vadd.s32 %v711, 16
        %v894 = vadd.s32 %v718, 16
        %v895 = vadd.s32 %v725, 16
        %v896 = vadd.s32 %v732, 16
        %v897 = vadd.s32 %v739, 16
        %v898 = vadd.s32 %v746, 16
        %v899 = vadd.s32 %v753, 16
        %v900 = vadd.s32 %v760, 16
        %v901 = vadd.s32 %v767, 16
        %v902 = vadd.s32 %v774, 16
        %v903 = vsel %vm839, %v871, %v557
        %v904 = vsel %vm840, %v872, %v564
        %v905 = vsel %vm841, %v873, %v571
        %v906 = vsel %vm842, %v874, %v578
        %v907 = vsel %vm843, %v875, %v585
        %v908 = vsel %vm844, %v876, %v592
        %v909 = vsel %vm845, %v877, %v599
        %v910 = vsel %vm846, %v878, %v606
        %v911 = vsel %vm847, %v879, %v613
        %v912 = vsel %vm848, %v880, %v620
        %v913 = vsel %vm849, %v881, %v627
        %v914 = vsel %vm850, %v882, %v634
        %v915 = vsel %vm851, %v883, %v641
        %v916 = vsel %vm852, %v884, %v648
        %v917 = vsel %vm853, %v885, %v655
        %v918 = vsel %vm854, %v886, %v662
        %v919 = vsel %vm855, %v887, %v669
        %v920 = vsel %vm856, %v888, %v676
        %v921 = vsel %vm857, %v889, %v683
        %v922 = vsel %vm858, %v890, %v690
        %v923 = vsel %vm859, %v891, %v697
        %v924 = vsel %vm860, %v892, %v704
        %v925 = vsel %vm861, %v893, %v711
        %v926 = vsel %vm862, %v894, %v718
        %v927 = vsel %vm863, %v895, %v725
        %v928 = vsel %vm864, %v896, %v732
        %v929 = vsel %vm865, %v897, %v739
        %v930 = vsel %vm866, %v898, %v746
        %v931 = vsel %vm867, %v899, %v753
        %v932 = vsel %vm868, %v900, %v760
        %v933 = vsel %vm869, %v901, %v767
        %v934 = vsel %vm870, %v902, %v774
        %v935 = vadd.s32 %v903, 4294967295
        %v936 = vadd.s32 %v904, 4294967295
        %v937 = vadd.s32 %v905, 4294967295
        %v938 = vadd.s32 %v906, 4294967295
        %v939 = vadd.s32 %v907, 4294967295
        %v940 = vadd.s32 %v908, 4294967295
        %v941 = vadd.s32 %v909, 4294967295
        %v942 = vadd.s32 %v910, 4294967295
        %v943 = vadd.s32 %v911, 4294967295
        %v944 = vadd.s32 %v912, 4294967295
        %v945 = vadd.s32 %v913, 4294967295
        %v946 = vadd.s32 %v914, 4294967295
        %v947 = vadd.s32 %v915, 4294967295
        %v948 = vadd.s32 %v916, 4294967295
        %v949 = vadd.s32 %v917, 4294967295
        %v950 = vadd.s32 %v918, 4294967295
        %v951 = vadd.s32 %v919, 4294967295
        %v952 = vadd.s32 %v920, 4294967295
        %v953 = vadd.s32 %v921, 4294967295
        %v954 = vadd.s32 %v922, 4294967295
        %v955 = vadd.s32 %v923, 4294967295
        %v956 = vadd.s32 %v924, 4294967295
        %v957 = vadd.s32 %v925, 4294967295
        %v958 = vadd.s32 %v926, 4294967295
        %v959 = vadd.s32 %v927, 4294967295
        %v960 = vadd.s32 %v928, 4294967295
        %v961 = vadd.s32 %v929, 4294967295
        %v962 = vadd.s32 %v930, 4294967295
        %v963 = vadd.s32 %v931, 4294967295
        %v964 = vadd.s32 %v932, 4294967295
        %v965 = vadd.s32 %v933, 4294967295
        %v966 = vadd.s32 %v934, 4294967295
        %vm967 = vcmp.ge.s32.totalorder %v935, 0
        %vm968 = vcmp.ge.s32.totalorder %v936, 0
        %vm969 = vcmp.ge.s32.totalorder %v937, 0
        %vm970 = vcmp.ge.s32.totalorder %v938, 0
        %vm971 = vcmp.ge.s32.totalorder %v939, 0
        %vm972 = vcmp.ge.s32.totalorder %v940, 0
        %vm973 = vcmp.ge.s32.totalorder %v941, 0
        %vm974 = vcmp.ge.s32.totalorder %v942, 0
        %vm975 = vcmp.ge.s32.totalorder %v943, 0
        %vm976 = vcmp.ge.s32.totalorder %v944, 0
        %vm977 = vcmp.ge.s32.totalorder %v945, 0
        %vm978 = vcmp.ge.s32.totalorder %v946, 0
        %vm979 = vcmp.ge.s32.totalorder %v947, 0
        %vm980 = vcmp.ge.s32.totalorder %v948, 0
        %vm981 = vcmp.ge.s32.totalorder %v949, 0
        %vm982 = vcmp.ge.s32.totalorder %v950, 0
        %vm983 = vcmp.ge.s32.totalorder %v951, 0
        %vm984 = vcmp.ge.s32.totalorder %v952, 0
        %vm985 = vcmp.ge.s32.totalorder %v953, 0
        %vm986 = vcmp.ge.s32.totalorder %v954, 0
        %vm987 = vcmp.ge.s32.totalorder %v955, 0
        %vm988 = vcmp.ge.s32.totalorder %v956, 0
        %vm989 = vcmp.ge.s32.totalorder %v957, 0
        %vm990 = vcmp.ge.s32.totalorder %v958, 0
        %vm991 = vcmp.ge.s32.totalorder %v959, 0
        %vm992 = vcmp.ge.s32.totalorder %v960, 0
        %vm993 = vcmp.ge.s32.totalorder %v961, 0
        %vm994 = vcmp.ge.s32.totalorder %v962, 0
        %vm995 = vcmp.ge.s32.totalorder %v963, 0
        %vm996 = vcmp.ge.s32.totalorder %v964, 0
        %vm997 = vcmp.ge.s32.totalorder %v965, 0
        %vm998 = vcmp.ge.s32.totalorder %v966, 0
        %vm999 = vcmp.lt.s32.totalorder %v935, 16
        %vm1000 = vcmp.lt.s32.totalorder %v936, 16
        %vm1001 = vcmp.lt.s32.totalorder %v937, 16
        %vm1002 = vcmp.lt.s32.totalorder %v938, 16
        %vm1003 = vcmp.lt.s32.totalorder %v939, 16
        %vm1004 = vcmp.lt.s32.totalorder %v940, 16
        %vm1005 = vcmp.lt.s32.totalorder %v941, 16
        %vm1006 = vcmp.lt.s32.totalorder %v942, 16
        %vm1007 = vcmp.lt.s32.totalorder %v943, 16
        %vm1008 = vcmp.lt.s32.totalorder %v944, 16
        %vm1009 = vcmp.lt.s32.totalorder %v945, 16
        %vm1010 = vcmp.lt.s32.totalorder %v946, 16
        %vm1011 = vcmp.lt.s32.totalorder %v947, 16
        %vm1012 = vcmp.lt.s32.totalorder %v948, 16
        %vm1013 = vcmp.lt.s32.totalorder %v949, 16
        %vm1014 = vcmp.lt.s32.totalorder %v950, 16
        %vm1015 = vcmp.lt.s32.totalorder %v951, 16
        %vm1016 = vcmp.lt.s32.totalorder %v952, 16
        %vm1017 = vcmp.lt.s32.totalorder %v953, 16
        %vm1018 = vcmp.lt.s32.totalorder %v954, 16
        %vm1019 = vcmp.lt.s32.totalorder %v955, 16
        %vm1020 = vcmp.lt.s32.totalorder %v956, 16
        %vm1021 = vcmp.lt.s32.totalorder %v957, 16
        %vm1022 = vcmp.lt.s32.totalorder %v958, 16
        %vm1023 = vcmp.lt.s32.totalorder %v959, 16
        %vm1024 = vcmp.lt.s32.totalorder %v960, 16
        %vm1025 = vcmp.lt.s32.totalorder %v961, 16
        %vm1026 = vcmp.lt.s32.totalorder %v962, 16
        %vm1027 = vcmp.lt.s32.totalorder %v963, 16
        %vm1028 = vcmp.lt.s32.totalorder %v964, 16
        %vm1029 = vcmp.lt.s32.totalorder %v965, 16
        %vm1030 = vcmp.lt.s32.totalorder %v966, 16
        %vm1031 = vmand %vm967, %vm999
        %vm1032 = vmand %vm968, %vm1000
        %vm1033 = vmand %vm969, %vm1001
        %vm1034 = vmand %vm970, %vm1002
        %vm1035 = vmand %vm971, %vm1003
        %vm1036 = vmand %vm972, %vm1004
        %vm1037 = vmand %vm973, %vm1005
        %vm1038 = vmand %vm974, %vm1006
        %vm1039 = vmand %vm975, %vm1007
        %vm1040 = vmand %vm976, %vm1008
        %vm1041 = vmand %vm977, %vm1009
        %vm1042 = vmand %vm978, %vm1010
        %vm1043 = vmand %vm979, %vm1011
        %vm1044 = vmand %vm980, %vm1012
        %vm1045 = vmand %vm981, %vm1013
        %vm1046 = vmand %vm982, %vm1014
        %vm1047 = vmand %vm983, %vm1015
        %vm1048 = vmand %vm984, %vm1016
        %vm1049 = vmand %vm985, %vm1017
        %vm1050 = vmand %vm986, %vm1018
        %vm1051 = vmand %vm987, %vm1019
        %vm1052 = vmand %vm988, %vm1020
        %vm1053 = vmand %vm989, %vm1021
        %vm1054 = vmand %vm990, %vm1022
        %vm1055 = vmand %vm991, %vm1023
        %vm1056 = vmand %vm992, %vm1024
        %vm1057 = vmand %vm993, %vm1025
        %vm1058 = vmand %vm994, %vm1026
        %vm1059 = vmand %vm995, %vm1027
        %vm1060 = vmand %vm996, %vm1028
        %vm1061 = vmand %vm997, %vm1029
        %vm1062 = vmand %vm998, %vm1030
        %v1063 = vsel %vm1031, 1, 0
        %v1064 = vsel %vm1032, 1, 0
        %v1065 = vsel %vm1033, 1, 0
        %v1066 = vsel %vm1034, 1, 0
        %v1067 = vsel %vm1035, 1, 0
        %v1068 = vsel %vm1036, 1, 0
        %v1069 = vsel %vm1037, 1, 0
        %v1070 = vsel %vm1038, 1, 0
        %v1071 = vsel %vm1039, 1, 0
        %v1072 = vsel %vm1040, 1, 0
        %v1073 = vsel %vm1041, 1, 0
        %v1074 = vsel %vm1042, 1, 0
        %v1075 = vsel %vm1043, 1, 0
        %v1076 = vsel %vm1044, 1, 0
        %v1077 = vsel %vm1045, 1, 0
        %v1078 = vsel %vm1046, 1, 0
        %v1079 = vsel %vm1047, 1, 0
        %v1080 = vsel %vm1048, 1, 0
        %v1081 = vsel %vm1049, 1, 0
        %v1082 = vsel %vm1050, 1, 0
        %v1083 = vsel %vm1051, 1, 0
        %v1084 = vsel %vm1052, 1, 0
        %v1085 = vsel %vm1053, 1, 0
        %v1086 = vsel %vm1054, 1, 0
        %v1087 = vsel %vm1055, 1, 0
        %v1088 = vsel %vm1056, 1, 0
        %v1089 = vsel %vm1057, 1, 0
        %v1090 = vsel %vm1058, 1, 0
        %v1091 = vsel %vm1059, 1, 0
        %v1092 = vsel %vm1060, 1, 0
        %v1093 = vsel %vm1061, 1, 0
        %v1094 = vsel %vm1062, 1, 0
        %v1095 = vcvt.s32.f32 %v1063
        %v1096 = vcvt.s32.f32 %v1064
        %v1097 = vcvt.s32.f32 %v1065
        %v1098 = vcvt.s32.f32 %v1066
        %v1099 = vcvt.s32.f32 %v1067
        %v1100 = vcvt.s32.f32 %v1068
        %v1101 = vcvt.s32.f32 %v1069
        %v1102 = vcvt.s32.f32 %v1070
        %v1103 = vcvt.s32.f32 %v1071
        %v1104 = vcvt.s32.f32 %v1072
        %v1105 = vcvt.s32.f32 %v1073
        %v1106 = vcvt.s32.f32 %v1074
        %v1107 = vcvt.s32.f32 %v1075
        %v1108 = vcvt.s32.f32 %v1076
        %v1109 = vcvt.s32.f32 %v1077
        %v1110 = vcvt.s32.f32 %v1078
        %v1111 = vcvt.s32.f32 %v1079
        %v1112 = vcvt.s32.f32 %v1080
        %v1113 = vcvt.s32.f32 %v1081
        %v1114 = vcvt.s32.f32 %v1082
        %v1115 = vcvt.s32.f32 %v1083
        %v1116 = vcvt.s32.f32 %v1084
        %v1117 = vcvt.s32.f32 %v1085
        %v1118 = vcvt.s32.f32 %v1086
        %v1119 = vcvt.s32.f32 %v1087
        %v1120 = vcvt.s32.f32 %v1088
        %v1121 = vcvt.s32.f32 %v1089
        %v1122 = vcvt.s32.f32 %v1090
        %v1123 = vcvt.s32.f32 %v1091
        %v1124 = vcvt.s32.f32 %v1092
        %v1125 = vcvt.s32.f32 %v1093
        %v1126 = vcvt.s32.f32 %v1094
        %v1127 = vadd.s32 %v903, 1
        %v1128 = vadd.s32 %v904, 1
        %v1129 = vadd.s32 %v905, 1
        %v1130 = vadd.s32 %v906, 1
        %v1131 = vadd.s32 %v907, 1
        %v1132 = vadd.s32 %v908, 1
        %v1133 = vadd.s32 %v909, 1
        %v1134 = vadd.s32 %v910, 1
        %v1135 = vadd.s32 %v911, 1
        %v1136 = vadd.s32 %v912, 1
        %v1137 = vadd.s32 %v913, 1
        %v1138 = vadd.s32 %v914, 1
        %v1139 = vadd.s32 %v915, 1
        %v1140 = vadd.s32 %v916, 1
        %v1141 = vadd.s32 %v917, 1
        %v1142 = vadd.s32 %v918, 1
        %v1143 = vadd.s32 %v919, 1
        %v1144 = vadd.s32 %v920, 1
        %v1145 = vadd.s32 %v921, 1
        %v1146 = vadd.s32 %v922, 1
        %v1147 = vadd.s32 %v923, 1
        %v1148 = vadd.s32 %v924, 1
        %v1149 = vadd.s32 %v925, 1
        %v1150 = vadd.s32 %v926, 1
        %v1151 = vadd.s32 %v927, 1
        %v1152 = vadd.s32 %v928, 1
        %v1153 = vadd.s32 %v929, 1
        %v1154 = vadd.s32 %v930, 1
        %v1155 = vadd.s32 %v931, 1
        %v1156 = vadd.s32 %v932, 1
        %v1157 = vadd.s32 %v933, 1
        %v1158 = vadd.s32 %v934, 1
        %vm1159 = vcmp.ge.s32.totalorder %v1127, 0
        %vm1160 = vcmp.ge.s32.totalorder %v1128, 0
        %vm1161 = vcmp.ge.s32.totalorder %v1129, 0
        %vm1162 = vcmp.ge.s32.totalorder %v1130, 0
        %vm1163 = vcmp.ge.s32.totalorder %v1131, 0
        %vm1164 = vcmp.ge.s32.totalorder %v1132, 0
        %vm1165 = vcmp.ge.s32.totalorder %v1133, 0
        %vm1166 = vcmp.ge.s32.totalorder %v1134, 0
        %vm1167 = vcmp.ge.s32.totalorder %v1135, 0
        %vm1168 = vcmp.ge.s32.totalorder %v1136, 0
        %vm1169 = vcmp.ge.s32.totalorder %v1137, 0
        %vm1170 = vcmp.ge.s32.totalorder %v1138, 0
        %vm1171 = vcmp.ge.s32.totalorder %v1139, 0
        %vm1172 = vcmp.ge.s32.totalorder %v1140, 0
        %vm1173 = vcmp.ge.s32.totalorder %v1141, 0
        %vm1174 = vcmp.ge.s32.totalorder %v1142, 0
        %vm1175 = vcmp.ge.s32.totalorder %v1143, 0
        %vm1176 = vcmp.ge.s32.totalorder %v1144, 0
        %vm1177 = vcmp.ge.s32.totalorder %v1145, 0
        %vm1178 = vcmp.ge.s32.totalorder %v1146, 0
        %vm1179 = vcmp.ge.s32.totalorder %v1147, 0
        %vm1180 = vcmp.ge.s32.totalorder %v1148, 0
        %vm1181 = vcmp.ge.s32.totalorder %v1149, 0
        %vm1182 = vcmp.ge.s32.totalorder %v1150, 0
        %vm1183 = vcmp.ge.s32.totalorder %v1151, 0
        %vm1184 = vcmp.ge.s32.totalorder %v1152, 0
        %vm1185 = vcmp.ge.s32.totalorder %v1153, 0
        %vm1186 = vcmp.ge.s32.totalorder %v1154, 0
        %vm1187 = vcmp.ge.s32.totalorder %v1155, 0
        %vm1188 = vcmp.ge.s32.totalorder %v1156, 0
        %vm1189 = vcmp.ge.s32.totalorder %v1157, 0
        %vm1190 = vcmp.ge.s32.totalorder %v1158, 0
        %vm1191 = vcmp.lt.s32.totalorder %v1127, 16
        %vm1192 = vcmp.lt.s32.totalorder %v1128, 16
        %vm1193 = vcmp.lt.s32.totalorder %v1129, 16
        %vm1194 = vcmp.lt.s32.totalorder %v1130, 16
        %vm1195 = vcmp.lt.s32.totalorder %v1131, 16
        %vm1196 = vcmp.lt.s32.totalorder %v1132, 16
        %vm1197 = vcmp.lt.s32.totalorder %v1133, 16
        %vm1198 = vcmp.lt.s32.totalorder %v1134, 16
        %vm1199 = vcmp.lt.s32.totalorder %v1135, 16
        %vm1200 = vcmp.lt.s32.totalorder %v1136, 16
        %vm1201 = vcmp.lt.s32.totalorder %v1137, 16
        %vm1202 = vcmp.lt.s32.totalorder %v1138, 16
        %vm1203 = vcmp.lt.s32.totalorder %v1139, 16
        %vm1204 = vcmp.lt.s32.totalorder %v1140, 16
        %vm1205 = vcmp.lt.s32.totalorder %v1141, 16
        %vm1206 = vcmp.lt.s32.totalorder %v1142, 16
        %vm1207 = vcmp.lt.s32.totalorder %v1143, 16
        %vm1208 = vcmp.lt.s32.totalorder %v1144, 16
        %vm1209 = vcmp.lt.s32.totalorder %v1145, 16
        %vm1210 = vcmp.lt.s32.totalorder %v1146, 16
        %vm1211 = vcmp.lt.s32.totalorder %v1147, 16
        %vm1212 = vcmp.lt.s32.totalorder %v1148, 16
        %vm1213 = vcmp.lt.s32.totalorder %v1149, 16
        %vm1214 = vcmp.lt.s32.totalorder %v1150, 16
        %vm1215 = vcmp.lt.s32.totalorder %v1151, 16
        %vm1216 = vcmp.lt.s32.totalorder %v1152, 16
        %vm1217 = vcmp.lt.s32.totalorder %v1153, 16
        %vm1218 = vcmp.lt.s32.totalorder %v1154, 16
        %vm1219 = vcmp.lt.s32.totalorder %v1155, 16
        %vm1220 = vcmp.lt.s32.totalorder %v1156, 16
        %vm1221 = vcmp.lt.s32.totalorder %v1157, 16
        %vm1222 = vcmp.lt.s32.totalorder %v1158, 16
        %vm1223 = vmand %vm1159, %vm1191
        %vm1224 = vmand %vm1160, %vm1192
        %vm1225 = vmand %vm1161, %vm1193
        %vm1226 = vmand %vm1162, %vm1194
        %vm1227 = vmand %vm1163, %vm1195
        %vm1228 = vmand %vm1164, %vm1196
        %vm1229 = vmand %vm1165, %vm1197
        %vm1230 = vmand %vm1166, %vm1198
        %vm1231 = vmand %vm1167, %vm1199
        %vm1232 = vmand %vm1168, %vm1200
        %vm1233 = vmand %vm1169, %vm1201
        %vm1234 = vmand %vm1170, %vm1202
        %vm1235 = vmand %vm1171, %vm1203
        %vm1236 = vmand %vm1172, %vm1204
        %vm1237 = vmand %vm1173, %vm1205
        %vm1238 = vmand %vm1174, %vm1206
        %vm1239 = vmand %vm1175, %vm1207
        %vm1240 = vmand %vm1176, %vm1208
        %vm1241 = vmand %vm1177, %vm1209
        %vm1242 = vmand %vm1178, %vm1210
        %vm1243 = vmand %vm1179, %vm1211
        %vm1244 = vmand %vm1180, %vm1212
        %vm1245 = vmand %vm1181, %vm1213
        %vm1246 = vmand %vm1182, %vm1214
        %vm1247 = vmand %vm1183, %vm1215
        %vm1248 = vmand %vm1184, %vm1216
        %vm1249 = vmand %vm1185, %vm1217
        %vm1250 = vmand %vm1186, %vm1218
        %vm1251 = vmand %vm1187, %vm1219
        %vm1252 = vmand %vm1188, %vm1220
        %vm1253 = vmand %vm1189, %vm1221
        %vm1254 = vmand %vm1190, %vm1222
        %v1255 = vsel %vm1223, 1, 0
        %v1256 = vsel %vm1224, 1, 0
        %v1257 = vsel %vm1225, 1, 0
        %v1258 = vsel %vm1226, 1, 0
        %v1259 = vsel %vm1227, 1, 0
        %v1260 = vsel %vm1228, 1, 0
        %v1261 = vsel %vm1229, 1, 0
        %v1262 = vsel %vm1230, 1, 0
        %v1263 = vsel %vm1231, 1, 0
        %v1264 = vsel %vm1232, 1, 0
        %v1265 = vsel %vm1233, 1, 0
        %v1266 = vsel %vm1234, 1, 0
        %v1267 = vsel %vm1235, 1, 0
        %v1268 = vsel %vm1236, 1, 0
        %v1269 = vsel %vm1237, 1, 0
        %v1270 = vsel %vm1238, 1, 0
        %v1271 = vsel %vm1239, 1, 0
        %v1272 = vsel %vm1240, 1, 0
        %v1273 = vsel %vm1241, 1, 0
        %v1274 = vsel %vm1242, 1, 0
        %v1275 = vsel %vm1243, 1, 0
        %v1276 = vsel %vm1244, 1, 0
        %v1277 = vsel %vm1245, 1, 0
        %v1278 = vsel %vm1246, 1, 0
        %v1279 = vsel %vm1247, 1, 0
        %v1280 = vsel %vm1248, 1, 0
        %v1281 = vsel %vm1249, 1, 0
        %v1282 = vsel %vm1250, 1, 0
        %v1283 = vsel %vm1251, 1, 0
        %v1284 = vsel %vm1252, 1, 0
        %v1285 = vsel %vm1253, 1, 0
        %v1286 = vsel %vm1254, 1, 0
        %v1287 = vcvt.s32.f32 %v1255
        %v1288 = vcvt.s32.f32 %v1256
        %v1289 = vcvt.s32.f32 %v1257
        %v1290 = vcvt.s32.f32 %v1258
        %v1291 = vcvt.s32.f32 %v1259
        %v1292 = vcvt.s32.f32 %v1260
        %v1293 = vcvt.s32.f32 %v1261
        %v1294 = vcvt.s32.f32 %v1262
        %v1295 = vcvt.s32.f32 %v1263
        %v1296 = vcvt.s32.f32 %v1264
        %v1297 = vcvt.s32.f32 %v1265
        %v1298 = vcvt.s32.f32 %v1266
        %v1299 = vcvt.s32.f32 %v1267
        %v1300 = vcvt.s32.f32 %v1268
        %v1301 = vcvt.s32.f32 %v1269
        %v1302 = vcvt.s32.f32 %v1270
        %v1303 = vcvt.s32.f32 %v1271
        %v1304 = vcvt.s32.f32 %v1272
        %v1305 = vcvt.s32.f32 %v1273
        %v1306 = vcvt.s32.f32 %v1274
        %v1307 = vcvt.s32.f32 %v1275
        %v1308 = vcvt.s32.f32 %v1276
        %v1309 = vcvt.s32.f32 %v1277
        %v1310 = vcvt.s32.f32 %v1278
        %v1311 = vcvt.s32.f32 %v1279
        %v1312 = vcvt.s32.f32 %v1280
        %v1313 = vcvt.s32.f32 %v1281
        %v1314 = vcvt.s32.f32 %v1282
        %v1315 = vcvt.s32.f32 %v1283
        %v1316 = vcvt.s32.f32 %v1284
        %v1317 = vcvt.s32.f32 %v1285
        %v1318 = vcvt.s32.f32 %v1286
        %v1319 = vld [vmem:[%s442] sm:$0xff]
        %v1320 = vld [vmem:[%s442 + $0x8] sm:$0xff]
        %v1321 = vld [vmem:[%s442 + $0x10] sm:$0xff]
        %v1322 = vld [vmem:[%s442 + $0x18] sm:$0xff]
        %v1323 = vld [vmem:[%s442 + $0x20] sm:$0xff]
        %v1324 = vld [vmem:[%s442 + $0x28] sm:$0xff]
        %v1325 = vld [vmem:[%s442 + $0x30] sm:$0xff]
        %v1326 = vld [vmem:[%s442 + $0x38] sm:$0xff]
        %v1327 = vld [vmem:[%s442 + $0x40] sm:$0xff]
        %v1328 = vld [vmem:[%s442 + $0x48] sm:$0xff]
        %v1329 = vld [vmem:[%s442 + $0x50] sm:$0xff]
        %v1330 = vld [vmem:[%s442 + $0x58] sm:$0xff]
        %v1331 = vld [vmem:[%s442 + $0x60] sm:$0xff]
        %v1332 = vld [vmem:[%s442 + $0x68] sm:$0xff]
        %v1333 = vld [vmem:[%s442 + $0x70] sm:$0xff]
        %v1334 = vld [vmem:[%s442 + $0x78] sm:$0xff]
        %v1335 = vld [vmem:[%s442 + $0x80] sm:$0xff]
        %v1336 = vld [vmem:[%s442 + $0x88] sm:$0xff]
        %v1337 = vld [vmem:[%s442 + $0x90] sm:$0xff]
        %v1338 = vld [vmem:[%s442 + $0x98] sm:$0xff]
        %v1339 = vld [vmem:[%s442 + $0xa0] sm:$0xff]
        %v1340 = vld [vmem:[%s442 + $0xa8] sm:$0xff]
        %v1341 = vld [vmem:[%s442 + $0xb0] sm:$0xff]
        %v1342 = vld [vmem:[%s442 + $0xb8] sm:$0xff]
        %v1343 = vld [vmem:[%s442 + $0xc0] sm:$0xff]
        %v1344 = vld [vmem:[%s442 + $0xc8] sm:$0xff]
        %v1345 = vld [vmem:[%s442 + $0xd0] sm:$0xff]
        %v1346 = vld [vmem:[%s442 + $0xd8] sm:$0xff]
        %v1347 = vld [vmem:[%s442 + $0xe0] sm:$0xff]
        %v1348 = vld [vmem:[%s442 + $0xe8] sm:$0xff]
        %v1349 = vld [vmem:[%s442 + $0xf0] sm:$0xff]
        %v1350 = vld [vmem:[%s442 + $0xf8] sm:$0xff]
        %1351 = vst [vmem:[#allocation2 + $0x10] sm:$0xff] %v1319
        %1352 = vst [vmem:[#allocation2 + $0x18] sm:$0xff] %v1320
        %1353 = vst [vmem:[#allocation2 + $0x20] sm:$0xff] %v1321
        %1354 = vst [vmem:[#allocation2 + $0x28] sm:$0xff] %v1322
        %1355 = vst [vmem:[#allocation2 + $0x30] sm:$0xff] %v1323
        %1356 = vst [vmem:[#allocation2 + $0x38] sm:$0xff] %v1324
        %1357 = vst [vmem:[#allocation2 + $0x40] sm:$0xff] %v1325
        %1358 = vst [vmem:[#allocation2 + $0x48] sm:$0xff] %v1326
        %1359 = vst [vmem:[#allocation2 + $0x50] sm:$0xff] %v1327
        %1360 = vst [vmem:[#allocation2 + $0x58] sm:$0xff] %v1328
        %1361 = vst [vmem:[#allocation2 + $0x60] sm:$0xff] %v1329
        %1362 = vst [vmem:[#allocation2 + $0x68] sm:$0xff] %v1330
        %1363 = vst [vmem:[#allocation2 + $0x70] sm:$0xff] %v1331
        %1364 = vst [vmem:[#allocation2 + $0x78] sm:$0xff] %v1332
        %1365 = vst [vmem:[#allocation2 + $0x80] sm:$0xff] %v1333
        %1366 = vst [vmem:[#allocation2 + $0x88] sm:$0xff] %v1334
        %1367 = vst [vmem:[#allocation2 + $0x90] sm:$0xff] %v1335
        %1368 = vst [vmem:[#allocation2 + $0x98] sm:$0xff] %v1336
        %1369 = vst [vmem:[#allocation2 + $0xa0] sm:$0xff] %v1337
        %1370 = vst [vmem:[#allocation2 + $0xa8] sm:$0xff] %v1338
        %1371 = vst [vmem:[#allocation2 + $0xb0] sm:$0xff] %v1339
        %1372 = vst [vmem:[#allocation2 + $0xb8] sm:$0xff] %v1340
        %1373 = vst [vmem:[#allocation2 + $0xc0] sm:$0xff] %v1341
        %1374 = vst [vmem:[#allocation2 + $0xc8] sm:$0xff] %v1342
        %1375 = vst [vmem:[#allocation2 + $0xd0] sm:$0xff] %v1343
        %1376 = vst [vmem:[#allocation2 + $0xd8] sm:$0xff] %v1344
        %1377 = vst [vmem:[#allocation2 + $0xe0] sm:$0xff] %v1345
        %1378 = vst [vmem:[#allocation2 + $0xe8] sm:$0xff] %v1346
        %1379 = vst [vmem:[#allocation2 + $0xf0] sm:$0xff] %v1347
        %1380 = vst [vmem:[#allocation2 + $0xf8] sm:$0xff] %v1348
        %1381 = vst [vmem:[#allocation2 + $0x100] sm:$0xff] %v1349
        %1382 = vst [vmem:[#allocation2 + $0x108] sm:$0xff] %v1350
        %v1383 = vld [vmem:[#allocation2] sm:$0xff]
        %v1384 = vld [vmem:[#allocation2 + $0x8] sm:$0xff]
        %v1385 = vld [vmem:[#allocation2 + $0x10] sm:$0xff]
        %v1386 = vld [vmem:[#allocation2 + $0x18] sm:$0xff]
        %v1387 = vld [vmem:[#allocation2 + $0x20] sm:$0xff]
        %v1388 = vld [vmem:[#allocation2 + $0x28] sm:$0xff]
        %v1389 = vld [vmem:[#allocation2 + $0x30] sm:$0xff]
        %v1390 = vld [vmem:[#allocation2 + $0x38] sm:$0xff]
        %v1391 = vld [vmem:[#allocation2 + $0x40] sm:$0xff]
        %v1392 = vld [vmem:[#allocation2 + $0x48] sm:$0xff]
        %v1393 = vld [vmem:[#allocation2 + $0x50] sm:$0xff]
        %v1394 = vld [vmem:[#allocation2 + $0x58] sm:$0xff]
        %v1395 = vld [vmem:[#allocation2 + $0x60] sm:$0xff]
        %v1396 = vld [vmem:[#allocation2 + $0x68] sm:$0xff]
        %v1397 = vld [vmem:[#allocation2 + $0x70] sm:$0xff]
        %v1398 = vld [vmem:[#allocation2 + $0x78] sm:$0xff]
        %v1399 = vld [vmem:[#allocation2 + $0x80] sm:$0xff]
        %v1400 = vld [vmem:[#allocation2 + $0x88] sm:$0xff]
        %v1401 = vld [vmem:[#allocation2 + $0x90] sm:$0xff]
        %v1402 = vld [vmem:[#allocation2 + $0x98] sm:$0xff]
        %v1403 = vld [vmem:[#allocation2 + $0xa0] sm:$0xff]
        %v1404 = vld [vmem:[#allocation2 + $0xa8] sm:$0xff]
        %v1405 = vld [vmem:[#allocation2 + $0xb0] sm:$0xff]
        %v1406 = vld [vmem:[#allocation2 + $0xb8] sm:$0xff]
        %v1407 = vld [vmem:[#allocation2 + $0xc0] sm:$0xff]
        %v1408 = vld [vmem:[#allocation2 + $0xc8] sm:$0xff]
        %v1409 = vld [vmem:[#allocation2 + $0xd0] sm:$0xff]
        %v1410 = vld [vmem:[#allocation2 + $0xd8] sm:$0xff]
        %v1411 = vld [vmem:[#allocation2 + $0xe0] sm:$0xff]
        %v1412 = vld [vmem:[#allocation2 + $0xe8] sm:$0xff]
        %v1413 = vld [vmem:[#allocation2 + $0xf0] sm:$0xff]
        %v1414 = vld [vmem:[#allocation2 + $0xf8] sm:$0xff]
        %v1415 = vld [vmem:[#allocation6] sm:$0x1]
        %v1416 = vlaneseq
        %v1417 = vshrl.u32 %v1416, 7
        %v1418 = vsub.s32 0, %v1417
        %v1419 = vrot.slane %v1415, %v1418
        %v1420 = vmul.f32 %v1383, %v1419
        %v1421 = vmul.f32 %v1384, %v1419
        %v1422 = vmul.f32 %v1385, %v1419
        %v1423 = vmul.f32 %v1386, %v1419
        %v1424 = vmul.f32 %v1387, %v1419
        %v1425 = vmul.f32 %v1388, %v1419
        %v1426 = vmul.f32 %v1389, %v1419
        %v1427 = vmul.f32 %v1390, %v1419
        %v1428 = vmul.f32 %v1391, %v1419
        %v1429 = vmul.f32 %v1392, %v1419
        %v1430 = vmul.f32 %v1393, %v1419
        %v1431 = vmul.f32 %v1394, %v1419
        %v1432 = vmul.f32 %v1395, %v1419
        %v1433 = vmul.f32 %v1396, %v1419
        %v1434 = vmul.f32 %v1397, %v1419
        %v1435 = vmul.f32 %v1398, %v1419
        %v1436 = vmul.f32 %v1399, %v1419
        %v1437 = vmul.f32 %v1400, %v1419
        %v1438 = vmul.f32 %v1401, %v1419
        %v1439 = vmul.f32 %v1402, %v1419
        %v1440 = vmul.f32 %v1403, %v1419
        %v1441 = vmul.f32 %v1404, %v1419
        %v1442 = vmul.f32 %v1405, %v1419
        %v1443 = vmul.f32 %v1406, %v1419
        %v1444 = vmul.f32 %v1407, %v1419
        %v1445 = vmul.f32 %v1408, %v1419
        %v1446 = vmul.f32 %v1409, %v1419
        %v1447 = vmul.f32 %v1410, %v1419
        %v1448 = vmul.f32 %v1411, %v1419
        %v1449 = vmul.f32 %v1412, %v1419
        %v1450 = vmul.f32 %v1413, %v1419
        %v1451 = vmul.f32 %v1414, %v1419
        %v1452 = vld [vmem:[#allocation2 + $0x100] sm:$0xff]
        %v1453 = vld [vmem:[#allocation2 + $0x108] sm:$0xff]
        %v1454 = vld [vmem:[#allocation6 + $0x3] sm:$0x1]
        %v1455 = vlaneseq
        %v1456 = vshrl.u32 %v1455, 7
        %v1457 = vsub.s32 0, %v1456
        %v1458 = vrot.slane %v1454, %v1457
        %v1459 = vmul.f32 %v1385, %v1458
        %v1460 = vmul.f32 %v1386, %v1458
        %v1461 = vmul.f32 %v1387, %v1458
        %v1462 = vmul.f32 %v1388, %v1458
        %v1463 = vmul.f32 %v1389, %v1458
        %v1464 = vmul.f32 %v1390, %v1458
        %v1465 = vmul.f32 %v1391, %v1458
        %v1466 = vmul.f32 %v1392, %v1458
        %v1467 = vmul.f32 %v1393, %v1458
        %v1468 = vmul.f32 %v1394, %v1458
        %v1469 = vmul.f32 %v1395, %v1458
        %v1470 = vmul.f32 %v1396, %v1458
        %v1471 = vmul.f32 %v1397, %v1458
        %v1472 = vmul.f32 %v1398, %v1458
        %v1473 = vmul.f32 %v1399, %v1458
        %v1474 = vmul.f32 %v1400, %v1458
        %v1475 = vmul.f32 %v1401, %v1458
        %v1476 = vmul.f32 %v1402, %v1458
        %v1477 = vmul.f32 %v1403, %v1458
        %v1478 = vmul.f32 %v1404, %v1458
        %v1479 = vmul.f32 %v1405, %v1458
        %v1480 = vmul.f32 %v1406, %v1458
        %v1481 = vmul.f32 %v1407, %v1458
        %v1482 = vmul.f32 %v1408, %v1458
        %v1483 = vmul.f32 %v1409, %v1458
        %v1484 = vmul.f32 %v1410, %v1458
        %v1485 = vmul.f32 %v1411, %v1458
        %v1486 = vmul.f32 %v1412, %v1458
        %v1487 = vmul.f32 %v1413, %v1458
        %v1488 = vmul.f32 %v1414, %v1458
        %v1489 = vmul.f32 %v1452, %v1458
        %v1490 = vmul.f32 %v1453, %v1458
        %v1491 = vadd.f32 %v1420, %v1459
        %v1492 = vadd.f32 %v1421, %v1460
        %v1493 = vadd.f32 %v1422, %v1461
        %v1494 = vadd.f32 %v1423, %v1462
        %v1495 = vadd.f32 %v1424, %v1463
        %v1496 = vadd.f32 %v1425, %v1464
        %v1497 = vadd.f32 %v1426, %v1465
        %v1498 = vadd.f32 %v1427, %v1466
        %v1499 = vadd.f32 %v1428, %v1467
        %v1500 = vadd.f32 %v1429, %v1468
        %v1501 = vadd.f32 %v1430, %v1469
        %v1502 = vadd.f32 %v1431, %v1470
        %v1503 = vadd.f32 %v1432, %v1471
        %v1504 = vadd.f32 %v1433, %v1472
        %v1505 = vadd.f32 %v1434, %v1473
        %v1506 = vadd.f32 %v1435, %v1474
        %v1507 = vadd.f32 %v1436, %v1475
        %v1508 = vadd.f32 %v1437, %v1476
        %v1509 = vadd.f32 %v1438, %v1477
        %v1510 = vadd.f32 %v1439, %v1478
        %v1511 = vadd.f32 %v1440, %v1479
        %v1512 = vadd.f32 %v1441, %v1480
        %v1513 = vadd.f32 %v1442, %v1481
        %v1514 = vadd.f32 %v1443, %v1482
        %v1515 = vadd.f32 %v1444, %v1483
        %v1516 = vadd.f32 %v1445, %v1484
        %v1517 = vadd.f32 %v1446, %v1485
        %v1518 = vadd.f32 %v1447, %v1486
        %v1519 = vadd.f32 %v1448, %v1487
        %v1520 = vadd.f32 %v1449, %v1488
        %v1521 = vadd.f32 %v1450, %v1489
        %v1522 = vadd.f32 %v1451, %v1490
        %v1523 = vld [vmem:[#allocation2 + $0x20] sm:$0xff]
        %v1524 = vld [vmem:[#allocation2 + $0x28] sm:$0xff]
        %v1525 = vld [vmem:[#allocation2 + $0x30] sm:$0xff]
        %v1526 = vld [vmem:[#allocation2 + $0x38] sm:$0xff]
        %v1527 = vld [vmem:[#allocation2 + $0x40] sm:$0xff]
        %v1528 = vld [vmem:[#allocation2 + $0x48] sm:$0xff]
        %v1529 = vld [vmem:[#allocation2 + $0x50] sm:$0xff]
        %v1530 = vld [vmem:[#allocation2 + $0x58] sm:$0xff]
        %v1531 = vld [vmem:[#allocation2 + $0x60] sm:$0xff]
        %v1532 = vld [vmem:[#allocation2 + $0x68] sm:$0xff]
        %v1533 = vld [vmem:[#allocation2 + $0x70] sm:$0xff]
        %v1534 = vld [vmem:[#allocation2 + $0x78] sm:$0xff]
        %v1535 = vld [vmem:[#allocation2 + $0x80] sm:$0xff]
        %v1536 = vld [vmem:[#allocation2 + $0x88] sm:$0xff]
        %v1537 = vld [vmem:[#allocation2 + $0x90] sm:$0xff]
        %v1538 = vld [vmem:[#allocation2 + $0x98] sm:$0xff]
        %v1539 = vld [vmem:[#allocation2 + $0xa0] sm:$0xff]
        %v1540 = vld [vmem:[#allocation2 + $0xa8] sm:$0xff]
        %v1541 = vld [vmem:[#allocation2 + $0xb0] sm:$0xff]
        %v1542 = vld [vmem:[#allocation2 + $0xb8] sm:$0xff]
        %v1543 = vld [vmem:[#allocation2 + $0xc0] sm:$0xff]
        %v1544 = vld [vmem:[#allocation2 + $0xc8] sm:$0xff]
        %v1545 = vld [vmem:[#allocation2 + $0xd0] sm:$0xff]
        %v1546 = vld [vmem:[#allocation2 + $0xd8] sm:$0xff]
        %v1547 = vld [vmem:[#allocation2 + $0xe0] sm:$0xff]
        %v1548 = vld [vmem:[#allocation2 + $0xe8] sm:$0xff]
        %v1549 = vld [vmem:[#allocation2 + $0xf0] sm:$0xff]
        %v1550 = vld [vmem:[#allocation2 + $0xf8] sm:$0xff]
        %v1551 = vld [vmem:[#allocation2 + $0x100] sm:$0xff]
        %v1552 = vld [vmem:[#allocation2 + $0x108] sm:$0xff]
        %v1553 = vld [vmem:[#allocation2 + $0x110] sm:$0xff]
        %v1554 = vld [vmem:[#allocation2 + $0x118] sm:$0xff]
        %v1555 = vld [vmem:[#allocation6 + $0x6] sm:$0x1]
        %v1556 = vlaneseq
        %v1557 = vshrl.u32 %v1556, 7
        %v1558 = vsub.s32 0, %v1557
        %v1559 = vrot.slane %v1555, %v1558
        %v1560 = vmul.f32 %v1523, %v1559
        %v1561 = vmul.f32 %v1524, %v1559
        %v1562 = vmul.f32 %v1525, %v1559
        %v1563 = vmul.f32 %v1526, %v1559
        %v1564 = vmul.f32 %v1527, %v1559
        %v1565 = vmul.f32 %v1528, %v1559
        %v1566 = vmul.f32 %v1529, %v1559
        %v1567 = vmul.f32 %v1530, %v1559
        %v1568 = vmul.f32 %v1531, %v1559
        %v1569 = vmul.f32 %v1532, %v1559
        %v1570 = vmul.f32 %v1533, %v1559
        %v1571 = vmul.f32 %v1534, %v1559
        %v1572 = vmul.f32 %v1535, %v1559
        %v1573 = vmul.f32 %v1536, %v1559
        %v1574 = vmul.f32 %v1537, %v1559
        %v1575 = vmul.f32 %v1538, %v1559
        %v1576 = vmul.f32 %v1539, %v1559
        %v1577 = vmul.f32 %v1540, %v1559
        %v1578 = vmul.f32 %v1541, %v1559
        %v1579 = vmul.f32 %v1542, %v1559
        %v1580 = vmul.f32 %v1543, %v1559
        %v1581 = vmul.f32 %v1544, %v1559
        %v1582 = vmul.f32 %v1545, %v1559
        %v1583 = vmul.f32 %v1546, %v1559
        %v1584 = vmul.f32 %v1547, %v1559
        %v1585 = vmul.f32 %v1548, %v1559
        %v1586 = vmul.f32 %v1549, %v1559
        %v1587 = vmul.f32 %v1550, %v1559
        %v1588 = vmul.f32 %v1551, %v1559
        %v1589 = vmul.f32 %v1552, %v1559
        %v1590 = vmul.f32 %v1553, %v1559
        %v1591 = vmul.f32 %v1554, %v1559
        %v1592 = vadd.f32 %v1491, %v1560
        %v1593 = vadd.f32 %v1492, %v1561
        %v1594 = vadd.f32 %v1493, %v1562
        %v1595 = vadd.f32 %v1494, %v1563
        %v1596 = vadd.f32 %v1495, %v1564
        %v1597 = vadd.f32 %v1496, %v1565
        %v1598 = vadd.f32 %v1497, %v1566
        %v1599 = vadd.f32 %v1498, %v1567
        %v1600 = vadd.f32 %v1499, %v1568
        %v1601 = vadd.f32 %v1500, %v1569
        %v1602 = vadd.f32 %v1501, %v1570
        %v1603 = vadd.f32 %v1502, %v1571
        %v1604 = vadd.f32 %v1503, %v1572
        %v1605 = vadd.f32 %v1504, %v1573
        %v1606 = vadd.f32 %v1505, %v1574
        %v1607 = vadd.f32 %v1506, %v1575
        %v1608 = vadd.f32 %v1507, %v1576
        %v1609 = vadd.f32 %v1508, %v1577
        %v1610 = vadd.f32 %v1509, %v1578
        %v1611 = vadd.f32 %v1510, %v1579
        %v1612 = vadd.f32 %v1511, %v1580
        %v1613 = vadd.f32 %v1512, %v1581
        %v1614 = vadd.f32 %v1513, %v1582
        %v1615 = vadd.f32 %v1514, %v1583
        %v1616 = vadd.f32 %v1515, %v1584
        %v1617 = vadd.f32 %v1516, %v1585
        %v1618 = vadd.f32 %v1517, %v1586
        %v1619 = vadd.f32 %v1518, %v1587
        %v1620 = vadd.f32 %v1519, %v1588
        %v1621 = vadd.f32 %v1520, %v1589
        %v1622 = vadd.f32 %v1521, %v1590
        %v1623 = vadd.f32 %v1522, %v1591
        %v1624 = vrot.slane %v1592, 7
        %v1625 = vrot.slane %v1593, 7
        %v1626 = vrot.slane %v1594, 7
        %v1627 = vrot.slane %v1595, 7
        %v1628 = vrot.slane %v1596, 7
        %v1629 = vrot.slane %v1597, 7
        %v1630 = vrot.slane %v1598, 7
        %v1631 = vrot.slane %v1599, 7
        %v1632 = vrot.slane %v1600, 7
        %v1633 = vrot.slane %v1601, 7
        %v1634 = vrot.slane %v1602, 7
        %v1635 = vrot.slane %v1603, 7
        %v1636 = vrot.slane %v1604, 7
        %v1637 = vrot.slane %v1605, 7
        %v1638 = vrot.slane %v1606, 7
        %v1639 = vrot.slane %v1607, 7
        %v1640 = vrot.slane %v1608, 7
        %v1641 = vrot.slane %v1609, 7
        %v1642 = vrot.slane %v1610, 7
        %v1643 = vrot.slane %v1611, 7
        %v1644 = vrot.slane %v1612, 7
        %v1645 = vrot.slane %v1613, 7
        %v1646 = vrot.slane %v1614, 7
        %v1647 = vrot.slane %v1615, 7
        %v1648 = vrot.slane %v1616, 7
        %v1649 = vrot.slane %v1617, 7
        %v1650 = vrot.slane %v1618, 7
        %v1651 = vrot.slane %v1619, 7
        %v1652 = vrot.slane %v1620, 7
        %v1653 = vrot.slane %v1621, 7
        %v1654 = vrot.slane %v1622, 7
        %v1655 = vrot.slane %v1623, 7
        %vm1656 = vcmp.lt.s32.totalorder %v519, 1
        %v1657 = vsel %vm1656, %v1654, %v1655
        %v1658 = vsel %vm1656, %v1653, %v1654
        %v1659 = vsel %vm1656, %v1652, %v1653
        %v1660 = vsel %vm1656, %v1651, %v1652
        %v1661 = vsel %vm1656, %v1650, %v1651
        %v1662 = vsel %vm1656, %v1649, %v1650
        %v1663 = vsel %vm1656, %v1648, %v1649
        %v1664 = vsel %vm1656, %v1647, %v1648
        %v1665 = vsel %vm1656, %v1646, %v1647
        %v1666 = vsel %vm1656, %v1645, %v1646
        %v1667 = vsel %vm1656, %v1644, %v1645
        %v1668 = vsel %vm1656, %v1643, %v1644
        %v1669 = vsel %vm1656, %v1642, %v1643
        %v1670 = vsel %vm1656, %v1641, %v1642
        %v1671 = vsel %vm1656, %v1640, %v1641
        %v1672 = vsel %vm1656, %v1639, %v1640
        %v1673 = vsel %vm1656, %v1638, %v1639
        %v1674 = vsel %vm1656, %v1637, %v1638
        %v1675 = vsel %vm1656, %v1636, %v1637
        %v1676 = vsel %vm1656, %v1635, %v1636
        %v1677 = vsel %vm1656, %v1634, %v1635
        %v1678 = vsel %vm1656, %v1633, %v1634
        %v1679 = vsel %vm1656, %v1632, %v1633
        %v1680 = vsel %vm1656, %v1631, %v1632
        %v1681 = vsel %vm1656, %v1630, %v1631
        %v1682 = vsel %vm1656, %v1629, %v1630
        %v1683 = vsel %vm1656, %v1628, %v1629
        %v1684 = vsel %vm1656, %v1627, %v1628
        %v1685 = vsel %vm1656, %v1626, %v1627
        %v1686 = vsel %vm1656, %v1625, %v1626
        %v1687 = vsel %vm1656, %v1624, %v1625
        %v1688 = vsel %vm1656, %v1655, %v1624
        %v1689 = vmul.f32 %v1688, %v1095
        %v1690 = vmul.f32 %v1687, %v1096
        %v1691 = vmul.f32 %v1686, %v1097
        %v1692 = vmul.f32 %v1685, %v1098
        %v1693 = vmul.f32 %v1684, %v1099
        %v1694 = vmul.f32 %v1683, %v1100
        %v1695 = vmul.f32 %v1682, %v1101
        %v1696 = vmul.f32 %v1681, %v1102
        %v1697 = vmul.f32 %v1680, %v1103
        %v1698 = vmul.f32 %v1679, %v1104
        %v1699 = vmul.f32 %v1678, %v1105
        %v1700 = vmul.f32 %v1677, %v1106
        %v1701 = vmul.f32 %v1676, %v1107
        %v1702 = vmul.f32 %v1675, %v1108
        %v1703 = vmul.f32 %v1674, %v1109
        %v1704 = vmul.f32 %v1673, %v1110
        %v1705 = vmul.f32 %v1672, %v1111
        %v1706 = vmul.f32 %v1671, %v1112
        %v1707 = vmul.f32 %v1670, %v1113
        %v1708 = vmul.f32 %v1669, %v1114
        %v1709 = vmul.f32 %v1668, %v1115
        %v1710 = vmul.f32 %v1667, %v1116
        %v1711 = vmul.f32 %v1666, %v1117
        %v1712 = vmul.f32 %v1665, %v1118
        %v1713 = vmul.f32 %v1664, %v1119
        %v1714 = vmul.f32 %v1663, %v1120
        %v1715 = vmul.f32 %v1662, %v1121
        %v1716 = vmul.f32 %v1661, %v1122
        %v1717 = vmul.f32 %v1660, %v1123
        %v1718 = vmul.f32 %v1659, %v1124
        %v1719 = vmul.f32 %v1658, %v1125
        %v1720 = vmul.f32 %v1657, %v1126
        %v1721 = vld [vmem:[#allocation6 + $0x1] sm:$0x1]
        %v1722 = vlaneseq
        %v1723 = vshrl.u32 %v1722, 7
        %v1724 = vsub.s32 0, %v1723
        %v1725 = vrot.slane %v1721, %v1724
        %v1726 = vmul.f32 %v1383, %v1725
        %v1727 = vmul.f32 %v1384, %v1725
        %v1728 = vmul.f32 %v1385, %v1725
        %v1729 = vmul.f32 %v1386, %v1725
        %v1730 = vmul.f32 %v1387, %v1725
        %v1731 = vmul.f32 %v1388, %v1725
        %v1732 = vmul.f32 %v1389, %v1725
        %v1733 = vmul.f32 %v1390, %v1725
        %v1734 = vmul.f32 %v1391, %v1725
        %v1735 = vmul.f32 %v1392, %v1725
        %v1736 = vmul.f32 %v1393, %v1725
        %v1737 = vmul.f32 %v1394, %v1725
        %v1738 = vmul.f32 %v1395, %v1725
        %v1739 = vmul.f32 %v1396, %v1725
        %v1740 = vmul.f32 %v1397, %v1725
        %v1741 = vmul.f32 %v1398, %v1725
        %v1742 = vmul.f32 %v1399, %v1725
        %v1743 = vmul.f32 %v1400, %v1725
        %v1744 = vmul.f32 %v1401, %v1725
        %v1745 = vmul.f32 %v1402, %v1725
        %v1746 = vmul.f32 %v1403, %v1725
        %v1747 = vmul.f32 %v1404, %v1725
        %v1748 = vmul.f32 %v1405, %v1725
        %v1749 = vmul.f32 %v1406, %v1725
        %v1750 = vmul.f32 %v1407, %v1725
        %v1751 = vmul.f32 %v1408, %v1725
        %v1752 = vmul.f32 %v1409, %v1725
        %v1753 = vmul.f32 %v1410, %v1725
        %v1754 = vmul.f32 %v1411, %v1725
        %v1755 = vmul.f32 %v1412, %v1725
        %v1756 = vmul.f32 %v1413, %v1725
        %v1757 = vmul.f32 %v1414, %v1725
        %v1758 = vld [vmem:[#allocation6 + $0x4] sm:$0x1]
        %v1759 = vlaneseq
        %v1760 = vshrl.u32 %v1759, 7
        %v1761 = vsub.s32 0, %v1760
        %v1762 = vrot.slane %v1758, %v1761
        %v1763 = vmul.f32 %v1385, %v1762
        %v1764 = vmul.f32 %v1386, %v1762
        %v1765 = vmul.f32 %v1387, %v1762
        %v1766 = vmul.f32 %v1388, %v1762
        %v1767 = vmul.f32 %v1389, %v1762
        %v1768 = vmul.f32 %v1390, %v1762
        %v1769 = vmul.f32 %v1391, %v1762
        %v1770 = vmul.f32 %v1392, %v1762
        %v1771 = vmul.f32 %v1393, %v1762
        %v1772 = vmul.f32 %v1394, %v1762
        %v1773 = vmul.f32 %v1395, %v1762
        %v1774 = vmul.f32 %v1396, %v1762
        %v1775 = vmul.f32 %v1397, %v1762
        %v1776 = vmul.f32 %v1398, %v1762
        %v1777 = vmul.f32 %v1399, %v1762
        %v1778 = vmul.f32 %v1400, %v1762
        %v1779 = vmul.f32 %v1401, %v1762
        %v1780 = vmul.f32 %v1402, %v1762
        %v1781 = vmul.f32 %v1403, %v1762
        %v1782 = vmul.f32 %v1404, %v1762
        %v1783 = vmul.f32 %v1405, %v1762
        %v1784 = vmul.f32 %v1406, %v1762
        %v1785 = vmul.f32 %v1407, %v1762
        %v1786 = vmul.f32 %v1408, %v1762
        %v1787 = vmul.f32 %v1409, %v1762
        %v1788 = vmul.f32 %v1410, %v1762
        %v1789 = vmul.f32 %v1411, %v1762
        %v1790 = vmul.f32 %v1412, %v1762
        %v1791 = vmul.f32 %v1413, %v1762
        %v1792 = vmul.f32 %v1414, %v1762
        %v1793 = vmul.f32 %v1452, %v1762
        %v1794 = vmul.f32 %v1453, %v1762
        %v1795 = vadd.f32 %v1726, %v1763
        %v1796 = vadd.f32 %v1727, %v1764
        %v1797 = vadd.f32 %v1728, %v1765
        %v1798 = vadd.f32 %v1729, %v1766
        %v1799 = vadd.f32 %v1730, %v1767
        %v1800 = vadd.f32 %v1731, %v1768
        %v1801 = vadd.f32 %v1732, %v1769
        %v1802 = vadd.f32 %v1733, %v1770
        %v1803 = vadd.f32 %v1734, %v1771
        %v1804 = vadd.f32 %v1735, %v1772
        %v1805 = vadd.f32 %v1736, %v1773
        %v1806 = vadd.f32 %v1737, %v1774
        %v1807 = vadd.f32 %v1738, %v1775
        %v1808 = vadd.f32 %v1739, %v1776
        %v1809 = vadd.f32 %v1740, %v1777
        %v1810 = vadd.f32 %v1741, %v1778
        %v1811 = vadd.f32 %v1742, %v1779
        %v1812 = vadd.f32 %v1743, %v1780
        %v1813 = vadd.f32 %v1744, %v1781
        %v1814 = vadd.f32 %v1745, %v1782
        %v1815 = vadd.f32 %v1746, %v1783
        %v1816 = vadd.f32 %v1747, %v1784
        %v1817 = vadd.f32 %v1748, %v1785
        %v1818 = vadd.f32 %v1749, %v1786
        %v1819 = vadd.f32 %v1750, %v1787
        %v1820 = vadd.f32 %v1751, %v1788
        %v1821 = vadd.f32 %v1752, %v1789
        %v1822 = vadd.f32 %v1753, %v1790
        %v1823 = vadd.f32 %v1754, %v1791
        %v1824 = vadd.f32 %v1755, %v1792
        %v1825 = vadd.f32 %v1756, %v1793
        %v1826 = vadd.f32 %v1757, %v1794
        %v1827 = vld [vmem:[#allocation6 + $0x7] sm:$0x1]
        %v1828 = vlaneseq
        %v1829 = vshrl.u32 %v1828, 7
        %v1830 = vsub.s32 0, %v1829
        %v1831 = vrot.slane %v1827, %v1830
        %v1832 = vmul.f32 %v1523, %v1831
        %v1833 = vmul.f32 %v1524, %v1831
        %v1834 = vmul.f32 %v1525, %v1831
        %v1835 = vmul.f32 %v1526, %v1831
        %v1836 = vmul.f32 %v1527, %v1831
        %v1837 = vmul.f32 %v1528, %v1831
        %v1838 = vmul.f32 %v1529, %v1831
        %v1839 = vmul.f32 %v1530, %v1831
        %v1840 = vmul.f32 %v1531, %v1831
        %v1841 = vmul.f32 %v1532, %v1831
        %v1842 = vmul.f32 %v1533, %v1831
        %v1843 = vmul.f32 %v1534, %v1831
        %v1844 = vmul.f32 %v1535, %v1831
        %v1845 = vmul.f32 %v1536, %v1831
        %v1846 = vmul.f32 %v1537, %v1831
        %v1847 = vmul.f32 %v1538, %v1831
        %v1848 = vmul.f32 %v1539, %v1831
        %v1849 = vmul.f32 %v1540, %v1831
        %v1850 = vmul.f32 %v1541, %v1831
        %v1851 = vmul.f32 %v1542, %v1831
        %v1852 = vmul.f32 %v1543, %v1831
        %v1853 = vmul.f32 %v1544, %v1831
        %v1854 = vmul.f32 %v1545, %v1831
        %v1855 = vmul.f32 %v1546, %v1831
        %v1856 = vmul.f32 %v1547, %v1831
        %v1857 = vmul.f32 %v1548, %v1831
        %v1858 = vmul.f32 %v1549, %v1831
        %v1859 = vmul.f32 %v1550, %v1831
        %v1860 = vmul.f32 %v1551, %v1831
        %v1861 = vmul.f32 %v1552, %v1831
        %v1862 = vmul.f32 %v1553, %v1831
        %v1863 = vmul.f32 %v1554, %v1831
        %v1864 = vadd.f32 %v1795, %v1832
        %v1865 = vadd.f32 %v1796, %v1833
        %v1866 = vadd.f32 %v1797, %v1834
        %v1867 = vadd.f32 %v1798, %v1835
        %v1868 = vadd.f32 %v1799, %v1836
        %v1869 = vadd.f32 %v1800, %v1837
        %v1870 = vadd.f32 %v1801, %v1838
        %v1871 = vadd.f32 %v1802, %v1839
        %v1872 = vadd.f32 %v1803, %v1840
        %v1873 = vadd.f32 %v1804, %v1841
        %v1874 = vadd.f32 %v1805, %v1842
        %v1875 = vadd.f32 %v1806, %v1843
        %v1876 = vadd.f32 %v1807, %v1844
        %v1877 = vadd.f32 %v1808, %v1845
        %v1878 = vadd.f32 %v1809, %v1846
        %v1879 = vadd.f32 %v1810, %v1847
        %v1880 = vadd.f32 %v1811, %v1848
        %v1881 = vadd.f32 %v1812, %v1849
        %v1882 = vadd.f32 %v1813, %v1850
        %v1883 = vadd.f32 %v1814, %v1851
        %v1884 = vadd.f32 %v1815, %v1852
        %v1885 = vadd.f32 %v1816, %v1853
        %v1886 = vadd.f32 %v1817, %v1854
        %v1887 = vadd.f32 %v1818, %v1855
        %v1888 = vadd.f32 %v1819, %v1856
        %v1889 = vadd.f32 %v1820, %v1857
        %v1890 = vadd.f32 %v1821, %v1858
        %v1891 = vadd.f32 %v1822, %v1859
        %v1892 = vadd.f32 %v1823, %v1860
        %v1893 = vadd.f32 %v1824, %v1861
        %v1894 = vadd.f32 %v1825, %v1862
        %v1895 = vadd.f32 %v1826, %v1863
        %v1896 = vadd.f32 %v1689, %v1864
        %v1897 = vadd.f32 %v1690, %v1865
        %v1898 = vadd.f32 %v1691, %v1866
        %v1899 = vadd.f32 %v1692, %v1867
        %v1900 = vadd.f32 %v1693, %v1868
        %v1901 = vadd.f32 %v1694, %v1869
        %v1902 = vadd.f32 %v1695, %v1870
        %v1903 = vadd.f32 %v1696, %v1871
        %v1904 = vadd.f32 %v1697, %v1872
        %v1905 = vadd.f32 %v1698, %v1873
        %v1906 = vadd.f32 %v1699, %v1874
        %v1907 = vadd.f32 %v1700, %v1875
        %v1908 = vadd.f32 %v1701, %v1876
        %v1909 = vadd.f32 %v1702, %v1877
        %v1910 = vadd.f32 %v1703, %v1878
        %v1911 = vadd.f32 %v1704, %v1879
        %v1912 = vadd.f32 %v1705, %v1880
        %v1913 = vadd.f32 %v1706, %v1881
        %v1914 = vadd.f32 %v1707, %v1882
        %v1915 = vadd.f32 %v1708, %v1883
        %v1916 = vadd.f32 %v1709, %v1884
        %v1917 = vadd.f32 %v1710, %v1885
        %v1918 = vadd.f32 %v1711, %v1886
        %v1919 = vadd.f32 %v1712, %v1887
        %v1920 = vadd.f32 %v1713, %v1888
        %v1921 = vadd.f32 %v1714, %v1889
        %v1922 = vadd.f32 %v1715, %v1890
        %v1923 = vadd.f32 %v1716, %v1891
        %v1924 = vadd.f32 %v1717, %v1892
        %v1925 = vadd.f32 %v1718, %v1893
        %v1926 = vadd.f32 %v1719, %v1894
        %v1927 = vadd.f32 %v1720, %v1895
        %v1928 = vld [vmem:[#allocation6 + $0x2] sm:$0x1]
        %v1929 = vlaneseq
        %v1930 = vshrl.u32 %v1929, 7
        %v1931 = vsub.s32 0, %v1930
        %v1932 = vrot.slane %v1928, %v1931
        %v1933 = vmul.f32 %v1383, %v1932
        %v1934 = vmul.f32 %v1384, %v1932
        %v1935 = vmul.f32 %v1385, %v1932
        %v1936 = vmul.f32 %v1386, %v1932
        %v1937 = vmul.f32 %v1387, %v1932
        %v1938 = vmul.f32 %v1388, %v1932
        %v1939 = vmul.f32 %v1389, %v1932
        %v1940 = vmul.f32 %v1390, %v1932
        %v1941 = vmul.f32 %v1391, %v1932
        %v1942 = vmul.f32 %v1392, %v1932
        %v1943 = vmul.f32 %v1393, %v1932
        %v1944 = vmul.f32 %v1394, %v1932
        %v1945 = vmul.f32 %v1395, %v1932
        %v1946 = vmul.f32 %v1396, %v1932
        %v1947 = vmul.f32 %v1397, %v1932
        %v1948 = vmul.f32 %v1398, %v1932
        %v1949 = vmul.f32 %v1399, %v1932
        %v1950 = vmul.f32 %v1400, %v1932
        %v1951 = vmul.f32 %v1401, %v1932
        %v1952 = vmul.f32 %v1402, %v1932
        %v1953 = vmul.f32 %v1403, %v1932
        %v1954 = vmul.f32 %v1404, %v1932
        %v1955 = vmul.f32 %v1405, %v1932
        %v1956 = vmul.f32 %v1406, %v1932
        %v1957 = vmul.f32 %v1407, %v1932
        %v1958 = vmul.f32 %v1408, %v1932
        %v1959 = vmul.f32 %v1409, %v1932
        %v1960 = vmul.f32 %v1410, %v1932
        %v1961 = vmul.f32 %v1411, %v1932
        %v1962 = vmul.f32 %v1412, %v1932
        %v1963 = vmul.f32 %v1413, %v1932
        %v1964 = vmul.f32 %v1414, %v1932
        %v1965 = vld [vmem:[#allocation6 + $0x5] sm:$0x1]
        %v1966 = vlaneseq
        %v1967 = vshrl.u32 %v1966, 7
        %v1968 = vsub.s32 0, %v1967
        %v1969 = vrot.slane %v1965, %v1968
        %v1970 = vmul.f32 %v1385, %v1969
        %v1971 = vmul.f32 %v1386, %v1969
        %v1972 = vmul.f32 %v1387, %v1969
        %v1973 = vmul.f32 %v1388, %v1969
        %v1974 = vmul.f32 %v1389, %v1969
        %v1975 = vmul.f32 %v1390, %v1969
        %v1976 = vmul.f32 %v1391, %v1969
        %v1977 = vmul.f32 %v1392, %v1969
        %v1978 = vmul.f32 %v1393, %v1969
        %v1979 = vmul.f32 %v1394, %v1969
        %v1980 = vmul.f32 %v1395, %v1969
        %v1981 = vmul.f32 %v1396, %v1969
        %v1982 = vmul.f32 %v1397, %v1969
        %v1983 = vmul.f32 %v1398, %v1969
        %v1984 = vmul.f32 %v1399, %v1969
        %v1985 = vmul.f32 %v1400, %v1969
        %v1986 = vmul.f32 %v1401, %v1969
        %v1987 = vmul.f32 %v1402, %v1969
        %v1988 = vmul.f32 %v1403, %v1969
        %v1989 = vmul.f32 %v1404, %v1969
        %v1990 = vmul.f32 %v1405, %v1969
        %v1991 = vmul.f32 %v1406, %v1969
        %v1992 = vmul.f32 %v1407, %v1969
        %v1993 = vmul.f32 %v1408, %v1969
        %v1994 = vmul.f32 %v1409, %v1969
        %v1995 = vmul.f32 %v1410, %v1969
        %v1996 = vmul.f32 %v1411, %v1969
        %v1997 = vmul.f32 %v1412, %v1969
        %v1998 = vmul.f32 %v1413, %v1969
        %v1999 = vmul.f32 %v1414, %v1969
        %v2000 = vmul.f32 %v1452, %v1969
        %v2001 = vmul.f32 %v1453, %v1969
        %v2002 = vadd.f32 %v1933, %v1970
        %v2003 = vadd.f32 %v1934, %v1971
        %v2004 = vadd.f32 %v1935, %v1972
        %v2005 = vadd.f32 %v1936, %v1973
        %v2006 = vadd.f32 %v1937, %v1974
        %v2007 = vadd.f32 %v1938, %v1975
        %v2008 = vadd.f32 %v1939, %v1976
        %v2009 = vadd.f32 %v1940, %v1977
        %v2010 = vadd.f32 %v1941, %v1978
        %v2011 = vadd.f32 %v1942, %v1979
        %v2012 = vadd.f32 %v1943, %v1980
        %v2013 = vadd.f32 %v1944, %v1981
        %v2014 = vadd.f32 %v1945, %v1982
        %v2015 = vadd.f32 %v1946, %v1983
        %v2016 = vadd.f32 %v1947, %v1984
        %v2017 = vadd.f32 %v1948, %v1985
        %v2018 = vadd.f32 %v1949, %v1986
        %v2019 = vadd.f32 %v1950, %v1987
        %v2020 = vadd.f32 %v1951, %v1988
        %v2021 = vadd.f32 %v1952, %v1989
        %v2022 = vadd.f32 %v1953, %v1990
        %v2023 = vadd.f32 %v1954, %v1991
        %v2024 = vadd.f32 %v1955, %v1992
        %v2025 = vadd.f32 %v1956, %v1993
        %v2026 = vadd.f32 %v1957, %v1994
        %v2027 = vadd.f32 %v1958, %v1995
        %v2028 = vadd.f32 %v1959, %v1996
        %v2029 = vadd.f32 %v1960, %v1997
        %v2030 = vadd.f32 %v1961, %v1998
        %v2031 = vadd.f32 %v1962, %v1999
        %v2032 = vadd.f32 %v1963, %v2000
        %v2033 = vadd.f32 %v1964, %v2001
        %v2034 = vld [vmem:[#allocation6 + $0x8] sm:$0x1]
        %v2035 = vlaneseq
        %v2036 = vshrl.u32 %v2035, 7
        %v2037 = vsub.s32 0, %v2036
        %v2038 = vrot.slane %v2034, %v2037
        %v2039 = vmul.f32 %v1523, %v2038
        %v2040 = vmul.f32 %v1524, %v2038
        %v2041 = vmul.f32 %v1525, %v2038
        %v2042 = vmul.f32 %v1526, %v2038
        %v2043 = vmul.f32 %v1527, %v2038
        %v2044 = vmul.f32 %v1528, %v2038
        %v2045 = vmul.f32 %v1529, %v2038
        %v2046 = vmul.f32 %v1530, %v2038
        %v2047 = vmul.f32 %v1531, %v2038
        %v2048 = vmul.f32 %v1532, %v2038
        %v2049 = vmul.f32 %v1533, %v2038
        %v2050 = vmul.f32 %v1534, %v2038
        %v2051 = vmul.f32 %v1535, %v2038
        %v2052 = vmul.f32 %v1536, %v2038
        %v2053 = vmul.f32 %v1537, %v2038
        %v2054 = vmul.f32 %v1538, %v2038
        %v2055 = vmul.f32 %v1539, %v2038
        %v2056 = vmul.f32 %v1540, %v2038
        %v2057 = vmul.f32 %v1541, %v2038
        %v2058 = vmul.f32 %v1542, %v2038
        %v2059 = vmul.f32 %v1543, %v2038
        %v2060 = vmul.f32 %v1544, %v2038
        %v2061 = vmul.f32 %v1545, %v2038
        %v2062 = vmul.f32 %v1546, %v2038
        %v2063 = vmul.f32 %v1547, %v2038
        %v2064 = vmul.f32 %v1548, %v2038
        %v2065 = vmul.f32 %v1549, %v2038
        %v2066 = vmul.f32 %v1550, %v2038
        %v2067 = vmul.f32 %v1551, %v2038
        %v2068 = vmul.f32 %v1552, %v2038
        %v2069 = vmul.f32 %v1553, %v2038
        %v2070 = vmul.f32 %v1554, %v2038
        %v2071 = vadd.f32 %v2002, %v2039
        %v2072 = vadd.f32 %v2003, %v2040
        %v2073 = vadd.f32 %v2004, %v2041
        %v2074 = vadd.f32 %v2005, %v2042
        %v2075 = vadd.f32 %v2006, %v2043
        %v2076 = vadd.f32 %v2007, %v2044
        %v2077 = vadd.f32 %v2008, %v2045
        %v2078 = vadd.f32 %v2009, %v2046
        %v2079 = vadd.f32 %v2010, %v2047
        %v2080 = vadd.f32 %v2011, %v2048
        %v2081 = vadd.f32 %v2012, %v2049
        %v2082 = vadd.f32 %v2013, %v2050
        %v2083 = vadd.f32 %v2014, %v2051
        %v2084 = vadd.f32 %v2015, %v2052
        %v2085 = vadd.f32 %v2016, %v2053
        %v2086 = vadd.f32 %v2017, %v2054
        %v2087 = vadd.f32 %v2018, %v2055
        %v2088 = vadd.f32 %v2019, %v2056
        %v2089 = vadd.f32 %v2020, %v2057
        %v2090 = vadd.f32 %v2021, %v2058
        %v2091 = vadd.f32 %v2022, %v2059
        %v2092 = vadd.f32 %v2023, %v2060
        %v2093 = vadd.f32 %v2024, %v2061
        %v2094 = vadd.f32 %v2025, %v2062
        %v2095 = vadd.f32 %v2026, %v2063
        %v2096 = vadd.f32 %v2027, %v2064
        %v2097 = vadd.f32 %v2028, %v2065
        %v2098 = vadd.f32 %v2029, %v2066
        %v2099 = vadd.f32 %v2030, %v2067
        %v2100 = vadd.f32 %v2031, %v2068
        %v2101 = vadd.f32 %v2032, %v2069
        %v2102 = vadd.f32 %v2033, %v2070
        %v2103 = vrot.slane %v2071, 1
        %v2104 = vrot.slane %v2072, 1
        %v2105 = vrot.slane %v2073, 1
        %v2106 = vrot.slane %v2074, 1
        %v2107 = vrot.slane %v2075, 1
        %v2108 = vrot.slane %v2076, 1
        %v2109 = vrot.slane %v2077, 1
        %v2110 = vrot.slane %v2078, 1
        %v2111 = vrot.slane %v2079, 1
        %v2112 = vrot.slane %v2080, 1
        %v2113 = vrot.slane %v2081, 1
        %v2114 = vrot.slane %v2082, 1
        %v2115 = vrot.slane %v2083, 1
        %v2116 = vrot.slane %v2084, 1
        %v2117 = vrot.slane %v2085, 1
        %v2118 = vrot.slane %v2086, 1
        %v2119 = vrot.slane %v2087, 1
        %v2120 = vrot.slane %v2088, 1
        %v2121 = vrot.slane %v2089, 1
        %v2122 = vrot.slane %v2090, 1
        %v2123 = vrot.slane %v2091, 1
        %v2124 = vrot.slane %v2092, 1
        %v2125 = vrot.slane %v2093, 1
        %v2126 = vrot.slane %v2094, 1
        %v2127 = vrot.slane %v2095, 1
        %v2128 = vrot.slane %v2096, 1
        %v2129 = vrot.slane %v2097, 1
        %v2130 = vrot.slane %v2098, 1
        %v2131 = vrot.slane %v2099, 1
        %v2132 = vrot.slane %v2100, 1
        %v2133 = vrot.slane %v2101, 1
        %v2134 = vrot.slane %v2102, 1
        %vm2135 = vcmp.lt.s32.totalorder %v519, 7
        %v2136 = vsel %vm2135, %v2133, %v2134
        %v2137 = vsel %vm2135, %v2132, %v2133
        %v2138 = vsel %vm2135, %v2131, %v2132
        %v2139 = vsel %vm2135, %v2130, %v2131
        %v2140 = vsel %vm2135, %v2129, %v2130
        %v2141 = vsel %vm2135, %v2128, %v2129
        %v2142 = vsel %vm2135, %v2127, %v2128
        %v2143 = vsel %vm2135, %v2126, %v2127
        %v2144 = vsel %vm2135, %v2125, %v2126
        %v2145 = vsel %vm2135, %v2124, %v2125
        %v2146 = vsel %vm2135, %v2123, %v2124
        %v2147 = vsel %vm2135, %v2122, %v2123
        %v2148 = vsel %vm2135, %v2121, %v2122
        %v2149 = vsel %vm2135, %v2120, %v2121
        %v2150 = vsel %vm2135, %v2119, %v2120
        %v2151 = vsel %vm2135, %v2118, %v2119
        %v2152 = vsel %vm2135, %v2117, %v2118
        %v2153 = vsel %vm2135, %v2116, %v2117
        %v2154 = vsel %vm2135, %v2115, %v2116
        %v2155 = vsel %vm2135, %v2114, %v2115
        %v2156 = vsel %vm2135, %v2113, %v2114
        %v2157 = vsel %vm2135, %v2112, %v2113
        %v2158 = vsel %vm2135, %v2111, %v2112
        %v2159 = vsel %vm2135, %v2110, %v2111
        %v2160 = vsel %vm2135, %v2109, %v2110
        %v2161 = vsel %vm2135, %v2108, %v2109
        %v2162 = vsel %vm2135, %v2107, %v2108
        %v2163 = vsel %vm2135, %v2106, %v2107
        %v2164 = vsel %vm2135, %v2105, %v2106
        %v2165 = vsel %vm2135, %v2104, %v2105
        %v2166 = vsel %vm2135, %v2103, %v2104
        %v2167 = vsel %vm2135, %v2134, %v2103
        %v2168 = vmul.f32 %v2166, %v1287
        %v2169 = vmul.f32 %v2165, %v1288
        %v2170 = vmul.f32 %v2164, %v1289
        %v2171 = vmul.f32 %v2163, %v1290
        %v2172 = vmul.f32 %v2162, %v1291
        %v2173 = vmul.f32 %v2161, %v1292
        %v2174 = vmul.f32 %v2160, %v1293
        %v2175 = vmul.f32 %v2159, %v1294
        %v2176 = vmul.f32 %v2158, %v1295
        %v2177 = vmul.f32 %v2157, %v1296
        %v2178 = vmul.f32 %v2156, %v1297
        %v2179 = vmul.f32 %v2155, %v1298
        %v2180 = vmul.f32 %v2154, %v1299
        %v2181 = vmul.f32 %v2153, %v1300
        %v2182 = vmul.f32 %v2152, %v1301
        %v2183 = vmul.f32 %v2151, %v1302
        %v2184 = vmul.f32 %v2150, %v1303
        %v2185 = vmul.f32 %v2149, %v1304
        %v2186 = vmul.f32 %v2148, %v1305
        %v2187 = vmul.f32 %v2147, %v1306
        %v2188 = vmul.f32 %v2146, %v1307
        %v2189 = vmul.f32 %v2145, %v1308
        %v2190 = vmul.f32 %v2144, %v1309
        %v2191 = vmul.f32 %v2143, %v1310
        %v2192 = vmul.f32 %v2142, %v1311
        %v2193 = vmul.f32 %v2141, %v1312
        %v2194 = vmul.f32 %v2140, %v1313
        %v2195 = vmul.f32 %v2139, %v1314
        %v2196 = vmul.f32 %v2138, %v1315
        %v2197 = vmul.f32 %v2137, %v1316
        %v2198 = vmul.f32 %v2136, %v1317
        %v2199 = vmul.f32 %v2167, %v1318
        %v2200 = vadd.f32 %v1896, %v2168
        %v2201 = vadd.f32 %v1897, %v2169
        %v2202 = vadd.f32 %v1898, %v2170
        %v2203 = vadd.f32 %v1899, %v2171
        %v2204 = vadd.f32 %v1900, %v2172
        %v2205 = vadd.f32 %v1901, %v2173
        %v2206 = vadd.f32 %v1902, %v2174
        %v2207 = vadd.f32 %v1903, %v2175
        %v2208 = vadd.f32 %v1904, %v2176
        %v2209 = vadd.f32 %v1905, %v2177
        %v2210 = vadd.f32 %v1906, %v2178
        %v2211 = vadd.f32 %v1907, %v2179
        %v2212 = vadd.f32 %v1908, %v2180
        %v2213 = vadd.f32 %v1909, %v2181
        %v2214 = vadd.f32 %v1910, %v2182
        %v2215 = vadd.f32 %v1911, %v2183
        %v2216 = vadd.f32 %v1912, %v2184
        %v2217 = vadd.f32 %v1913, %v2185
        %v2218 = vadd.f32 %v1914, %v2186
        %v2219 = vadd.f32 %v1915, %v2187
        %v2220 = vadd.f32 %v1916, %v2188
        %v2221 = vadd.f32 %v1917, %v2189
        %v2222 = vadd.f32 %v1918, %v2190
        %v2223 = vadd.f32 %v1919, %v2191
        %v2224 = vadd.f32 %v1920, %v2192
        %v2225 = vadd.f32 %v1921, %v2193
        %v2226 = vadd.f32 %v1922, %v2194
        %v2227 = vadd.f32 %v1923, %v2195
        %v2228 = vadd.f32 %v1924, %v2196
        %v2229 = vadd.f32 %v1925, %v2197
        %v2230 = vadd.f32 %v1926, %v2198
        %v2231 = vadd.f32 %v1927, %v2199
        %v2232 = vld [vmem:[#allocation8] sm:$0x1]
        %v2234 = vlaneseq
        %v2235 = vshrl.u32 %v2234, 7
        %v2236 = vsub.s32 0, %v2235
        %v2237 = vrot.slane %v2232, %v2236
        %v2239 = vadd.f32 %v2200, %v2237
        %v2240 = vadd.f32 %v2201, %v2237
        %v2241 = vadd.f32 %v2202, %v2237
        %v2242 = vadd.f32 %v2203, %v2237
        %v2243 = vadd.f32 %v2204, %v2237
        %v2244 = vadd.f32 %v2205, %v2237
        %v2245 = vadd.f32 %v2206, %v2237
        %v2246 = vadd.f32 %v2207, %v2237
        %v2247 = vadd.f32 %v2208, %v2237
        %v2248 = vadd.f32 %v2209, %v2237
        %v2249 = vadd.f32 %v2210, %v2237
        %v2250 = vadd.f32 %v2211, %v2237
        %v2251 = vadd.f32 %v2212, %v2237
        %v2252 = vadd.f32 %v2213, %v2237
        %v2253 = vadd.f32 %v2214, %v2237
        %v2254 = vadd.f32 %v2215, %v2237
        %v2255 = vadd.f32 %v2216, %v2237
        %v2256 = vadd.f32 %v2217, %v2237
        %v2257 = vadd.f32 %v2218, %v2237
        %v2258 = vadd.f32 %v2219, %v2237
        %v2259 = vadd.f32 %v2220, %v2237
        %v2260 = vadd.f32 %v2221, %v2237
        %v2261 = vadd.f32 %v2222, %v2237
        %v2262 = vadd.f32 %v2223, %v2237
        %v2263 = vadd.f32 %v2224, %v2237
        %v2264 = vadd.f32 %v2225, %v2237
        %v2265 = vadd.f32 %v2226, %v2237
        %v2266 = vadd.f32 %v2227, %v2237
        %v2267 = vadd.f32 %v2228, %v2237
        %v2268 = vadd.f32 %v2229, %v2237
        %v2269 = vadd.f32 %v2230, %v2237
        %v2270 = vadd.f32 %v2231, %v2237
        %v2271 = vxor.u32 %v2239, 2147483648
        %v2272 = vxor.u32 %v2240, 2147483648
        %v2273 = vxor.u32 %v2241, 2147483648
        %v2274 = vxor.u32 %v2242, 2147483648
        %v2275 = vxor.u32 %v2243, 2147483648
        %v2276 = vxor.u32 %v2244, 2147483648
        %v2277 = vxor.u32 %v2245, 2147483648
        %v2278 = vxor.u32 %v2246, 2147483648
        %v2279 = vxor.u32 %v2247, 2147483648
        %v2280 = vxor.u32 %v2248, 2147483648
        %v2281 = vxor.u32 %v2249, 2147483648
        %v2282 = vxor.u32 %v2250, 2147483648
        %v2283 = vxor.u32 %v2251, 2147483648
        %v2284 = vxor.u32 %v2252, 2147483648
        %v2285 = vxor.u32 %v2253, 2147483648
        %v2286 = vxor.u32 %v2254, 2147483648
        %v2287 = vxor.u32 %v2255, 2147483648
        %v2288 = vxor.u32 %v2256, 2147483648
        %v2289 = vxor.u32 %v2257, 2147483648
        %v2290 = vxor.u32 %v2258, 2147483648
        %v2291 = vxor.u32 %v2259, 2147483648
        %v2292 = vxor.u32 %v2260, 2147483648
        %v2293 = vxor.u32 %v2261, 2147483648
        %v2294 = vxor.u32 %v2262, 2147483648
        %v2295 = vxor.u32 %v2263, 2147483648
        %v2296 = vxor.u32 %v2264, 2147483648
        %v2297 = vxor.u32 %v2265, 2147483648
        %v2298 = vxor.u32 %v2266, 2147483648
        %v2299 = vxor.u32 %v2267, 2147483648
        %v2300 = vxor.u32 %v2268, 2147483648
        %v2301 = vxor.u32 %v2269, 2147483648
        %v2302 = vxor.u32 %v2270, 2147483648
        %v2303 = vmul.f32 %v2271, 1.442695
        %v2304 = vpow.pop %v2303
        %v2305 = vmul.f32 %v2272, 1.442695
        %v2306 = vpow.pop %v2305
        %v2307 = vmul.f32 %v2273, 1.442695
        %v2308 = vpow.pop %v2307
        %v2309 = vmul.f32 %v2274, 1.442695
        %v2310 = vpow.pop %v2309
        %v2311 = vmul.f32 %v2275, 1.442695
        %v2312 = vpow.pop %v2311
        %v2313 = vmul.f32 %v2276, 1.442695
        %v2314 = vpow.pop %v2313
        %v2315 = vmul.f32 %v2277, 1.442695
        %v2316 = vpow.pop %v2315
        %v2317 = vmul.f32 %v2278, 1.442695
        %v2318 = vpow.pop %v2317
        %v2319 = vmul.f32 %v2279, 1.442695
        %v2320 = vpow.pop %v2319
        %v2321 = vmul.f32 %v2280, 1.442695
        %v2322 = vpow.pop %v2321
        %v2323 = vmul.f32 %v2281, 1.442695
        %v2324 = vpow.pop %v2323
        %v2325 = vmul.f32 %v2282, 1.442695
        %v2326 = vpow.pop %v2325
        %v2327 = vmul.f32 %v2283, 1.442695
        %v2328 = vpow.pop %v2327
        %v2329 = vmul.f32 %v2284, 1.442695
        %v2330 = vpow.pop %v2329
        %v2331 = vmul.f32 %v2285, 1.442695
        %v2332 = vpow.pop %v2331
        %v2333 = vmul.f32 %v2286, 1.442695
        %v2334 = vpow.pop %v2333
        %v2335 = vmul.f32 %v2287, 1.442695
        %v2336 = vpow.pop %v2335
        %v2337 = vmul.f32 %v2288, 1.442695
        %v2338 = vpow.pop %v2337
        %v2339 = vmul.f32 %v2289, 1.442695
        %v2340 = vpow.pop %v2339
        %v2341 = vmul.f32 %v2290, 1.442695
        %v2342 = vpow.pop %v2341
        %v2343 = vmul.f32 %v2291, 1.442695
        %v2344 = vpow.pop %v2343
        %v2345 = vmul.f32 %v2292, 1.442695
        %v2346 = vpow.pop %v2345
        %v2347 = vmul.f32 %v2293, 1.442695
        %v2348 = vpow.pop %v2347
        %v2349 = vmul.f32 %v2294, 1.442695
        %v2350 = vpow.pop %v2349
        %v2351 = vmul.f32 %v2295, 1.442695
        %v2352 = vpow.pop %v2351
        %v2353 = vmul.f32 %v2296, 1.442695
        %v2354 = vpow.pop %v2353
        %v2355 = vmul.f32 %v2297, 1.442695
        %v2356 = vpow.pop %v2355
        %v2357 = vmul.f32 %v2298, 1.442695
        %v2358 = vpow.pop %v2357
        %v2359 = vmul.f32 %v2299, 1.442695
        %v2360 = vpow.pop %v2359
        %v2361 = vmul.f32 %v2300, 1.442695
        %v2362 = vpow.pop %v2361
        %v2363 = vmul.f32 %v2301, 1.442695
        %v2364 = vpow.pop %v2363
        %v2365 = vmul.f32 %v2302, 1.442695
        %v2366 = vpow.pop %v2365
        %v2367 = vadd.f32 %v2304, 1.0
        %v2368 = vadd.f32 %v2306, 1.0
        %v2369 = vadd.f32 %v2308, 1.0
        %v2370 = vadd.f32 %v2310, 1.0
        %v2371 = vadd.f32 %v2312, 1.0
        %v2372 = vadd.f32 %v2314, 1.0
        %v2373 = vadd.f32 %v2316, 1.0
        %v2374 = vadd.f32 %v2318, 1.0
        %v2375 = vadd.f32 %v2320, 1.0
        %v2376 = vadd.f32 %v2322, 1.0
        %v2377 = vadd.f32 %v2324, 1.0
        %v2378 = vadd.f32 %v2326, 1.0
        %v2379 = vadd.f32 %v2328, 1.0
        %v2380 = vadd.f32 %v2330, 1.0
        %v2381 = vadd.f32 %v2332, 1.0
        %v2382 = vadd.f32 %v2334, 1.0
        %v2383 = vadd.f32 %v2336, 1.0
        %v2384 = vadd.f32 %v2338, 1.0
        %v2385 = vadd.f32 %v2340, 1.0
        %v2386 = vadd.f32 %v2342, 1.0
        %v2387 = vadd.f32 %v2344, 1.0
        %v2388 = vadd.f32 %v2346, 1.0
        %v2389 = vadd.f32 %v2348, 1.0
        %v2390 = vadd.f32 %v2350, 1.0
        %v2391 = vadd.f32 %v2352, 1.0
        %v2392 = vadd.f32 %v2354, 1.0
        %v2393 = vadd.f32 %v2356, 1.0
        %v2394 = vadd.f32 %v2358, 1.0
        %v2395 = vadd.f32 %v2360, 1.0
        %v2396 = vadd.f32 %v2362, 1.0
        %v2397 = vadd.f32 %v2364, 1.0
        %v2398 = vadd.f32 %v2366, 1.0
        %v2399 = vrcp.pop %v2367
        %v2400 = vmul.f32 1.0, %v2399
        %v2401 = vrcp.pop %v2368
        %v2402 = vmul.f32 1.0, %v2401
        %v2403 = vrcp.pop %v2369
        %v2404 = vmul.f32 1.0, %v2403
        %v2405 = vrcp.pop %v2370
        %v2406 = vmul.f32 1.0, %v2405
        %v2407 = vrcp.pop %v2371
        %v2408 = vmul.f32 1.0, %v2407
        %v2409 = vrcp.pop %v2372
        %v2410 = vmul.f32 1.0, %v2409
        %v2411 = vrcp.pop %v2373
        %v2412 = vmul.f32 1.0, %v2411
        %v2413 = vrcp.pop %v2374
        %v2414 = vmul.f32 1.0, %v2413
        %v2415 = vrcp.pop %v2375
        %v2416 = vmul.f32 1.0, %v2415
        %v2417 = vrcp.pop %v2376
        %v2418 = vmul.f32 1.0, %v2417
        %v2419 = vrcp.pop %v2377
        %v2420 = vmul.f32 1.0, %v2419
        %v2421 = vrcp.pop %v2378
        %v2422 = vmul.f32 1.0, %v2421
        %v2423 = vrcp.pop %v2379
        %v2424 = vmul.f32 1.0, %v2423
        %v2425 = vrcp.pop %v2380
        %v2426 = vmul.f32 1.0, %v2425
        %v2427 = vrcp.pop %v2381
        %v2428 = vmul.f32 1.0, %v2427
        %v2429 = vrcp.pop %v2382
        %v2430 = vmul.f32 1.0, %v2429
        %v2431 = vrcp.pop %v2383
        %v2432 = vmul.f32 1.0, %v2431
        %v2433 = vrcp.pop %v2384
        %v2434 = vmul.f32 1.0, %v2433
        %v2435 = vrcp.pop %v2385
        %v2436 = vmul.f32 1.0, %v2435
        %v2437 = vrcp.pop %v2386
        %v2438 = vmul.f32 1.0, %v2437
        %v2439 = vrcp.pop %v2387
        %v2440 = vmul.f32 1.0, %v2439
        %v2441 = vrcp.pop %v2388
        %v2442 = vmul.f32 1.0, %v2441
        %v2443 = vrcp.pop %v2389
        %v2444 = vmul.f32 1.0, %v2443
        %v2445 = vrcp.pop %v2390
        %v2446 = vmul.f32 1.0, %v2445
        %v2447 = vrcp.pop %v2391
        %v2448 = vmul.f32 1.0, %v2447
        %v2449 = vrcp.pop %v2392
        %v2450 = vmul.f32 1.0, %v2449
        %v2451 = vrcp.pop %v2393
        %v2452 = vmul.f32 1.0, %v2451
        %v2453 = vrcp.pop %v2394
        %v2454 = vmul.f32 1.0, %v2453
        %v2455 = vrcp.pop %v2395
        %v2456 = vmul.f32 1.0, %v2455
        %v2457 = vrcp.pop %v2396
        %v2458 = vmul.f32 1.0, %v2457
        %v2459 = vrcp.pop %v2397
        %v2460 = vmul.f32 1.0, %v2459
        %v2461 = vrcp.pop %v2398
        %v2462 = vmul.f32 1.0, %v2461
        %v2463 = vmul.f32 %v2239, %v2400
        %v2464 = vmul.f32 %v2240, %v2402
        %v2465 = vmul.f32 %v2241, %v2404
        %v2466 = vmul.f32 %v2242, %v2406
        %v2467 = vmul.f32 %v2243, %v2408
        %v2468 = vmul.f32 %v2244, %v2410
        %v2469 = vmul.f32 %v2245, %v2412
        %v2470 = vmul.f32 %v2246, %v2414
        %v2471 = vmul.f32 %v2247, %v2416
        %v2472 = vmul.f32 %v2248, %v2418
        %v2473 = vmul.f32 %v2249, %v2420
        %v2474 = vmul.f32 %v2250, %v2422
        %v2475 = vmul.f32 %v2251, %v2424
        %v2476 = vmul.f32 %v2252, %v2426
        %v2477 = vmul.f32 %v2253, %v2428
        %v2478 = vmul.f32 %v2254, %v2430
        %v2479 = vmul.f32 %v2255, %v2432
        %v2480 = vmul.f32 %v2256, %v2434
        %v2481 = vmul.f32 %v2257, %v2436
        %v2482 = vmul.f32 %v2258, %v2438
        %v2483 = vmul.f32 %v2259, %v2440
        %v2484 = vmul.f32 %v2260, %v2442
        %v2485 = vmul.f32 %v2261, %v2444
        %v2486 = vmul.f32 %v2262, %v2446
        %v2487 = vmul.f32 %v2263, %v2448
        %v2488 = vmul.f32 %v2264, %v2450
        %v2489 = vmul.f32 %v2265, %v2452
        %v2490 = vmul.f32 %v2266, %v2454
        %v2491 = vmul.f32 %v2267, %v2456
        %v2492 = vmul.f32 %v2268, %v2458
        %v2493 = vmul.f32 %v2269, %v2460
        %v2494 = vmul.f32 %v2270, %v2462
        %v2495 = vpack.c.bf16 %v2464, %v2463
        %v2496 = vpack.c.bf16 %v2466, %v2465
        %v2497 = vpack.c.bf16 %v2468, %v2467
        %v2498 = vpack.c.bf16 %v2470, %v2469
        %v2499 = vpack.c.bf16 %v2472, %v2471
        %v2500 = vpack.c.bf16 %v2474, %v2473
        %v2501 = vpack.c.bf16 %v2476, %v2475
        %v2502 = vpack.c.bf16 %v2478, %v2477
        %v2503 = vpack.c.bf16 %v2480, %v2479
        %v2504 = vpack.c.bf16 %v2482, %v2481
        %v2505 = vpack.c.bf16 %v2484, %v2483
        %v2506 = vpack.c.bf16 %v2486, %v2485
        %v2507 = vpack.c.bf16 %v2488, %v2487
        %v2508 = vpack.c.bf16 %v2490, %v2489
        %v2509 = vpack.c.bf16 %v2492, %v2491
        %v2510 = vpack.c.bf16 %v2494, %v2493
        %v2511 = vld [vmem:[#allocation9] sm:$0xf]
        %v2512 = vld [vmem:[#allocation9 + $0x4] sm:$0xf]
        %v2513 = vld [vmem:[#allocation9 + $0x8] sm:$0xf]
        %v2514 = vld [vmem:[#allocation9 + $0xc] sm:$0xf]
        %v2515 = vld [vmem:[#allocation9 + $0x10] sm:$0xf]
        %v2516 = vld [vmem:[#allocation9 + $0x14] sm:$0xf]
        %v2517 = vld [vmem:[#allocation9 + $0x18] sm:$0xf]
        %v2518 = vld [vmem:[#allocation9 + $0x1c] sm:$0xf]
        %v2519 = vld [vmem:[#allocation9 + $0x20] sm:$0xf]
        %v2520 = vld [vmem:[#allocation9 + $0x24] sm:$0xf]
        %v2521 = vld [vmem:[#allocation9 + $0x28] sm:$0xf]
        %v2522 = vld [vmem:[#allocation9 + $0x2c] sm:$0xf]
        %v2523 = vld [vmem:[#allocation9 + $0x30] sm:$0xf]
        %v2524 = vld [vmem:[#allocation9 + $0x34] sm:$0xf]
        %v2525 = vld [vmem:[#allocation9 + $0x38] sm:$0xf]
        %v2526 = vld [vmem:[#allocation9 + $0x3c] sm:$0xf]
        %v2527 = vld [vmem:[#allocation11] sm:$0x1]
        %v2529 = vlaneseq
        %v2530 = vshrl.u32 %v2529, 7
        %v2531 = vsub.s32 0, %v2530
        %v2532 = vrot.slane %v2527, %v2531
        %v2550 = vunpack.c.l.b16 %v2511
        %v2551 = vunpack.c.l.b16 %v2512
        %v2552 = vunpack.c.l.b16 %v2513
        %v2553 = vunpack.c.l.b16 %v2514
        %v2554 = vunpack.c.l.b16 %v2515
        %v2555 = vunpack.c.l.b16 %v2516
        %v2556 = vunpack.c.l.b16 %v2517
        %v2557 = vunpack.c.l.b16 %v2518
        %v2558 = vunpack.c.l.b16 %v2519
        %v2559 = vunpack.c.l.b16 %v2520
        %v2560 = vunpack.c.l.b16 %v2521
        %v2561 = vunpack.c.l.b16 %v2522
        %v2562 = vunpack.c.l.b16 %v2523
        %v2563 = vunpack.c.l.b16 %v2524
        %v2564 = vunpack.c.l.b16 %v2525
        %v2565 = vunpack.c.l.b16 %v2526
        %v2566 = vpack.c.b16 %v2551, %v2550
        %v2567 = vpack.c.b16 %v2553, %v2552
        %v2568 = vpack.c.b16 %v2555, %v2554
        %v2569 = vpack.c.b16 %v2557, %v2556
        %v2570 = vpack.c.b16 %v2559, %v2558
        %v2571 = vpack.c.b16 %v2561, %v2560
        %v2572 = vpack.c.b16 %v2563, %v2562
        %v2573 = vpack.c.b16 %v2565, %v2564
        %2582 = vmatprep.subr.bf16.mxu0 0
        %2583 = vmatpush1.bf16.msra.mxu0 %v2573
        %2584 = vmatprep.subr.bf16.mxu0 0
        %2585 = vmatpush1.bf16.msra.mxu0 %v2572
        %2586 = vmatprep.subr.bf16.mxu0 0
        %2587 = vmatpush1.bf16.msra.mxu0 %v2571
        %2588 = vmatprep.subr.bf16.mxu0 0
        %2589 = vmatpush1.bf16.msra.mxu0 %v2570
        %2590 = vmatprep.subr.bf16.mxu0 0
        %2591 = vmatpush1.bf16.msra.mxu0 %v2569
        %2592 = vmatprep.subr.bf16.mxu0 0
        %2593 = vmatpush1.bf16.msra.mxu0 %v2568
        %2594 = vmatprep.subr.bf16.mxu0 0
        %2595 = vmatpush1.bf16.msra.mxu0 %v2567
        %2596 = vmatprep.subr.bf16.mxu0 0
        %2597 = vmatpush1.bf16.msra.mxu0 %v2566
        %2598 = vmatprep.subr.bf16.mxu0 0
        %2599 = vmatpush2.bf16.msra.mxu0 0
        %2600 = vmatprep.subr.bf16.mxu0 0
        %2601 = vmatpush2.bf16.msra.mxu0 0
        %2602 = vmatprep.subr.bf16.mxu0 0
        %2603 = vmatpush2.bf16.msra.mxu0 0
        %2604 = vmatprep.subr.bf16.mxu0 0
        %2605 = vmatpush2.bf16.msra.mxu0 0
        %2606 = vmatprep.subr.bf16.mxu0 0
        %2607 = vmatpush2.bf16.msra.mxu0 0
        %2608 = vmatprep.subr.bf16.mxu0 0
        %2609 = vmatpush2.bf16.msra.mxu0 0
        %2610 = vmatprep.subr.bf16.mxu0 0
        %2611 = vmatpush2.bf16.msra.mxu0 0
        %2612 = vmatprep.subr.bf16.mxu0 0
        %2613 = vmatpush2.bf16.msra.mxu0 0
        %2614 = vmatprep.mubr.bf16.mxu0 0
        %2615 = vmatmul.mubr.bf16.gmra.mxu0 %v2495
        %v2616 = vpop.f32.mrf.mxu0
        %v2617 = vadd.f32 %v2532, %v2616
        %v2618 = vpop.f32.mrf.mxu0
        %v2619 = vpop.f32.mrf.mxu0
        %v2620 = vadd.f32 %v2532, %v2619
        %v2621 = vpop.f32.mrf.mxu0
        %2622 = vmatprep.mubr.bf16.mxu0 0
        %2623 = vmatmul.mubr.bf16.gmra.mxu0 %v2496
        %v2624 = vpop.f32.mrf.mxu0
        %v2625 = vadd.f32 %v2532, %v2624
        %v2626 = vpop.f32.mrf.mxu0
        %v2627 = vpop.f32.mrf.mxu0
        %v2628 = vadd.f32 %v2532, %v2627
        %v2629 = vpop.f32.mrf.mxu0
        %2630 = vmatprep.mubr.bf16.mxu0 0
        %2631 = vmatmul.mubr.bf16.gmra.mxu0 %v2497
        %v2632 = vpop.f32.mrf.mxu0
        %v2633 = vadd.f32 %v2532, %v2632
        %v2634 = vpop.f32.mrf.mxu0
        %v2635 = vpop.f32.mrf.mxu0
        %v2636 = vadd.f32 %v2532, %v2635
        %v2637 = vpop.f32.mrf.mxu0
        %2638 = vmatprep.mubr.bf16.mxu0 0
        %2639 = vmatmul.mubr.bf16.gmra.mxu0 %v2498
        %v2640 = vpop.f32.mrf.mxu0
        %v2641 = vadd.f32 %v2532, %v2640
        %v2642 = vpop.f32.mrf.mxu0
        %v2643 = vpop.f32.mrf.mxu0
        %v2644 = vadd.f32 %v2532, %v2643
        %v2645 = vpop.f32.mrf.mxu0
        %2646 = vmatprep.mubr.bf16.mxu0 0
        %2647 = vmatmul.mubr.bf16.gmra.mxu0 %v2499
        %v2648 = vpop.f32.mrf.mxu0
        %v2649 = vadd.f32 %v2532, %v2648
        %v2650 = vpop.f32.mrf.mxu0
        %v2651 = vpop.f32.mrf.mxu0
        %v2652 = vadd.f32 %v2532, %v2651
        %v2653 = vpop.f32.mrf.mxu0
        %2654 = vmatprep.mubr.bf16.mxu0 0
        %2655 = vmatmul.mubr.bf16.gmra.mxu0 %v2500
        %v2656 = vpop.f32.mrf.mxu0
        %v2657 = vadd.f32 %v2532, %v2656
        %v2658 = vpop.f32.mrf.mxu0
        %v2659 = vpop.f32.mrf.mxu0
        %v2660 = vadd.f32 %v2532, %v2659
        %v2661 = vpop.f32.mrf.mxu0
        %2662 = vmatprep.mubr.bf16.mxu0 0
        %2663 = vmatmul.mubr.bf16.gmra.mxu0 %v2501
        %v2664 = vpop.f32.mrf.mxu0
        %v2665 = vadd.f32 %v2532, %v2664
        %v2666 = vpop.f32.mrf.mxu0
        %v2667 = vpop.f32.mrf.mxu0
        %v2668 = vadd.f32 %v2532, %v2667
        %v2669 = vpop.f32.mrf.mxu0
        %2670 = vmatprep.mubr.bf16.mxu0 0
        %2671 = vmatmul.mubr.bf16.gmra.mxu0 %v2502
        %v2672 = vpop.f32.mrf.mxu0
        %v2673 = vadd.f32 %v2532, %v2672
        %v2674 = vpop.f32.mrf.mxu0
        %v2675 = vpop.f32.mrf.mxu0
        %v2676 = vadd.f32 %v2532, %v2675
        %v2677 = vpop.f32.mrf.mxu0
        %2678 = vmatprep.mubr.bf16.mxu0 0
        %2679 = vmatmul.mubr.bf16.gmra.mxu0 %v2503
        %v2680 = vpop.f32.mrf.mxu0
        %v2681 = vadd.f32 %v2532, %v2680
        %v2682 = vpop.f32.mrf.mxu0
        %v2683 = vpop.f32.mrf.mxu0
        %v2684 = vadd.f32 %v2532, %v2683
        %v2685 = vpop.f32.mrf.mxu0
        %2686 = vmatprep.mubr.bf16.mxu0 0
        %2687 = vmatmul.mubr.bf16.gmra.mxu0 %v2504
        %v2688 = vpop.f32.mrf.mxu0
        %v2689 = vadd.f32 %v2532, %v2688
        %v2690 = vpop.f32.mrf.mxu0
        %v2691 = vpop.f32.mrf.mxu0
        %v2692 = vadd.f32 %v2532, %v2691
        %v2693 = vpop.f32.mrf.mxu0
        %2694 = vmatprep.mubr.bf16.mxu0 0
        %2695 = vmatmul.mubr.bf16.gmra.mxu0 %v2505
        %v2696 = vpop.f32.mrf.mxu0
        %v2697 = vadd.f32 %v2532, %v2696
        %v2698 = vpop.f32.mrf.mxu0
        %v2699 = vpop.f32.mrf.mxu0
        %v2700 = vadd.f32 %v2532, %v2699
        %v2701 = vpop.f32.mrf.mxu0
        %2702 = vmatprep.mubr.bf16.mxu0 0
        %2703 = vmatmul.mubr.bf16.gmra.mxu0 %v2506
        %v2704 = vpop.f32.mrf.mxu0
        %v2705 = vadd.f32 %v2532, %v2704
        %v2706 = vpop.f32.mrf.mxu0
        %v2707 = vpop.f32.mrf.mxu0
        %v2708 = vadd.f32 %v2532, %v2707
        %v2709 = vpop.f32.mrf.mxu0
        %2710 = vmatprep.mubr.bf16.mxu0 0
        %2711 = vmatmul.mubr.bf16.gmra.mxu0 %v2507
        %v2712 = vpop.f32.mrf.mxu0
        %v2713 = vadd.f32 %v2532, %v2712
        %v2714 = vpop.f32.mrf.mxu0
        %v2715 = vpop.f32.mrf.mxu0
        %v2716 = vadd.f32 %v2532, %v2715
        %v2717 = vpop.f32.mrf.mxu0
        %2718 = vmatprep.mubr.bf16.mxu0 0
        %2719 = vmatmul.mubr.bf16.gmra.mxu0 %v2508
        %v2720 = vpop.f32.mrf.mxu0
        %v2721 = vadd.f32 %v2532, %v2720
        %v2722 = vpop.f32.mrf.mxu0
        %v2723 = vpop.f32.mrf.mxu0
        %v2724 = vadd.f32 %v2532, %v2723
        %v2725 = vpop.f32.mrf.mxu0
        %2726 = vmatprep.mubr.bf16.mxu0 0
        %2727 = vmatmul.mubr.bf16.gmra.mxu0 %v2509
        %v2728 = vpop.f32.mrf.mxu0
        %v2729 = vadd.f32 %v2532, %v2728
        %v2730 = vpop.f32.mrf.mxu0
        %v2731 = vpop.f32.mrf.mxu0
        %v2732 = vadd.f32 %v2532, %v2731
        %v2733 = vpop.f32.mrf.mxu0
        %2734 = vmatprep.mubr.bf16.mxu0 0
        %2735 = vmatmul.mubr.bf16.gmra.mxu0 %v2510
        %v2736 = vpop.f32.mrf.mxu0
        %v2737 = vadd.f32 %v2532, %v2736
        %v2738 = vpop.f32.mrf.mxu0
        %v2739 = vpop.f32.mrf.mxu0
        %v2740 = vadd.f32 %v2532, %v2739
        %v2741 = vpop.f32.mrf.mxu0
        %2742 = vdwg.mxu0
        %v2743 = vxor.u32 %v2617, 2147483648
        %v2744 = vxor.u32 %v2620, 2147483648
        %v2745 = vxor.u32 %v2625, 2147483648
        %v2746 = vxor.u32 %v2628, 2147483648
        %v2747 = vxor.u32 %v2633, 2147483648
        %v2748 = vxor.u32 %v2636, 2147483648
        %v2749 = vxor.u32 %v2641, 2147483648
        %v2750 = vxor.u32 %v2644, 2147483648
        %v2751 = vxor.u32 %v2649, 2147483648
        %v2752 = vxor.u32 %v2652, 2147483648
        %v2753 = vxor.u32 %v2657, 2147483648
        %v2754 = vxor.u32 %v2660, 2147483648
        %v2755 = vxor.u32 %v2665, 2147483648
        %v2756 = vxor.u32 %v2668, 2147483648
        %v2757 = vxor.u32 %v2673, 2147483648
        %v2758 = vxor.u32 %v2676, 2147483648
        %v2759 = vxor.u32 %v2681, 2147483648
        %v2760 = vxor.u32 %v2684, 2147483648
        %v2761 = vxor.u32 %v2689, 2147483648
        %v2762 = vxor.u32 %v2692, 2147483648
        %v2763 = vxor.u32 %v2697, 2147483648
        %v2764 = vxor.u32 %v2700, 2147483648
        %v2765 = vxor.u32 %v2705, 2147483648
        %v2766 = vxor.u32 %v2708, 2147483648
        %v2767 = vxor.u32 %v2713, 2147483648
        %v2768 = vxor.u32 %v2716, 2147483648
        %v2769 = vxor.u32 %v2721, 2147483648
        %v2770 = vxor.u32 %v2724, 2147483648
        %v2771 = vxor.u32 %v2729, 2147483648
        %v2772 = vxor.u32 %v2732, 2147483648
        %v2773 = vxor.u32 %v2737, 2147483648
        %v2774 = vxor.u32 %v2740, 2147483648
        %v2775 = vmul.f32 %v2743, 1.442695
        %v2776 = vpow.pop %v2775
        %v2777 = vmul.f32 %v2744, 1.442695
        %v2778 = vpow.pop %v2777
        %v2779 = vmul.f32 %v2745, 1.442695
        %v2780 = vpow.pop %v2779
        %v2781 = vmul.f32 %v2746, 1.442695
        %v2782 = vpow.pop %v2781
        %v2783 = vmul.f32 %v2747, 1.442695
        %v2784 = vpow.pop %v2783
        %v2785 = vmul.f32 %v2748, 1.442695
        %v2786 = vpow.pop %v2785
        %v2787 = vmul.f32 %v2749, 1.442695
        %v2788 = vpow.pop %v2787
        %v2789 = vmul.f32 %v2750, 1.442695
        %v2790 = vpow.pop %v2789
        %v2791 = vmul.f32 %v2751, 1.442695
        %v2792 = vpow.pop %v2791
        %v2793 = vmul.f32 %v2752, 1.442695
        %v2794 = vpow.pop %v2793
        %v2795 = vmul.f32 %v2753, 1.442695
        %v2796 = vpow.pop %v2795
        %v2797 = vmul.f32 %v2754, 1.442695
        %v2798 = vpow.pop %v2797
        %v2799 = vmul.f32 %v2755, 1.442695
        %v2800 = vpow.pop %v2799
        %v2801 = vmul.f32 %v2756, 1.442695
        %v2802 = vpow.pop %v2801
        %v2803 = vmul.f32 %v2757, 1.442695
        %v2804 = vpow.pop %v2803
        %v2805 = vmul.f32 %v2758, 1.442695
        %v2806 = vpow.pop %v2805
        %v2807 = vmul.f32 %v2759, 1.442695
        %v2808 = vpow.pop %v2807
        %v2809 = vmul.f32 %v2760, 1.442695
        %v2810 = vpow.pop %v2809
        %v2811 = vmul.f32 %v2761, 1.442695
        %v2812 = vpow.pop %v2811
        %v2813 = vmul.f32 %v2762, 1.442695
        %v2814 = vpow.pop %v2813
        %v2815 = vmul.f32 %v2763, 1.442695
        %v2816 = vpow.pop %v2815
        %v2817 = vmul.f32 %v2764, 1.442695
        %v2818 = vpow.pop %v2817
        %v2819 = vmul.f32 %v2765, 1.442695
        %v2820 = vpow.pop %v2819
        %v2821 = vmul.f32 %v2766, 1.442695
        %v2822 = vpow.pop %v2821
        %v2823 = vmul.f32 %v2767, 1.442695
        %v2824 = vpow.pop %v2823
        %v2825 = vmul.f32 %v2768, 1.442695
        %v2826 = vpow.pop %v2825
        %v2827 = vmul.f32 %v2769, 1.442695
        %v2828 = vpow.pop %v2827
        %v2829 = vmul.f32 %v2770, 1.442695
        %v2830 = vpow.pop %v2829
        %v2831 = vmul.f32 %v2771, 1.442695
        %v2832 = vpow.pop %v2831
        %v2833 = vmul.f32 %v2772, 1.442695
        %v2834 = vpow.pop %v2833
        %v2835 = vmul.f32 %v2773, 1.442695
        %v2836 = vpow.pop %v2835
        %v2837 = vmul.f32 %v2774, 1.442695
        %v2838 = vpow.pop %v2837
        %v2839 = vadd.f32 %v2776, 1.0
        %v2840 = vadd.f32 %v2778, 1.0
        %v2841 = vadd.f32 %v2780, 1.0
        %v2842 = vadd.f32 %v2782, 1.0
        %v2843 = vadd.f32 %v2784, 1.0
        %v2844 = vadd.f32 %v2786, 1.0
        %v2845 = vadd.f32 %v2788, 1.0
        %v2846 = vadd.f32 %v2790, 1.0
        %v2847 = vadd.f32 %v2792, 1.0
        %v2848 = vadd.f32 %v2794, 1.0
        %v2849 = vadd.f32 %v2796, 1.0
        %v2850 = vadd.f32 %v2798, 1.0
        %v2851 = vadd.f32 %v2800, 1.0
        %v2852 = vadd.f32 %v2802, 1.0
        %v2853 = vadd.f32 %v2804, 1.0
        %v2854 = vadd.f32 %v2806, 1.0
        %v2855 = vadd.f32 %v2808, 1.0
        %v2856 = vadd.f32 %v2810, 1.0
        %v2857 = vadd.f32 %v2812, 1.0
        %v2858 = vadd.f32 %v2814, 1.0
        %v2859 = vadd.f32 %v2816, 1.0
        %v2860 = vadd.f32 %v2818, 1.0
        %v2861 = vadd.f32 %v2820, 1.0
        %v2862 = vadd.f32 %v2822, 1.0
        %v2863 = vadd.f32 %v2824, 1.0
        %v2864 = vadd.f32 %v2826, 1.0
        %v2865 = vadd.f32 %v2828, 1.0
        %v2866 = vadd.f32 %v2830, 1.0
        %v2867 = vadd.f32 %v2832, 1.0
        %v2868 = vadd.f32 %v2834, 1.0
        %v2869 = vadd.f32 %v2836, 1.0
        %v2870 = vadd.f32 %v2838, 1.0
        %v2871 = vrcp.pop %v2839
        %v2872 = vmul.f32 1.0, %v2871
        %v2873 = vrcp.pop %v2840
        %v2874 = vmul.f32 1.0, %v2873
        %v2875 = vrcp.pop %v2841
        %v2876 = vmul.f32 1.0, %v2875
        %v2877 = vrcp.pop %v2842
        %v2878 = vmul.f32 1.0, %v2877
        %v2879 = vrcp.pop %v2843
        %v2880 = vmul.f32 1.0, %v2879
        %v2881 = vrcp.pop %v2844
        %v2882 = vmul.f32 1.0, %v2881
        %v2883 = vrcp.pop %v2845
        %v2884 = vmul.f32 1.0, %v2883
        %v2885 = vrcp.pop %v2846
        %v2886 = vmul.f32 1.0, %v2885
        %v2887 = vrcp.pop %v2847
        %v2888 = vmul.f32 1.0, %v2887
        %v2889 = vrcp.pop %v2848
        %v2890 = vmul.f32 1.0, %v2889
        %v2891 = vrcp.pop %v2849
        %v2892 = vmul.f32 1.0, %v2891
        %v2893 = vrcp.pop %v2850
        %v2894 = vmul.f32 1.0, %v2893
        %v2895 = vrcp.pop %v2851
        %v2896 = vmul.f32 1.0, %v2895
        %v2897 = vrcp.pop %v2852
        %v2898 = vmul.f32 1.0, %v2897
        %v2899 = vrcp.pop %v2853
        %v2900 = vmul.f32 1.0, %v2899
        %v2901 = vrcp.pop %v2854
        %v2902 = vmul.f32 1.0, %v2901
        %v2903 = vrcp.pop %v2855
        %v2904 = vmul.f32 1.0, %v2903
        %v2905 = vrcp.pop %v2856
        %v2906 = vmul.f32 1.0, %v2905
        %v2907 = vrcp.pop %v2857
        %v2908 = vmul.f32 1.0, %v2907
        %v2909 = vrcp.pop %v2858
        %v2910 = vmul.f32 1.0, %v2909
        %v2911 = vrcp.pop %v2859
        %v2912 = vmul.f32 1.0, %v2911
        %v2913 = vrcp.pop %v2860
        %v2914 = vmul.f32 1.0, %v2913
        %v2915 = vrcp.pop %v2861
        %v2916 = vmul.f32 1.0, %v2915
        %v2917 = vrcp.pop %v2862
        %v2918 = vmul.f32 1.0, %v2917
        %v2919 = vrcp.pop %v2863
        %v2920 = vmul.f32 1.0, %v2919
        %v2921 = vrcp.pop %v2864
        %v2922 = vmul.f32 1.0, %v2921
        %v2923 = vrcp.pop %v2865
        %v2924 = vmul.f32 1.0, %v2923
        %v2925 = vrcp.pop %v2866
        %v2926 = vmul.f32 1.0, %v2925
        %v2927 = vrcp.pop %v2867
        %v2928 = vmul.f32 1.0, %v2927
        %v2929 = vrcp.pop %v2868
        %v2930 = vmul.f32 1.0, %v2929
        %v2931 = vrcp.pop %v2869
        %v2932 = vmul.f32 1.0, %v2931
        %v2933 = vrcp.pop %v2870
        %v2934 = vmul.f32 1.0, %v2933
        %v2935 = vmul.f32 %v2617, %v2872
        %v2936 = vmul.f32 %v2620, %v2874
        %v2937 = vmul.f32 %v2625, %v2876
        %v2938 = vmul.f32 %v2628, %v2878
        %v2939 = vmul.f32 %v2633, %v2880
        %v2940 = vmul.f32 %v2636, %v2882
        %v2941 = vmul.f32 %v2641, %v2884
        %v2942 = vmul.f32 %v2644, %v2886
        %v2943 = vmul.f32 %v2649, %v2888
        %v2944 = vmul.f32 %v2652, %v2890
        %v2945 = vmul.f32 %v2657, %v2892
        %v2946 = vmul.f32 %v2660, %v2894
        %v2947 = vmul.f32 %v2665, %v2896
        %v2948 = vmul.f32 %v2668, %v2898
        %v2949 = vmul.f32 %v2673, %v2900
        %v2950 = vmul.f32 %v2676, %v2902
        %v2951 = vmul.f32 %v2681, %v2904
        %v2952 = vmul.f32 %v2684, %v2906
        %v2953 = vmul.f32 %v2689, %v2908
        %v2954 = vmul.f32 %v2692, %v2910
        %v2955 = vmul.f32 %v2697, %v2912
        %v2956 = vmul.f32 %v2700, %v2914
        %v2957 = vmul.f32 %v2705, %v2916
        %v2958 = vmul.f32 %v2708, %v2918
        %v2959 = vmul.f32 %v2713, %v2920
        %v2960 = vmul.f32 %v2716, %v2922
        %v2961 = vmul.f32 %v2721, %v2924
        %v2962 = vmul.f32 %v2724, %v2926
        %v2963 = vmul.f32 %v2729, %v2928
        %v2964 = vmul.f32 %v2732, %v2930
        %v2965 = vmul.f32 %v2737, %v2932
        %v2966 = vmul.f32 %v2740, %v2934
        %2967 = vst [vmem:[#allocation2 + $0x10] sm:$0xff] %v2935
        %2968 = vst [vmem:[#allocation2 + $0x18] sm:$0xff] %v2936
        %2969 = vst [vmem:[#allocation2 + $0x20] sm:$0xff] %v2937
        %2970 = vst [vmem:[#allocation2 + $0x28] sm:$0xff] %v2938
        %2971 = vst [vmem:[#allocation2 + $0x30] sm:$0xff] %v2939
        %2972 = vst [vmem:[#allocation2 + $0x38] sm:$0xff] %v2940
        %2973 = vst [vmem:[#allocation2 + $0x40] sm:$0xff] %v2941
        %2974 = vst [vmem:[#allocation2 + $0x48] sm:$0xff] %v2942
        %2975 = vst [vmem:[#allocation2 + $0x50] sm:$0xff] %v2943
        %2976 = vst [vmem:[#allocation2 + $0x58] sm:$0xff] %v2944
        %2977 = vst [vmem:[#allocation2 + $0x60] sm:$0xff] %v2945
        %2978 = vst [vmem:[#allocation2 + $0x68] sm:$0xff] %v2946
        %2979 = vst [vmem:[#allocation2 + $0x70] sm:$0xff] %v2947
        %2980 = vst [vmem:[#allocation2 + $0x78] sm:$0xff] %v2948
        %2981 = vst [vmem:[#allocation2 + $0x80] sm:$0xff] %v2949
        %2982 = vst [vmem:[#allocation2 + $0x88] sm:$0xff] %v2950
        %2983 = vst [vmem:[#allocation2 + $0x90] sm:$0xff] %v2951
        %2984 = vst [vmem:[#allocation2 + $0x98] sm:$0xff] %v2952
        %2985 = vst [vmem:[#allocation2 + $0xa0] sm:$0xff] %v2953
        %2986 = vst [vmem:[#allocation2 + $0xa8] sm:$0xff] %v2954
        %2987 = vst [vmem:[#allocation2 + $0xb0] sm:$0xff] %v2955
        %2988 = vst [vmem:[#allocation2 + $0xb8] sm:$0xff] %v2956
        %2989 = vst [vmem:[#allocation2 + $0xc0] sm:$0xff] %v2957
        %2990 = vst [vmem:[#allocation2 + $0xc8] sm:$0xff] %v2958
        %2991 = vst [vmem:[#allocation2 + $0xd0] sm:$0xff] %v2959
        %2992 = vst [vmem:[#allocation2 + $0xd8] sm:$0xff] %v2960
        %2993 = vst [vmem:[#allocation2 + $0xe0] sm:$0xff] %v2961
        %2994 = vst [vmem:[#allocation2 + $0xe8] sm:$0xff] %v2962
        %2995 = vst [vmem:[#allocation2 + $0xf0] sm:$0xff] %v2963
        %2996 = vst [vmem:[#allocation2 + $0xf8] sm:$0xff] %v2964
        %2997 = vst [vmem:[#allocation2 + $0x100] sm:$0xff] %v2965
        %2998 = vst [vmem:[#allocation2 + $0x108] sm:$0xff] %v2966
        %v2999 = vld [vmem:[#allocation2] sm:$0xff]
        %v3000 = vld [vmem:[#allocation2 + $0x8] sm:$0xff]
        %v3001 = vld [vmem:[#allocation2 + $0x10] sm:$0xff]
        %v3002 = vld [vmem:[#allocation2 + $0x18] sm:$0xff]
        %v3003 = vld [vmem:[#allocation2 + $0x20] sm:$0xff]
        %v3004 = vld [vmem:[#allocation2 + $0x28] sm:$0xff]
        %v3005 = vld [vmem:[#allocation2 + $0x30] sm:$0xff]
        %v3006 = vld [vmem:[#allocation2 + $0x38] sm:$0xff]
        %v3007 = vld [vmem:[#allocation2 + $0x40] sm:$0xff]
        %v3008 = vld [vmem:[#allocation2 + $0x48] sm:$0xff]
        %v3009 = vld [vmem:[#allocation2 + $0x50] sm:$0xff]
        %v3010 = vld [vmem:[#allocation2 + $0x58] sm:$0xff]
        %v3011 = vld [vmem:[#allocation2 + $0x60] sm:$0xff]
        %v3012 = vld [vmem:[#allocation2 + $0x68] sm:$0xff]
        %v3013 = vld [vmem:[#allocation2 + $0x70] sm:$0xff]
        %v3014 = vld [vmem:[#allocation2 + $0x78] sm:$0xff]
        %v3015 = vld [vmem:[#allocation2 + $0x80] sm:$0xff]
        %v3016 = vld [vmem:[#allocation2 + $0x88] sm:$0xff]
        %v3017 = vld [vmem:[#allocation2 + $0x90] sm:$0xff]
        %v3018 = vld [vmem:[#allocation2 + $0x98] sm:$0xff]
        %v3019 = vld [vmem:[#allocation2 + $0xa0] sm:$0xff]
        %v3020 = vld [vmem:[#allocation2 + $0xa8] sm:$0xff]
        %v3021 = vld [vmem:[#allocation2 + $0xb0] sm:$0xff]
        %v3022 = vld [vmem:[#allocation2 + $0xb8] sm:$0xff]
        %v3023 = vld [vmem:[#allocation2 + $0xc0] sm:$0xff]
        %v3024 = vld [vmem:[#allocation2 + $0xc8] sm:$0xff]
        %v3025 = vld [vmem:[#allocation2 + $0xd0] sm:$0xff]
        %v3026 = vld [vmem:[#allocation2 + $0xd8] sm:$0xff]
        %v3027 = vld [vmem:[#allocation2 + $0xe0] sm:$0xff]
        %v3028 = vld [vmem:[#allocation2 + $0xe8] sm:$0xff]
        %v3029 = vld [vmem:[#allocation2 + $0xf0] sm:$0xff]
        %v3030 = vld [vmem:[#allocation2 + $0xf8] sm:$0xff]
        %v3031 = vld [vmem:[#allocation12] sm:$0x1]
        %v3032 = vlaneseq
        %v3033 = vshrl.u32 %v3032, 7
        %v3034 = vsub.s32 0, %v3033
        %v3035 = vrot.slane %v3031, %v3034
        %v3036 = vmul.f32 %v2999, %v3035
        %v3037 = vmul.f32 %v3000, %v3035
        %v3038 = vmul.f32 %v3001, %v3035
        %v3039 = vmul.f32 %v3002, %v3035
        %v3040 = vmul.f32 %v3003, %v3035
        %v3041 = vmul.f32 %v3004, %v3035
        %v3042 = vmul.f32 %v3005, %v3035
        %v3043 = vmul.f32 %v3006, %v3035
        %v3044 = vmul.f32 %v3007, %v3035
        %v3045 = vmul.f32 %v3008, %v3035
        %v3046 = vmul.f32 %v3009, %v3035
        %v3047 = vmul.f32 %v3010, %v3035
        %v3048 = vmul.f32 %v3011, %v3035
        %v3049 = vmul.f32 %v3012, %v3035
        %v3050 = vmul.f32 %v3013, %v3035
        %v3051 = vmul.f32 %v3014, %v3035
        %v3052 = vmul.f32 %v3015, %v3035
        %v3053 = vmul.f32 %v3016, %v3035
        %v3054 = vmul.f32 %v3017, %v3035
        %v3055 = vmul.f32 %v3018, %v3035
        %v3056 = vmul.f32 %v3019, %v3035
        %v3057 = vmul.f32 %v3020, %v3035
        %v3058 = vmul.f32 %v3021, %v3035
        %v3059 = vmul.f32 %v3022, %v3035
        %v3060 = vmul.f32 %v3023, %v3035
        %v3061 = vmul.f32 %v3024, %v3035
        %v3062 = vmul.f32 %v3025, %v3035
        %v3063 = vmul.f32 %v3026, %v3035
        %v3064 = vmul.f32 %v3027, %v3035
        %v3065 = vmul.f32 %v3028, %v3035
        %v3066 = vmul.f32 %v3029, %v3035
        %v3067 = vmul.f32 %v3030, %v3035
        %v3068 = vld [vmem:[#allocation2 + $0x100] sm:$0xff]
        %v3069 = vld [vmem:[#allocation2 + $0x108] sm:$0xff]
        %v3070 = vld [vmem:[#allocation12 + $0x3] sm:$0x1]
        %v3071 = vlaneseq
        %v3072 = vshrl.u32 %v3071, 7
        %v3073 = vsub.s32 0, %v3072
        %v3074 = vrot.slane %v3070, %v3073
        %v3075 = vmul.f32 %v3001, %v3074
        %v3076 = vmul.f32 %v3002, %v3074
        %v3077 = vmul.f32 %v3003, %v3074
        %v3078 = vmul.f32 %v3004, %v3074
        %v3079 = vmul.f32 %v3005, %v3074
        %v3080 = vmul.f32 %v3006, %v3074
        %v3081 = vmul.f32 %v3007, %v3074
        %v3082 = vmul.f32 %v3008, %v3074
        %v3083 = vmul.f32 %v3009, %v3074
        %v3084 = vmul.f32 %v3010, %v3074
        %v3085 = vmul.f32 %v3011, %v3074
        %v3086 = vmul.f32 %v3012, %v3074
        %v3087 = vmul.f32 %v3013, %v3074
        %v3088 = vmul.f32 %v3014, %v3074
        %v3089 = vmul.f32 %v3015, %v3074
        %v3090 = vmul.f32 %v3016, %v3074
        %v3091 = vmul.f32 %v3017, %v3074
        %v3092 = vmul.f32 %v3018, %v3074
        %v3093 = vmul.f32 %v3019, %v3074
        %v3094 = vmul.f32 %v3020, %v3074
        %v3095 = vmul.f32 %v3021, %v3074
        %v3096 = vmul.f32 %v3022, %v3074
        %v3097 = vmul.f32 %v3023, %v3074
        %v3098 = vmul.f32 %v3024, %v3074
        %v3099 = vmul.f32 %v3025, %v3074
        %v3100 = vmul.f32 %v3026, %v3074
        %v3101 = vmul.f32 %v3027, %v3074
        %v3102 = vmul.f32 %v3028, %v3074
        %v3103 = vmul.f32 %v3029, %v3074
        %v3104 = vmul.f32 %v3030, %v3074
        %v3105 = vmul.f32 %v3068, %v3074
        %v3106 = vmul.f32 %v3069, %v3074
        %v3107 = vadd.f32 %v3036, %v3075
        %v3108 = vadd.f32 %v3037, %v3076
        %v3109 = vadd.f32 %v3038, %v3077
        %v3110 = vadd.f32 %v3039, %v3078
        %v3111 = vadd.f32 %v3040, %v3079
        %v3112 = vadd.f32 %v3041, %v3080
        %v3113 = vadd.f32 %v3042, %v3081
        %v3114 = vadd.f32 %v3043, %v3082
        %v3115 = vadd.f32 %v3044, %v3083
        %v3116 = vadd.f32 %v3045, %v3084
        %v3117 = vadd.f32 %v3046, %v3085
        %v3118 = vadd.f32 %v3047, %v3086
        %v3119 = vadd.f32 %v3048, %v3087
        %v3120 = vadd.f32 %v3049, %v3088
        %v3121 = vadd.f32 %v3050, %v3089
        %v3122 = vadd.f32 %v3051, %v3090
        %v3123 = vadd.f32 %v3052, %v3091
        %v3124 = vadd.f32 %v3053, %v3092
        %v3125 = vadd.f32 %v3054, %v3093
        %v3126 = vadd.f32 %v3055, %v3094
        %v3127 = vadd.f32 %v3056, %v3095
        %v3128 = vadd.f32 %v3057, %v3096
        %v3129 = vadd.f32 %v3058, %v3097
        %v3130 = vadd.f32 %v3059, %v3098
        %v3131 = vadd.f32 %v3060, %v3099
        %v3132 = vadd.f32 %v3061, %v3100
        %v3133 = vadd.f32 %v3062, %v3101
        %v3134 = vadd.f32 %v3063, %v3102
        %v3135 = vadd.f32 %v3064, %v3103
        %v3136 = vadd.f32 %v3065, %v3104
        %v3137 = vadd.f32 %v3066, %v3105
        %v3138 = vadd.f32 %v3067, %v3106
        %v3139 = vld [vmem:[#allocation2 + $0x20] sm:$0xff]
        %v3140 = vld [vmem:[#allocation2 + $0x28] sm:$0xff]
        %v3141 = vld [vmem:[#allocation2 + $0x30] sm:$0xff]
        %v3142 = vld [vmem:[#allocation2 + $0x38] sm:$0xff]
        %v3143 = vld [vmem:[#allocation2 + $0x40] sm:$0xff]
        %v3144 = vld [vmem:[#allocation2 + $0x48] sm:$0xff]
        %v3145 = vld [vmem:[#allocation2 + $0x50] sm:$0xff]
        %v3146 = vld [vmem:[#allocation2 + $0x58] sm:$0xff]
        %v3147 = vld [vmem:[#allocation2 + $0x60] sm:$0xff]
        %v3148 = vld [vmem:[#allocation2 + $0x68] sm:$0xff]
        %v3149 = vld [vmem:[#allocation2 + $0x70] sm:$0xff]
        %v3150 = vld [vmem:[#allocation2 + $0x78] sm:$0xff]
        %v3151 = vld [vmem:[#allocation2 + $0x80] sm:$0xff]
        %v3152 = vld [vmem:[#allocation2 + $0x88] sm:$0xff]
        %v3153 = vld [vmem:[#allocation2 + $0x90] sm:$0xff]
        %v3154 = vld [vmem:[#allocation2 + $0x98] sm:$0xff]
        %v3155 = vld [vmem:[#allocation2 + $0xa0] sm:$0xff]
        %v3156 = vld [vmem:[#allocation2 + $0xa8] sm:$0xff]
        %v3157 = vld [vmem:[#allocation2 + $0xb0] sm:$0xff]
        %v3158 = vld [vmem:[#allocation2 + $0xb8] sm:$0xff]
        %v3159 = vld [vmem:[#allocation2 + $0xc0] sm:$0xff]
        %v3160 = vld [vmem:[#allocation2 + $0xc8] sm:$0xff]
        %v3161 = vld [vmem:[#allocation2 + $0xd0] sm:$0xff]
        %v3162 = vld [vmem:[#allocation2 + $0xd8] sm:$0xff]
        %v3163 = vld [vmem:[#allocation2 + $0xe0] sm:$0xff]
        %v3164 = vld [vmem:[#allocation2 + $0xe8] sm:$0xff]
        %v3165 = vld [vmem:[#allocation2 + $0xf0] sm:$0xff]
        %v3166 = vld [vmem:[#allocation2 + $0xf8] sm:$0xff]
        %v3167 = vld [vmem:[#allocation2 + $0x100] sm:$0xff]
        %v3168 = vld [vmem:[#allocation2 + $0x108] sm:$0xff]
        %v3169 = vld [vmem:[#allocation2 + $0x110] sm:$0xff]
        %v3170 = vld [vmem:[#allocation2 + $0x118] sm:$0xff]
        %v3171 = vld [vmem:[#allocation12 + $0x6] sm:$0x1]
        %v3172 = vlaneseq
        %v3173 = vshrl.u32 %v3172, 7
        %v3174 = vsub.s32 0, %v3173
        %v3175 = vrot.slane %v3171, %v3174
        %v3176 = vmul.f32 %v3139, %v3175
        %v3177 = vmul.f32 %v3140, %v3175
        %v3178 = vmul.f32 %v3141, %v3175
        %v3179 = vmul.f32 %v3142, %v3175
        %v3180 = vmul.f32 %v3143, %v3175
        %v3181 = vmul.f32 %v3144, %v3175
        %v3182 = vmul.f32 %v3145, %v3175
        %v3183 = vmul.f32 %v3146, %v3175
        %v3184 = vmul.f32 %v3147, %v3175
        %v3185 = vmul.f32 %v3148, %v3175
        %v3186 = vmul.f32 %v3149, %v3175
        %v3187 = vmul.f32 %v3150, %v3175
        %v3188 = vmul.f32 %v3151, %v3175
        %v3189 = vmul.f32 %v3152, %v3175
        %v3190 = vmul.f32 %v3153, %v3175
        %v3191 = vmul.f32 %v3154, %v3175
        %v3192 = vmul.f32 %v3155, %v3175
        %v3193 = vmul.f32 %v3156, %v3175
        %v3194 = vmul.f32 %v3157, %v3175
        %v3195 = vmul.f32 %v3158, %v3175
        %v3196 = vmul.f32 %v3159, %v3175
        %v3197 = vmul.f32 %v3160, %v3175
        %v3198 = vmul.f32 %v3161, %v3175
        %v3199 = vmul.f32 %v3162, %v3175
        %v3200 = vmul.f32 %v3163, %v3175
        %v3201 = vmul.f32 %v3164, %v3175
        %v3202 = vmul.f32 %v3165, %v3175
        %v3203 = vmul.f32 %v3166, %v3175
        %v3204 = vmul.f32 %v3167, %v3175
        %v3205 = vmul.f32 %v3168, %v3175
        %v3206 = vmul.f32 %v3169, %v3175
        %v3207 = vmul.f32 %v3170, %v3175
        %v3208 = vadd.f32 %v3107, %v3176
        %v3209 = vadd.f32 %v3108, %v3177
        %v3210 = vadd.f32 %v3109, %v3178
        %v3211 = vadd.f32 %v3110, %v3179
        %v3212 = vadd.f32 %v3111, %v3180
        %v3213 = vadd.f32 %v3112, %v3181
        %v3214 = vadd.f32 %v3113, %v3182
        %v3215 = vadd.f32 %v3114, %v3183
        %v3216 = vadd.f32 %v3115, %v3184
        %v3217 = vadd.f32 %v3116, %v3185
        %v3218 = vadd.f32 %v3117, %v3186
        %v3219 = vadd.f32 %v3118, %v3187
        %v3220 = vadd.f32 %v3119, %v3188
        %v3221 = vadd.f32 %v3120, %v3189
        %v3222 = vadd.f32 %v3121, %v3190
        %v3223 = vadd.f32 %v3122, %v3191
        %v3224 = vadd.f32 %v3123, %v3192
        %v3225 = vadd.f32 %v3124, %v3193
        %v3226 = vadd.f32 %v3125, %v3194
        %v3227 = vadd.f32 %v3126, %v3195
        %v3228 = vadd.f32 %v3127, %v3196
        %v3229 = vadd.f32 %v3128, %v3197
        %v3230 = vadd.f32 %v3129, %v3198
        %v3231 = vadd.f32 %v3130, %v3199
        %v3232 = vadd.f32 %v3131, %v3200
        %v3233 = vadd.f32 %v3132, %v3201
        %v3234 = vadd.f32 %v3133, %v3202
        %v3235 = vadd.f32 %v3134, %v3203
        %v3236 = vadd.f32 %v3135, %v3204
        %v3237 = vadd.f32 %v3136, %v3205
        %v3238 = vadd.f32 %v3137, %v3206
        %v3239 = vadd.f32 %v3138, %v3207
        %v3240 = vrot.slane %v3208, 7
        %v3241 = vrot.slane %v3209, 7
        %v3242 = vrot.slane %v3210, 7
        %v3243 = vrot.slane %v3211, 7
        %v3244 = vrot.slane %v3212, 7
        %v3245 = vrot.slane %v3213, 7
        %v3246 = vrot.slane %v3214, 7
        %v3247 = vrot.slane %v3215, 7
        %v3248 = vrot.slane %v3216, 7
        %v3249 = vrot.slane %v3217, 7
        %v3250 = vrot.slane %v3218, 7
        %v3251 = vrot.slane %v3219, 7
        %v3252 = vrot.slane %v3220, 7
        %v3253 = vrot.slane %v3221, 7
        %v3254 = vrot.slane %v3222, 7
        %v3255 = vrot.slane %v3223, 7
        %v3256 = vrot.slane %v3224, 7
        %v3257 = vrot.slane %v3225, 7
        %v3258 = vrot.slane %v3226, 7
        %v3259 = vrot.slane %v3227, 7
        %v3260 = vrot.slane %v3228, 7
        %v3261 = vrot.slane %v3229, 7
        %v3262 = vrot.slane %v3230, 7
        %v3263 = vrot.slane %v3231, 7
        %v3264 = vrot.slane %v3232, 7
        %v3265 = vrot.slane %v3233, 7
        %v3266 = vrot.slane %v3234, 7
        %v3267 = vrot.slane %v3235, 7
        %v3268 = vrot.slane %v3236, 7
        %v3269 = vrot.slane %v3237, 7
        %v3270 = vrot.slane %v3238, 7
        %v3271 = vrot.slane %v3239, 7
        %v3272 = vsel %vm1656, %v3270, %v3271
        %v3273 = vsel %vm1656, %v3269, %v3270
        %v3274 = vsel %vm1656, %v3268, %v3269
        %v3275 = vsel %vm1656, %v3267, %v3268
        %v3276 = vsel %vm1656, %v3266, %v3267
        %v3277 = vsel %vm1656, %v3265, %v3266
        %v3278 = vsel %vm1656, %v3264, %v3265
        %v3279 = vsel %vm1656, %v3263, %v3264
        %v3280 = vsel %vm1656, %v3262, %v3263
        %v3281 = vsel %vm1656, %v3261, %v3262
        %v3282 = vsel %vm1656, %v3260, %v3261
        %v3283 = vsel %vm1656, %v3259, %v3260
        %v3284 = vsel %vm1656, %v3258, %v3259
        %v3285 = vsel %vm1656, %v3257, %v3258
        %v3286 = vsel %vm1656, %v3256, %v3257
        %v3287 = vsel %vm1656, %v3255, %v3256
        %v3288 = vsel %vm1656, %v3254, %v3255
        %v3289 = vsel %vm1656, %v3253, %v3254
        %v3290 = vsel %vm1656, %v3252, %v3253
        %v3291 = vsel %vm1656, %v3251, %v3252
        %v3292 = vsel %vm1656, %v3250, %v3251
        %v3293 = vsel %vm1656, %v3249, %v3250
        %v3294 = vsel %vm1656, %v3248, %v3249
        %v3295 = vsel %vm1656, %v3247, %v3248
        %v3296 = vsel %vm1656, %v3246, %v3247
        %v3297 = vsel %vm1656, %v3245, %v3246
        %v3298 = vsel %vm1656, %v3244, %v3245
        %v3299 = vsel %vm1656, %v3243, %v3244
        %v3300 = vsel %vm1656, %v3242, %v3243
        %v3301 = vsel %vm1656, %v3241, %v3242
        %v3302 = vsel %vm1656, %v3240, %v3241
        %v3303 = vsel %vm1656, %v3271, %v3240
        %v3304 = vmul.f32 %v3303, %v1095
        %v3305 = vmul.f32 %v3302, %v1096
        %v3306 = vmul.f32 %v3301, %v1097
        %v3307 = vmul.f32 %v3300, %v1098
        %v3308 = vmul.f32 %v3299, %v1099
        %v3309 = vmul.f32 %v3298, %v1100
        %v3310 = vmul.f32 %v3297, %v1101
        %v3311 = vmul.f32 %v3296, %v1102
        %v3312 = vmul.f32 %v3295, %v1103
        %v3313 = vmul.f32 %v3294, %v1104
        %v3314 = vmul.f32 %v3293, %v1105
        %v3315 = vmul.f32 %v3292, %v1106
        %v3316 = vmul.f32 %v3291, %v1107
        %v3317 = vmul.f32 %v3290, %v1108
        %v3318 = vmul.f32 %v3289, %v1109
        %v3319 = vmul.f32 %v3288, %v1110
        %v3320 = vmul.f32 %v3287, %v1111
        %v3321 = vmul.f32 %v3286, %v1112
        %v3322 = vmul.f32 %v3285, %v1113
        %v3323 = vmul.f32 %v3284, %v1114
        %v3324 = vmul.f32 %v3283, %v1115
        %v3325 = vmul.f32 %v3282, %v1116
        %v3326 = vmul.f32 %v3281, %v1117
        %v3327 = vmul.f32 %v3280, %v1118
        %v3328 = vmul.f32 %v3279, %v1119
        %v3329 = vmul.f32 %v3278, %v1120
        %v3330 = vmul.f32 %v3277, %v1121
        %v3331 = vmul.f32 %v3276, %v1122
        %v3332 = vmul.f32 %v3275, %v1123
        %v3333 = vmul.f32 %v3274, %v1124
        %v3334 = vmul.f32 %v3273, %v1125
        %v3335 = vmul.f32 %v3272, %v1126
        %v3336 = vld [vmem:[#allocation12 + $0x1] sm:$0x1]
        %v3337 = vlaneseq
        %v3338 = vshrl.u32 %v3337, 7
        %v3339 = vsub.s32 0, %v3338
        %v3340 = vrot.slane %v3336, %v3339
        %v3341 = vmul.f32 %v2999, %v3340
        %v3342 = vmul.f32 %v3000, %v3340
        %v3343 = vmul.f32 %v3001, %v3340
        %v3344 = vmul.f32 %v3002, %v3340
        %v3345 = vmul.f32 %v3003, %v3340
        %v3346 = vmul.f32 %v3004, %v3340
        %v3347 = vmul.f32 %v3005, %v3340
        %v3348 = vmul.f32 %v3006, %v3340
        %v3349 = vmul.f32 %v3007, %v3340
        %v3350 = vmul.f32 %v3008, %v3340
        %v3351 = vmul.f32 %v3009, %v3340
        %v3352 = vmul.f32 %v3010, %v3340
        %v3353 = vmul.f32 %v3011, %v3340
        %v3354 = vmul.f32 %v3012, %v3340
        %v3355 = vmul.f32 %v3013, %v3340
        %v3356 = vmul.f32 %v3014, %v3340
        %v3357 = vmul.f32 %v3015, %v3340
        %v3358 = vmul.f32 %v3016, %v3340
        %v3359 = vmul.f32 %v3017, %v3340
        %v3360 = vmul.f32 %v3018, %v3340
        %v3361 = vmul.f32 %v3019, %v3340
        %v3362 = vmul.f32 %v3020, %v3340
        %v3363 = vmul.f32 %v3021, %v3340
        %v3364 = vmul.f32 %v3022, %v3340
        %v3365 = vmul.f32 %v3023, %v3340
        %v3366 = vmul.f32 %v3024, %v3340
        %v3367 = vmul.f32 %v3025, %v3340
        %v3368 = vmul.f32 %v3026, %v3340
        %v3369 = vmul.f32 %v3027, %v3340
        %v3370 = vmul.f32 %v3028, %v3340
        %v3371 = vmul.f32 %v3029, %v3340
        %v3372 = vmul.f32 %v3030, %v3340
        %v3373 = vld [vmem:[#allocation12 + $0x4] sm:$0x1]
        %v3374 = vlaneseq
        %v3375 = vshrl.u32 %v3374, 7
        %v3376 = vsub.s32 0, %v3375
        %v3377 = vrot.slane %v3373, %v3376
        %v3378 = vmul.f32 %v3001, %v3377
        %v3379 = vmul.f32 %v3002, %v3377
        %v3380 = vmul.f32 %v3003, %v3377
        %v3381 = vmul.f32 %v3004, %v3377
        %v3382 = vmul.f32 %v3005, %v3377
        %v3383 = vmul.f32 %v3006, %v3377
        %v3384 = vmul.f32 %v3007, %v3377
        %v3385 = vmul.f32 %v3008, %v3377
        %v3386 = vmul.f32 %v3009, %v3377
        %v3387 = vmul.f32 %v3010, %v3377
        %v3388 = vmul.f32 %v3011, %v3377
        %v3389 = vmul.f32 %v3012, %v3377
        %v3390 = vmul.f32 %v3013, %v3377
        %v3391 = vmul.f32 %v3014, %v3377
        %v3392 = vmul.f32 %v3015, %v3377
        %v3393 = vmul.f32 %v3016, %v3377
        %v3394 = vmul.f32 %v3017, %v3377
        %v3395 = vmul.f32 %v3018, %v3377
        %v3396 = vmul.f32 %v3019, %v3377
        %v3397 = vmul.f32 %v3020, %v3377
        %v3398 = vmul.f32 %v3021, %v3377
        %v3399 = vmul.f32 %v3022, %v3377
        %v3400 = vmul.f32 %v3023, %v3377
        %v3401 = vmul.f32 %v3024, %v3377
        %v3402 = vmul.f32 %v3025, %v3377
        %v3403 = vmul.f32 %v3026, %v3377
        %v3404 = vmul.f32 %v3027, %v3377
        %v3405 = vmul.f32 %v3028, %v3377
        %v3406 = vmul.f32 %v3029, %v3377
        %v3407 = vmul.f32 %v3030, %v3377
        %v3408 = vmul.f32 %v3068, %v3377
        %v3409 = vmul.f32 %v3069, %v3377
        %v3410 = vadd.f32 %v3341, %v3378
        %v3411 = vadd.f32 %v3342, %v3379
        %v3412 = vadd.f32 %v3343, %v3380
        %v3413 = vadd.f32 %v3344, %v3381
        %v3414 = vadd.f32 %v3345, %v3382
        %v3415 = vadd.f32 %v3346, %v3383
        %v3416 = vadd.f32 %v3347, %v3384
        %v3417 = vadd.f32 %v3348, %v3385
        %v3418 = vadd.f32 %v3349, %v3386
        %v3419 = vadd.f32 %v3350, %v3387
        %v3420 = vadd.f32 %v3351, %v3388
        %v3421 = vadd.f32 %v3352, %v3389
        %v3422 = vadd.f32 %v3353, %v3390
        %v3423 = vadd.f32 %v3354, %v3391
        %v3424 = vadd.f32 %v3355, %v3392
        %v3425 = vadd.f32 %v3356, %v3393
        %v3426 = vadd.f32 %v3357, %v3394
        %v3427 = vadd.f32 %v3358, %v3395
        %v3428 = vadd.f32 %v3359, %v3396
        %v3429 = vadd.f32 %v3360, %v3397
        %v3430 = vadd.f32 %v3361, %v3398
        %v3431 = vadd.f32 %v3362, %v3399
        %v3432 = vadd.f32 %v3363, %v3400
        %v3433 = vadd.f32 %v3364, %v3401
        %v3434 = vadd.f32 %v3365, %v3402
        %v3435 = vadd.f32 %v3366, %v3403
        %v3436 = vadd.f32 %v3367, %v3404
        %v3437 = vadd.f32 %v3368, %v3405
        %v3438 = vadd.f32 %v3369, %v3406
        %v3439 = vadd.f32 %v3370, %v3407
        %v3440 = vadd.f32 %v3371, %v3408
        %v3441 = vadd.f32 %v3372, %v3409
        %v3442 = vld [vmem:[#allocation12 + $0x7] sm:$0x1]
        %v3443 = vlaneseq
        %v3444 = vshrl.u32 %v3443, 7
        %v3445 = vsub.s32 0, %v3444
        %v3446 = vrot.slane %v3442, %v3445
        %v3447 = vmul.f32 %v3139, %v3446
        %v3448 = vmul.f32 %v3140, %v3446
        %v3449 = vmul.f32 %v3141, %v3446
        %v3450 = vmul.f32 %v3142, %v3446
        %v3451 = vmul.f32 %v3143, %v3446
        %v3452 = vmul.f32 %v3144, %v3446
        %v3453 = vmul.f32 %v3145, %v3446
        %v3454 = vmul.f32 %v3146, %v3446
        %v3455 = vmul.f32 %v3147, %v3446
        %v3456 = vmul.f32 %v3148, %v3446
        %v3457 = vmul.f32 %v3149, %v3446
        %v3458 = vmul.f32 %v3150, %v3446
        %v3459 = vmul.f32 %v3151, %v3446
        %v3460 = vmul.f32 %v3152, %v3446
        %v3461 = vmul.f32 %v3153, %v3446
        %v3462 = vmul.f32 %v3154, %v3446
        %v3463 = vmul.f32 %v3155, %v3446
        %v3464 = vmul.f32 %v3156, %v3446
        %v3465 = vmul.f32 %v3157, %v3446
        %v3466 = vmul.f32 %v3158, %v3446
        %v3467 = vmul.f32 %v3159, %v3446
        %v3468 = vmul.f32 %v3160, %v3446
        %v3469 = vmul.f32 %v3161, %v3446
        %v3470 = vmul.f32 %v3162, %v3446
        %v3471 = vmul.f32 %v3163, %v3446
        %v3472 = vmul.f32 %v3164, %v3446
        %v3473 = vmul.f32 %v3165, %v3446
        %v3474 = vmul.f32 %v3166, %v3446
        %v3475 = vmul.f32 %v3167, %v3446
        %v3476 = vmul.f32 %v3168, %v3446
        %v3477 = vmul.f32 %v3169, %v3446
        %v3478 = vmul.f32 %v3170, %v3446
        %v3479 = vadd.f32 %v3410, %v3447
        %v3480 = vadd.f32 %v3411, %v3448
        %v3481 = vadd.f32 %v3412, %v3449
        %v3482 = vadd.f32 %v3413, %v3450
        %v3483 = vadd.f32 %v3414, %v3451
        %v3484 = vadd.f32 %v3415, %v3452
        %v3485 = vadd.f32 %v3416, %v3453
        %v3486 = vadd.f32 %v3417, %v3454
        %v3487 = vadd.f32 %v3418, %v3455
        %v3488 = vadd.f32 %v3419, %v3456
        %v3489 = vadd.f32 %v3420, %v3457
        %v3490 = vadd.f32 %v3421, %v3458
        %v3491 = vadd.f32 %v3422, %v3459
        %v3492 = vadd.f32 %v3423, %v3460
        %v3493 = vadd.f32 %v3424, %v3461
        %v3494 = vadd.f32 %v3425, %v3462
        %v3495 = vadd.f32 %v3426, %v3463
        %v3496 = vadd.f32 %v3427, %v3464
        %v3497 = vadd.f32 %v3428, %v3465
        %v3498 = vadd.f32 %v3429, %v3466
        %v3499 = vadd.f32 %v3430, %v3467
        %v3500 = vadd.f32 %v3431, %v3468
        %v3501 = vadd.f32 %v3432, %v3469
        %v3502 = vadd.f32 %v3433, %v3470
        %v3503 = vadd.f32 %v3434, %v3471
        %v3504 = vadd.f32 %v3435, %v3472
        %v3505 = vadd.f32 %v3436, %v3473
        %v3506 = vadd.f32 %v3437, %v3474
        %v3507 = vadd.f32 %v3438, %v3475
        %v3508 = vadd.f32 %v3439, %v3476
        %v3509 = vadd.f32 %v3440, %v3477
        %v3510 = vadd.f32 %v3441, %v3478
        %v3511 = vadd.f32 %v3304, %v3479
        %v3512 = vadd.f32 %v3305, %v3480
        %v3513 = vadd.f32 %v3306, %v3481
        %v3514 = vadd.f32 %v3307, %v3482
        %v3515 = vadd.f32 %v3308, %v3483
        %v3516 = vadd.f32 %v3309, %v3484
        %v3517 = vadd.f32 %v3310, %v3485
        %v3518 = vadd.f32 %v3311, %v3486
        %v3519 = vadd.f32 %v3312, %v3487
        %v3520 = vadd.f32 %v3313, %v3488
        %v3521 = vadd.f32 %v3314, %v3489
        %v3522 = vadd.f32 %v3315, %v3490
        %v3523 = vadd.f32 %v3316, %v3491
        %v3524 = vadd.f32 %v3317, %v3492
        %v3525 = vadd.f32 %v3318, %v3493
        %v3526 = vadd.f32 %v3319, %v3494
        %v3527 = vadd.f32 %v3320, %v3495
        %v3528 = vadd.f32 %v3321, %v3496
        %v3529 = vadd.f32 %v3322, %v3497
        %v3530 = vadd.f32 %v3323, %v3498
        %v3531 = vadd.f32 %v3324, %v3499
        %v3532 = vadd.f32 %v3325, %v3500
        %v3533 = vadd.f32 %v3326, %v3501
        %v3534 = vadd.f32 %v3327, %v3502
        %v3535 = vadd.f32 %v3328, %v3503
        %v3536 = vadd.f32 %v3329, %v3504
        %v3537 = vadd.f32 %v3330, %v3505
        %v3538 = vadd.f32 %v3331, %v3506
        %v3539 = vadd.f32 %v3332, %v3507
        %v3540 = vadd.f32 %v3333, %v3508
        %v3541 = vadd.f32 %v3334, %v3509
        %v3542 = vadd.f32 %v3335, %v3510
        %v3543 = vld [vmem:[#allocation12 + $0x2] sm:$0x1]
        %v3544 = vlaneseq
        %v3545 = vshrl.u32 %v3544, 7
        %v3546 = vsub.s32 0, %v3545
        %v3547 = vrot.slane %v3543, %v3546
        %v3548 = vmul.f32 %v2999, %v3547
        %v3549 = vmul.f32 %v3000, %v3547
        %v3550 = vmul.f32 %v3001, %v3547
        %v3551 = vmul.f32 %v3002, %v3547
        %v3552 = vmul.f32 %v3003, %v3547
        %v3553 = vmul.f32 %v3004, %v3547
        %v3554 = vmul.f32 %v3005, %v3547
        %v3555 = vmul.f32 %v3006, %v3547
        %v3556 = vmul.f32 %v3007, %v3547
        %v3557 = vmul.f32 %v3008, %v3547
        %v3558 = vmul.f32 %v3009, %v3547
        %v3559 = vmul.f32 %v3010, %v3547
        %v3560 = vmul.f32 %v3011, %v3547
        %v3561 = vmul.f32 %v3012, %v3547
        %v3562 = vmul.f32 %v3013, %v3547
        %v3563 = vmul.f32 %v3014, %v3547
        %v3564 = vmul.f32 %v3015, %v3547
        %v3565 = vmul.f32 %v3016, %v3547
        %v3566 = vmul.f32 %v3017, %v3547
        %v3567 = vmul.f32 %v3018, %v3547
        %v3568 = vmul.f32 %v3019, %v3547
        %v3569 = vmul.f32 %v3020, %v3547
        %v3570 = vmul.f32 %v3021, %v3547
        %v3571 = vmul.f32 %v3022, %v3547
        %v3572 = vmul.f32 %v3023, %v3547
        %v3573 = vmul.f32 %v3024, %v3547
        %v3574 = vmul.f32 %v3025, %v3547
        %v3575 = vmul.f32 %v3026, %v3547
        %v3576 = vmul.f32 %v3027, %v3547
        %v3577 = vmul.f32 %v3028, %v3547
        %v3578 = vmul.f32 %v3029, %v3547
        %v3579 = vmul.f32 %v3030, %v3547
        %v3580 = vld [vmem:[#allocation12 + $0x5] sm:$0x1]
        %v3581 = vlaneseq
        %v3582 = vshrl.u32 %v3581, 7
        %v3583 = vsub.s32 0, %v3582
        %v3584 = vrot.slane %v3580, %v3583
        %v3585 = vmul.f32 %v3001, %v3584
        %v3586 = vmul.f32 %v3002, %v3584
        %v3587 = vmul.f32 %v3003, %v3584
        %v3588 = vmul.f32 %v3004, %v3584
        %v3589 = vmul.f32 %v3005, %v3584
        %v3590 = vmul.f32 %v3006, %v3584
        %v3591 = vmul.f32 %v3007, %v3584
        %v3592 = vmul.f32 %v3008, %v3584
        %v3593 = vmul.f32 %v3009, %v3584
        %v3594 = vmul.f32 %v3010, %v3584
        %v3595 = vmul.f32 %v3011, %v3584
        %v3596 = vmul.f32 %v3012, %v3584
        %v3597 = vmul.f32 %v3013, %v3584
        %v3598 = vmul.f32 %v3014, %v3584
        %v3599 = vmul.f32 %v3015, %v3584
        %v3600 = vmul.f32 %v3016, %v3584
        %v3601 = vmul.f32 %v3017, %v3584
        %v3602 = vmul.f32 %v3018, %v3584
        %v3603 = vmul.f32 %v3019, %v3584
        %v3604 = vmul.f32 %v3020, %v3584
        %v3605 = vmul.f32 %v3021, %v3584
        %v3606 = vmul.f32 %v3022, %v3584
        %v3607 = vmul.f32 %v3023, %v3584
        %v3608 = vmul.f32 %v3024, %v3584
        %v3609 = vmul.f32 %v3025, %v3584
        %v3610 = vmul.f32 %v3026, %v3584
        %v3611 = vmul.f32 %v3027, %v3584
        %v3612 = vmul.f32 %v3028, %v3584
        %v3613 = vmul.f32 %v3029, %v3584
        %v3614 = vmul.f32 %v3030, %v3584
        %v3615 = vmul.f32 %v3068, %v3584
        %v3616 = vmul.f32 %v3069, %v3584
        %v3617 = vadd.f32 %v3548, %v3585
        %v3618 = vadd.f32 %v3549, %v3586
        %v3619 = vadd.f32 %v3550, %v3587
        %v3620 = vadd.f32 %v3551, %v3588
        %v3621 = vadd.f32 %v3552, %v3589
        %v3622 = vadd.f32 %v3553, %v3590
        %v3623 = vadd.f32 %v3554, %v3591
        %v3624 = vadd.f32 %v3555, %v3592
        %v3625 = vadd.f32 %v3556, %v3593
        %v3626 = vadd.f32 %v3557, %v3594
        %v3627 = vadd.f32 %v3558, %v3595
        %v3628 = vadd.f32 %v3559, %v3596
        %v3629 = vadd.f32 %v3560, %v3597
        %v3630 = vadd.f32 %v3561, %v3598
        %v3631 = vadd.f32 %v3562, %v3599
        %v3632 = vadd.f32 %v3563, %v3600
        %v3633 = vadd.f32 %v3564, %v3601
        %v3634 = vadd.f32 %v3565, %v3602
        %v3635 = vadd.f32 %v3566, %v3603
        %v3636 = vadd.f32 %v3567, %v3604
        %v3637 = vadd.f32 %v3568, %v3605
        %v3638 = vadd.f32 %v3569, %v3606
        %v3639 = vadd.f32 %v3570, %v3607
        %v3640 = vadd.f32 %v3571, %v3608
        %v3641 = vadd.f32 %v3572, %v3609
        %v3642 = vadd.f32 %v3573, %v3610
        %v3643 = vadd.f32 %v3574, %v3611
        %v3644 = vadd.f32 %v3575, %v3612
        %v3645 = vadd.f32 %v3576, %v3613
        %v3646 = vadd.f32 %v3577, %v3614
        %v3647 = vadd.f32 %v3578, %v3615
        %v3648 = vadd.f32 %v3579, %v3616
        %v3649 = vld [vmem:[#allocation12 + $0x8] sm:$0x1]
        %v3650 = vlaneseq
        %v3651 = vshrl.u32 %v3650, 7
        %v3652 = vsub.s32 0, %v3651
        %v3653 = vrot.slane %v3649, %v3652
        %v3654 = vmul.f32 %v3139, %v3653
        %v3655 = vmul.f32 %v3140, %v3653
        %v3656 = vmul.f32 %v3141, %v3653
        %v3657 = vmul.f32 %v3142, %v3653
        %v3658 = vmul.f32 %v3143, %v3653
        %v3659 = vmul.f32 %v3144, %v3653
        %v3660 = vmul.f32 %v3145, %v3653
        %v3661 = vmul.f32 %v3146, %v3653
        %v3662 = vmul.f32 %v3147, %v3653
        %v3663 = vmul.f32 %v3148, %v3653
        %v3664 = vmul.f32 %v3149, %v3653
        %v3665 = vmul.f32 %v3150, %v3653
        %v3666 = vmul.f32 %v3151, %v3653
        %v3667 = vmul.f32 %v3152, %v3653
        %v3668 = vmul.f32 %v3153, %v3653
        %v3669 = vmul.f32 %v3154, %v3653
        %v3670 = vmul.f32 %v3155, %v3653
        %v3671 = vmul.f32 %v3156, %v3653
        %v3672 = vmul.f32 %v3157, %v3653
        %v3673 = vmul.f32 %v3158, %v3653
        %v3674 = vmul.f32 %v3159, %v3653
        %v3675 = vmul.f32 %v3160, %v3653
        %v3676 = vmul.f32 %v3161, %v3653
        %v3677 = vmul.f32 %v3162, %v3653
        %v3678 = vmul.f32 %v3163, %v3653
        %v3679 = vmul.f32 %v3164, %v3653
        %v3680 = vmul.f32 %v3165, %v3653
        %v3681 = vmul.f32 %v3166, %v3653
        %v3682 = vmul.f32 %v3167, %v3653
        %v3683 = vmul.f32 %v3168, %v3653
        %v3684 = vmul.f32 %v3169, %v3653
        %v3685 = vmul.f32 %v3170, %v3653
        %v3686 = vadd.f32 %v3617, %v3654
        %v3687 = vadd.f32 %v3618, %v3655
        %v3688 = vadd.f32 %v3619, %v3656
        %v3689 = vadd.f32 %v3620, %v3657
        %v3690 = vadd.f32 %v3621, %v3658
        %v3691 = vadd.f32 %v3622, %v3659
        %v3692 = vadd.f32 %v3623, %v3660
        %v3693 = vadd.f32 %v3624, %v3661
        %v3694 = vadd.f32 %v3625, %v3662
        %v3695 = vadd.f32 %v3626, %v3663
        %v3696 = vadd.f32 %v3627, %v3664
        %v3697 = vadd.f32 %v3628, %v3665
        %v3698 = vadd.f32 %v3629, %v3666
        %v3699 = vadd.f32 %v3630, %v3667
        %v3700 = vadd.f32 %v3631, %v3668
        %v3701 = vadd.f32 %v3632, %v3669
        %v3702 = vadd.f32 %v3633, %v3670
        %v3703 = vadd.f32 %v3634, %v3671
        %v3704 = vadd.f32 %v3635, %v3672
        %v3705 = vadd.f32 %v3636, %v3673
        %v3706 = vadd.f32 %v3637, %v3674
        %v3707 = vadd.f32 %v3638, %v3675
        %v3708 = vadd.f32 %v3639, %v3676
        %v3709 = vadd.f32 %v3640, %v3677
        %v3710 = vadd.f32 %v3641, %v3678
        %v3711 = vadd.f32 %v3642, %v3679
        %v3712 = vadd.f32 %v3643, %v3680
        %v3713 = vadd.f32 %v3644, %v3681
        %v3714 = vadd.f32 %v3645, %v3682
        %v3715 = vadd.f32 %v3646, %v3683
        %v3716 = vadd.f32 %v3647, %v3684
        %v3717 = vadd.f32 %v3648, %v3685
        %v3718 = vrot.slane %v3686, 1
        %v3719 = vrot.slane %v3687, 1
        %v3720 = vrot.slane %v3688, 1
        %v3721 = vrot.slane %v3689, 1
        %v3722 = vrot.slane %v3690, 1
        %v3723 = vrot.slane %v3691, 1
        %v3724 = vrot.slane %v3692, 1
        %v3725 = vrot.slane %v3693, 1
        %v3726 = vrot.slane %v3694, 1
        %v3727 = vrot.slane %v3695, 1
        %v3728 = vrot.slane %v3696, 1
        %v3729 = vrot.slane %v3697, 1
        %v3730 = vrot.slane %v3698, 1
        %v3731 = vrot.slane %v3699, 1
        %v3732 = vrot.slane %v3700, 1
        %v3733 = vrot.slane %v3701, 1
        %v3734 = vrot.slane %v3702, 1
        %v3735 = vrot.slane %v3703, 1
        %v3736 = vrot.slane %v3704, 1
        %v3737 = vrot.slane %v3705, 1
        %v3738 = vrot.slane %v3706, 1
        %v3739 = vrot.slane %v3707, 1
        %v3740 = vrot.slane %v3708, 1
        %v3741 = vrot.slane %v3709, 1
        %v3742 = vrot.slane %v3710, 1
        %v3743 = vrot.slane %v3711, 1
        %v3744 = vrot.slane %v3712, 1
        %v3745 = vrot.slane %v3713, 1
        %v3746 = vrot.slane %v3714, 1
        %v3747 = vrot.slane %v3715, 1
        %v3748 = vrot.slane %v3716, 1
        %v3749 = vrot.slane %v3717, 1
        %v3750 = vsel %vm2135, %v3748, %v3749
        %v3751 = vsel %vm2135, %v3747, %v3748
        %v3752 = vsel %vm2135, %v3746, %v3747
        %v3753 = vsel %vm2135, %v3745, %v3746
        %v3754 = vsel %vm2135, %v3744, %v3745
        %v3755 = vsel %vm2135, %v3743, %v3744
        %v3756 = vsel %vm2135, %v3742, %v3743
        %v3757 = vsel %vm2135, %v3741, %v3742
        %v3758 = vsel %vm2135, %v3740, %v3741
        %v3759 = vsel %vm2135, %v3739, %v3740
        %v3760 = vsel %vm2135, %v3738, %v3739
        %v3761 = vsel %vm2135, %v3737, %v3738
        %v3762 = vsel %vm2135, %v3736, %v3737
        %v3763 = vsel %vm2135, %v3735, %v3736
        %v3764 = vsel %vm2135, %v3734, %v3735
        %v3765 = vsel %vm2135, %v3733, %v3734
        %v3766 = vsel %vm2135, %v3732, %v3733
        %v3767 = vsel %vm2135, %v3731, %v3732
        %v3768 = vsel %vm2135, %v3730, %v3731
        %v3769 = vsel %vm2135, %v3729, %v3730
        %v3770 = vsel %vm2135, %v3728, %v3729
        %v3771 = vsel %vm2135, %v3727, %v3728
        %v3772 = vsel %vm2135, %v3726, %v3727
        %v3773 = vsel %vm2135, %v3725, %v3726
        %v3774 = vsel %vm2135, %v3724, %v3725
        %v3775 = vsel %vm2135, %v3723, %v3724
        %v3776 = vsel %vm2135, %v3722, %v3723
        %v3777 = vsel %vm2135, %v3721, %v3722
        %v3778 = vsel %vm2135, %v3720, %v3721
        %v3779 = vsel %vm2135, %v3719, %v3720
        %v3780 = vsel %vm2135, %v3718, %v3719
        %v3781 = vsel %vm2135, %v3749, %v3718
        %v3782 = vmul.f32 %v3780, %v1287
        %v3783 = vmul.f32 %v3779, %v1288
        %v3784 = vmul.f32 %v3778, %v1289
        %v3785 = vmul.f32 %v3777, %v1290
        %v3786 = vmul.f32 %v3776, %v1291
        %v3787 = vmul.f32 %v3775, %v1292
        %v3788 = vmul.f32 %v3774, %v1293
        %v3789 = vmul.f32 %v3773, %v1294
        %v3790 = vmul.f32 %v3772, %v1295
        %v3791 = vmul.f32 %v3771, %v1296
        %v3792 = vmul.f32 %v3770, %v1297
        %v3793 = vmul.f32 %v3769, %v1298
        %v3794 = vmul.f32 %v3768, %v1299
        %v3795 = vmul.f32 %v3767, %v1300
        %v3796 = vmul.f32 %v3766, %v1301
        %v3797 = vmul.f32 %v3765, %v1302
        %v3798 = vmul.f32 %v3764, %v1303
        %v3799 = vmul.f32 %v3763, %v1304
        %v3800 = vmul.f32 %v3762, %v1305
        %v3801 = vmul.f32 %v3761, %v1306
        %v3802 = vmul.f32 %v3760, %v1307
        %v3803 = vmul.f32 %v3759, %v1308
        %v3804 = vmul.f32 %v3758, %v1309
        %v3805 = vmul.f32 %v3757, %v1310
        %v3806 = vmul.f32 %v3756, %v1311
        %v3807 = vmul.f32 %v3755, %v1312
        %v3808 = vmul.f32 %v3754, %v1313
        %v3809 = vmul.f32 %v3753, %v1314
        %v3810 = vmul.f32 %v3752, %v1315
        %v3811 = vmul.f32 %v3751, %v1316
        %v3812 = vmul.f32 %v3750, %v1317
        %v3813 = vmul.f32 %v3781, %v1318
        %v3814 = vadd.f32 %v3511, %v3782
        %v3815 = vadd.f32 %v3512, %v3783
        %v3816 = vadd.f32 %v3513, %v3784
        %v3817 = vadd.f32 %v3514, %v3785
        %v3818 = vadd.f32 %v3515, %v3786
        %v3819 = vadd.f32 %v3516, %v3787
        %v3820 = vadd.f32 %v3517, %v3788
        %v3821 = vadd.f32 %v3518, %v3789
        %v3822 = vadd.f32 %v3519, %v3790
        %v3823 = vadd.f32 %v3520, %v3791
        %v3824 = vadd.f32 %v3521, %v3792
        %v3825 = vadd.f32 %v3522, %v3793
        %v3826 = vadd.f32 %v3523, %v3794
        %v3827 = vadd.f32 %v3524, %v3795
        %v3828 = vadd.f32 %v3525, %v3796
        %v3829 = vadd.f32 %v3526, %v3797
        %v3830 = vadd.f32 %v3527, %v3798
        %v3831 = vadd.f32 %v3528, %v3799
        %v3832 = vadd.f32 %v3529, %v3800
        %v3833 = vadd.f32 %v3530, %v3801
        %v3834 = vadd.f32 %v3531, %v3802
        %v3835 = vadd.f32 %v3532, %v3803
        %v3836 = vadd.f32 %v3533, %v3804
        %v3837 = vadd.f32 %v3534, %v3805
        %v3838 = vadd.f32 %v3535, %v3806
        %v3839 = vadd.f32 %v3536, %v3807
        %v3840 = vadd.f32 %v3537, %v3808
        %v3841 = vadd.f32 %v3538, %v3809
        %v3842 = vadd.f32 %v3539, %v3810
        %v3843 = vadd.f32 %v3540, %v3811
        %v3844 = vadd.f32 %v3541, %v3812
        %v3845 = vadd.f32 %v3542, %v3813
        %v3846 = vld [vmem:[#allocation14] sm:$0x1]
        %v3848 = vlaneseq
        %v3849 = vshrl.u32 %v3848, 7
        %v3850 = vsub.s32 0, %v3849
        %v3851 = vrot.slane %v3846, %v3850
        %v3853 = vadd.f32 %v3814, %v3851
        %v3854 = vadd.f32 %v3815, %v3851
        %v3855 = vadd.f32 %v3816, %v3851
        %v3856 = vadd.f32 %v3817, %v3851
        %v3857 = vadd.f32 %v3818, %v3851
        %v3858 = vadd.f32 %v3819, %v3851
        %v3859 = vadd.f32 %v3820, %v3851
        %v3860 = vadd.f32 %v3821, %v3851
        %v3861 = vadd.f32 %v3822, %v3851
        %v3862 = vadd.f32 %v3823, %v3851
        %v3863 = vadd.f32 %v3824, %v3851
        %v3864 = vadd.f32 %v3825, %v3851
        %v3865 = vadd.f32 %v3826, %v3851
        %v3866 = vadd.f32 %v3827, %v3851
        %v3867 = vadd.f32 %v3828, %v3851
        %v3868 = vadd.f32 %v3829, %v3851
        %v3869 = vadd.f32 %v3830, %v3851
        %v3870 = vadd.f32 %v3831, %v3851
        %v3871 = vadd.f32 %v3832, %v3851
        %v3872 = vadd.f32 %v3833, %v3851
        %v3873 = vadd.f32 %v3834, %v3851
        %v3874 = vadd.f32 %v3835, %v3851
        %v3875 = vadd.f32 %v3836, %v3851
        %v3876 = vadd.f32 %v3837, %v3851
        %v3877 = vadd.f32 %v3838, %v3851
        %v3878 = vadd.f32 %v3839, %v3851
        %v3879 = vadd.f32 %v3840, %v3851
        %v3880 = vadd.f32 %v3841, %v3851
        %v3881 = vadd.f32 %v3842, %v3851
        %v3882 = vadd.f32 %v3843, %v3851
        %v3883 = vadd.f32 %v3844, %v3851
        %v3884 = vadd.f32 %v3845, %v3851
        %v3885 = vxor.u32 %v3853, 2147483648
        %v3886 = vxor.u32 %v3854, 2147483648
        %v3887 = vxor.u32 %v3855, 2147483648
        %v3888 = vxor.u32 %v3856, 2147483648
        %v3889 = vxor.u32 %v3857, 2147483648
        %v3890 = vxor.u32 %v3858, 2147483648
        %v3891 = vxor.u32 %v3859, 2147483648
        %v3892 = vxor.u32 %v3860, 2147483648
        %v3893 = vxor.u32 %v3861, 2147483648
        %v3894 = vxor.u32 %v3862, 2147483648
        %v3895 = vxor.u32 %v3863, 2147483648
        %v3896 = vxor.u32 %v3864, 2147483648
        %v3897 = vxor.u32 %v3865, 2147483648
        %v3898 = vxor.u32 %v3866, 2147483648
        %v3899 = vxor.u32 %v3867, 2147483648
        %v3900 = vxor.u32 %v3868, 2147483648
        %v3901 = vxor.u32 %v3869, 2147483648
        %v3902 = vxor.u32 %v3870, 2147483648
        %v3903 = vxor.u32 %v3871, 2147483648
        %v3904 = vxor.u32 %v3872, 2147483648
        %v3905 = vxor.u32 %v3873, 2147483648
        %v3906 = vxor.u32 %v3874, 2147483648
        %v3907 = vxor.u32 %v3875, 2147483648
        %v3908 = vxor.u32 %v3876, 2147483648
        %v3909 = vxor.u32 %v3877, 2147483648
        %v3910 = vxor.u32 %v3878, 2147483648
        %v3911 = vxor.u32 %v3879, 2147483648
        %v3912 = vxor.u32 %v3880, 2147483648
        %v3913 = vxor.u32 %v3881, 2147483648
        %v3914 = vxor.u32 %v3882, 2147483648
        %v3915 = vxor.u32 %v3883, 2147483648
        %v3916 = vxor.u32 %v3884, 2147483648
        %v3917 = vmul.f32 %v3885, 1.442695
        %v3918 = vpow.pop %v3917
        %v3919 = vmul.f32 %v3886, 1.442695
        %v3920 = vpow.pop %v3919
        %v3921 = vmul.f32 %v3887, 1.442695
        %v3922 = vpow.pop %v3921
        %v3923 = vmul.f32 %v3888, 1.442695
        %v3924 = vpow.pop %v3923
        %v3925 = vmul.f32 %v3889, 1.442695
        %v3926 = vpow.pop %v3925
        %v3927 = vmul.f32 %v3890, 1.442695
        %v3928 = vpow.pop %v3927
        %v3929 = vmul.f32 %v3891, 1.442695
        %v3930 = vpow.pop %v3929
        %v3931 = vmul.f32 %v3892, 1.442695
        %v3932 = vpow.pop %v3931
        %v3933 = vmul.f32 %v3893, 1.442695
        %v3934 = vpow.pop %v3933
        %v3935 = vmul.f32 %v3894, 1.442695
        %v3936 = vpow.pop %v3935
        %v3937 = vmul.f32 %v3895, 1.442695
        %v3938 = vpow.pop %v3937
        %v3939 = vmul.f32 %v3896, 1.442695
        %v3940 = vpow.pop %v3939
        %v3941 = vmul.f32 %v3897, 1.442695
        %v3942 = vpow.pop %v3941
        %v3943 = vmul.f32 %v3898, 1.442695
        %v3944 = vpow.pop %v3943
        %v3945 = vmul.f32 %v3899, 1.442695
        %v3946 = vpow.pop %v3945
        %v3947 = vmul.f32 %v3900, 1.442695
        %v3948 = vpow.pop %v3947
        %v3949 = vmul.f32 %v3901, 1.442695
        %v3950 = vpow.pop %v3949
        %v3951 = vmul.f32 %v3902, 1.442695
        %v3952 = vpow.pop %v3951
        %v3953 = vmul.f32 %v3903, 1.442695
        %v3954 = vpow.pop %v3953
        %v3955 = vmul.f32 %v3904, 1.442695
        %v3956 = vpow.pop %v3955
        %v3957 = vmul.f32 %v3905, 1.442695
        %v3958 = vpow.pop %v3957
        %v3959 = vmul.f32 %v3906, 1.442695
        %v3960 = vpow.pop %v3959
        %v3961 = vmul.f32 %v3907, 1.442695
        %v3962 = vpow.pop %v3961
        %v3963 = vmul.f32 %v3908, 1.442695
        %v3964 = vpow.pop %v3963
        %v3965 = vmul.f32 %v3909, 1.442695
        %v3966 = vpow.pop %v3965
        %v3967 = vmul.f32 %v3910, 1.442695
        %v3968 = vpow.pop %v3967
        %v3969 = vmul.f32 %v3911, 1.442695
        %v3970 = vpow.pop %v3969
        %v3971 = vmul.f32 %v3912, 1.442695
        %v3972 = vpow.pop %v3971
        %v3973 = vmul.f32 %v3913, 1.442695
        %v3974 = vpow.pop %v3973
        %v3975 = vmul.f32 %v3914, 1.442695
        %v3976 = vpow.pop %v3975
        %v3977 = vmul.f32 %v3915, 1.442695
        %v3978 = vpow.pop %v3977
        %v3979 = vmul.f32 %v3916, 1.442695
        %v3980 = vpow.pop %v3979
        %v3981 = vadd.f32 %v3918, 1.0
        %v3982 = vadd.f32 %v3920, 1.0
        %v3983 = vadd.f32 %v3922, 1.0
        %v3984 = vadd.f32 %v3924, 1.0
        %v3985 = vadd.f32 %v3926, 1.0
        %v3986 = vadd.f32 %v3928, 1.0
        %v3987 = vadd.f32 %v3930, 1.0
        %v3988 = vadd.f32 %v3932, 1.0
        %v3989 = vadd.f32 %v3934, 1.0
        %v3990 = vadd.f32 %v3936, 1.0
        %v3991 = vadd.f32 %v3938, 1.0
        %v3992 = vadd.f32 %v3940, 1.0
        %v3993 = vadd.f32 %v3942, 1.0
        %v3994 = vadd.f32 %v3944, 1.0
        %v3995 = vadd.f32 %v3946, 1.0
        %v3996 = vadd.f32 %v3948, 1.0
        %v3997 = vadd.f32 %v3950, 1.0
        %v3998 = vadd.f32 %v3952, 1.0
        %v3999 = vadd.f32 %v3954, 1.0
        %v4000 = vadd.f32 %v3956, 1.0
        %v4001 = vadd.f32 %v3958, 1.0
        %v4002 = vadd.f32 %v3960, 1.0
        %v4003 = vadd.f32 %v3962, 1.0
        %v4004 = vadd.f32 %v3964, 1.0
        %v4005 = vadd.f32 %v3966, 1.0
        %v4006 = vadd.f32 %v3968, 1.0
        %v4007 = vadd.f32 %v3970, 1.0
        %v4008 = vadd.f32 %v3972, 1.0
        %v4009 = vadd.f32 %v3974, 1.0
        %v4010 = vadd.f32 %v3976, 1.0
        %v4011 = vadd.f32 %v3978, 1.0
        %v4012 = vadd.f32 %v3980, 1.0
        %v4013 = vrcp.pop %v3981
        %v4014 = vmul.f32 1.0, %v4013
        %v4015 = vrcp.pop %v3982
        %v4016 = vmul.f32 1.0, %v4015
        %v4017 = vrcp.pop %v3983
        %v4018 = vmul.f32 1.0, %v4017
        %v4019 = vrcp.pop %v3984
        %v4020 = vmul.f32 1.0, %v4019
        %v4021 = vrcp.pop %v3985
        %v4022 = vmul.f32 1.0, %v4021
        %v4023 = vrcp.pop %v3986
        %v4024 = vmul.f32 1.0, %v4023
        %v4025 = vrcp.pop %v3987
        %v4026 = vmul.f32 1.0, %v4025
        %v4027 = vrcp.pop %v3988
        %v4028 = vmul.f32 1.0, %v4027
        %v4029 = vrcp.pop %v3989
        %v4030 = vmul.f32 1.0, %v4029
        %v4031 = vrcp.pop %v3990
        %v4032 = vmul.f32 1.0, %v4031
        %v4033 = vrcp.pop %v3991
        %v4034 = vmul.f32 1.0, %v4033
        %v4035 = vrcp.pop %v3992
        %v4036 = vmul.f32 1.0, %v4035
        %v4037 = vrcp.pop %v3993
        %v4038 = vmul.f32 1.0, %v4037
        %v4039 = vrcp.pop %v3994
        %v4040 = vmul.f32 1.0, %v4039
        %v4041 = vrcp.pop %v3995
        %v4042 = vmul.f32 1.0, %v4041
        %v4043 = vrcp.pop %v3996
        %v4044 = vmul.f32 1.0, %v4043
        %v4045 = vrcp.pop %v3997
        %v4046 = vmul.f32 1.0, %v4045
        %v4047 = vrcp.pop %v3998
        %v4048 = vmul.f32 1.0, %v4047
        %v4049 = vrcp.pop %v3999
        %v4050 = vmul.f32 1.0, %v4049
        %v4051 = vrcp.pop %v4000
        %v4052 = vmul.f32 1.0, %v4051
        %v4053 = vrcp.pop %v4001
        %v4054 = vmul.f32 1.0, %v4053
        %v4055 = vrcp.pop %v4002
        %v4056 = vmul.f32 1.0, %v4055
        %v4057 = vrcp.pop %v4003
        %v4058 = vmul.f32 1.0, %v4057
        %v4059 = vrcp.pop %v4004
        %v4060 = vmul.f32 1.0, %v4059
        %v4061 = vrcp.pop %v4005
        %v4062 = vmul.f32 1.0, %v4061
        %v4063 = vrcp.pop %v4006
        %v4064 = vmul.f32 1.0, %v4063
        %v4065 = vrcp.pop %v4007
        %v4066 = vmul.f32 1.0, %v4065
        %v4067 = vrcp.pop %v4008
        %v4068 = vmul.f32 1.0, %v4067
        %v4069 = vrcp.pop %v4009
        %v4070 = vmul.f32 1.0, %v4069
        %v4071 = vrcp.pop %v4010
        %v4072 = vmul.f32 1.0, %v4071
        %v4073 = vrcp.pop %v4011
        %v4074 = vmul.f32 1.0, %v4073
        %v4075 = vrcp.pop %v4012
        %v4076 = vmul.f32 1.0, %v4075
        %v4077 = vmul.f32 %v3853, %v4014
        %v4078 = vmul.f32 %v3854, %v4016
        %v4079 = vmul.f32 %v3855, %v4018
        %v4080 = vmul.f32 %v3856, %v4020
        %v4081 = vmul.f32 %v3857, %v4022
        %v4082 = vmul.f32 %v3858, %v4024
        %v4083 = vmul.f32 %v3859, %v4026
        %v4084 = vmul.f32 %v3860, %v4028
        %v4085 = vmul.f32 %v3861, %v4030
        %v4086 = vmul.f32 %v3862, %v4032
        %v4087 = vmul.f32 %v3863, %v4034
        %v4088 = vmul.f32 %v3864, %v4036
        %v4089 = vmul.f32 %v3865, %v4038
        %v4090 = vmul.f32 %v3866, %v4040
        %v4091 = vmul.f32 %v3867, %v4042
        %v4092 = vmul.f32 %v3868, %v4044
        %v4093 = vmul.f32 %v3869, %v4046
        %v4094 = vmul.f32 %v3870, %v4048
        %v4095 = vmul.f32 %v3871, %v4050
        %v4096 = vmul.f32 %v3872, %v4052
        %v4097 = vmul.f32 %v3873, %v4054
        %v4098 = vmul.f32 %v3874, %v4056
        %v4099 = vmul.f32 %v3875, %v4058
        %v4100 = vmul.f32 %v3876, %v4060
        %v4101 = vmul.f32 %v3877, %v4062
        %v4102 = vmul.f32 %v3878, %v4064
        %v4103 = vmul.f32 %v3879, %v4066
        %v4104 = vmul.f32 %v3880, %v4068
        %v4105 = vmul.f32 %v3881, %v4070
        %v4106 = vmul.f32 %v3882, %v4072
        %v4107 = vmul.f32 %v3883, %v4074
        %v4108 = vmul.f32 %v3884, %v4076
        %v4109 = vpack.c.bf16 %v4078, %v4077
        %v4110 = vpack.c.bf16 %v4080, %v4079
        %v4111 = vpack.c.bf16 %v4082, %v4081
        %v4112 = vpack.c.bf16 %v4084, %v4083
        %v4113 = vpack.c.bf16 %v4086, %v4085
        %v4114 = vpack.c.bf16 %v4088, %v4087
        %v4115 = vpack.c.bf16 %v4090, %v4089
        %v4116 = vpack.c.bf16 %v4092, %v4091
        %v4117 = vpack.c.bf16 %v4094, %v4093
        %v4118 = vpack.c.bf16 %v4096, %v4095
        %v4119 = vpack.c.bf16 %v4098, %v4097
        %v4120 = vpack.c.bf16 %v4100, %v4099
        %v4121 = vpack.c.bf16 %v4102, %v4101
        %v4122 = vpack.c.bf16 %v4104, %v4103
        %v4123 = vpack.c.bf16 %v4106, %v4105
        %v4124 = vpack.c.bf16 %v4108, %v4107
        %v4125 = vld [vmem:[#allocation15] sm:$0xf]
        %v4126 = vld [vmem:[#allocation15 + $0x4] sm:$0xf]
        %v4127 = vld [vmem:[#allocation15 + $0x8] sm:$0xf]
        %v4128 = vld [vmem:[#allocation15 + $0xc] sm:$0xf]
        %v4129 = vld [vmem:[#allocation15 + $0x10] sm:$0xf]
        %v4130 = vld [vmem:[#allocation15 + $0x14] sm:$0xf]
        %v4131 = vld [vmem:[#allocation15 + $0x18] sm:$0xf]
        %v4132 = vld [vmem:[#allocation15 + $0x1c] sm:$0xf]
        %v4133 = vld [vmem:[#allocation15 + $0x20] sm:$0xf]
        %v4134 = vld [vmem:[#allocation15 + $0x24] sm:$0xf]
        %v4135 = vld [vmem:[#allocation15 + $0x28] sm:$0xf]
        %v4136 = vld [vmem:[#allocation15 + $0x2c] sm:$0xf]
        %v4137 = vld [vmem:[#allocation15 + $0x30] sm:$0xf]
        %v4138 = vld [vmem:[#allocation15 + $0x34] sm:$0xf]
        %v4139 = vld [vmem:[#allocation15 + $0x38] sm:$0xf]
        %v4140 = vld [vmem:[#allocation15 + $0x3c] sm:$0xf]
        %v4141 = vld [vmem:[#allocation17] sm:$0x1]
        %v4143 = vlaneseq
        %v4144 = vshrl.u32 %v4143, 7
        %v4145 = vsub.s32 0, %v4144
        %v4146 = vrot.slane %v4141, %v4145
        %v4164 = vunpack.c.l.b16 %v4125
        %v4165 = vunpack.c.l.b16 %v4126
        %v4166 = vunpack.c.l.b16 %v4127
        %v4167 = vunpack.c.l.b16 %v4128
        %v4168 = vunpack.c.l.b16 %v4129
        %v4169 = vunpack.c.l.b16 %v4130
        %v4170 = vunpack.c.l.b16 %v4131
        %v4171 = vunpack.c.l.b16 %v4132
        %v4172 = vunpack.c.l.b16 %v4133
        %v4173 = vunpack.c.l.b16 %v4134
        %v4174 = vunpack.c.l.b16 %v4135
        %v4175 = vunpack.c.l.b16 %v4136
        %v4176 = vunpack.c.l.b16 %v4137
        %v4177 = vunpack.c.l.b16 %v4138
        %v4178 = vunpack.c.l.b16 %v4139
        %v4179 = vunpack.c.l.b16 %v4140
        %v4180 = vpack.c.b16 %v4165, %v4164
        %v4181 = vpack.c.b16 %v4167, %v4166
        %v4182 = vpack.c.b16 %v4169, %v4168
        %v4183 = vpack.c.b16 %v4171, %v4170
        %v4184 = vpack.c.b16 %v4173, %v4172
        %v4185 = vpack.c.b16 %v4175, %v4174
        %v4186 = vpack.c.b16 %v4177, %v4176
        %v4187 = vpack.c.b16 %v4179, %v4178
        %4196 = vmatprep.subr.bf16.mxu0 0
        %4197 = vmatpush1.bf16.msra.mxu0 %v4187
        %4198 = vmatprep.subr.bf16.mxu0 0
        %4199 = vmatpush1.bf16.msra.mxu0 %v4186
        %4200 = vmatprep.subr.bf16.mxu0 0
        %4201 = vmatpush1.bf16.msra.mxu0 %v4185
        %4202 = vmatprep.subr.bf16.mxu0 0
        %4203 = vmatpush1.bf16.msra.mxu0 %v4184
        %4204 = vmatprep.subr.bf16.mxu0 0
        %4205 = vmatpush1.bf16.msra.mxu0 %v4183
        %4206 = vmatprep.subr.bf16.mxu0 0
        %4207 = vmatpush1.bf16.msra.mxu0 %v4182
        %4208 = vmatprep.subr.bf16.mxu0 0
        %4209 = vmatpush1.bf16.msra.mxu0 %v4181
        %4210 = vmatprep.subr.bf16.mxu0 0
        %4211 = vmatpush1.bf16.msra.mxu0 %v4180
        %4212 = vmatprep.subr.bf16.mxu0 0
        %4213 = vmatpush2.bf16.msra.mxu0 0
        %4214 = vmatprep.subr.bf16.mxu0 0
        %4215 = vmatpush2.bf16.msra.mxu0 0
        %4216 = vmatprep.subr.bf16.mxu0 0
        %4217 = vmatpush2.bf16.msra.mxu0 0
        %4218 = vmatprep.subr.bf16.mxu0 0
        %4219 = vmatpush2.bf16.msra.mxu0 0
        %4220 = vmatprep.subr.bf16.mxu0 0
        %4221 = vmatpush2.bf16.msra.mxu0 0
        %4222 = vmatprep.subr.bf16.mxu0 0
        %4223 = vmatpush2.bf16.msra.mxu0 0
        %4224 = vmatprep.subr.bf16.mxu0 0
        %4225 = vmatpush2.bf16.msra.mxu0 0
        %4226 = vmatprep.subr.bf16.mxu0 0
        %4227 = vmatpush2.bf16.msra.mxu0 0
        %4228 = vmatprep.mubr.bf16.mxu0 0
        %4229 = vmatmul.mubr.bf16.gmra.mxu0 %v4109
        %v4230 = vpop.f32.mrf.mxu0
        %v4231 = vadd.f32 %v4146, %v4230
        %v4232 = vpop.f32.mrf.mxu0
        %v4233 = vpop.f32.mrf.mxu0
        %v4234 = vadd.f32 %v4146, %v4233
        %v4235 = vpop.f32.mrf.mxu0
        %4236 = vmatprep.mubr.bf16.mxu0 0
        %4237 = vmatmul.mubr.bf16.gmra.mxu0 %v4110
        %v4238 = vpop.f32.mrf.mxu0
        %v4239 = vadd.f32 %v4146, %v4238
        %v4240 = vpop.f32.mrf.mxu0
        %v4241 = vpop.f32.mrf.mxu0
        %v4242 = vadd.f32 %v4146, %v4241
        %v4243 = vpop.f32.mrf.mxu0
        %4244 = vmatprep.mubr.bf16.mxu0 0
        %4245 = vmatmul.mubr.bf16.gmra.mxu0 %v4111
        %v4246 = vpop.f32.mrf.mxu0
        %v4247 = vadd.f32 %v4146, %v4246
        %v4248 = vpop.f32.mrf.mxu0
        %v4249 = vpop.f32.mrf.mxu0
        %v4250 = vadd.f32 %v4146, %v4249
        %v4251 = vpop.f32.mrf.mxu0
        %4252 = vmatprep.mubr.bf16.mxu0 0
        %4253 = vmatmul.mubr.bf16.gmra.mxu0 %v4112
        %v4254 = vpop.f32.mrf.mxu0
        %v4255 = vadd.f32 %v4146, %v4254
        %v4256 = vpop.f32.mrf.mxu0
        %v4257 = vpop.f32.mrf.mxu0
        %v4258 = vadd.f32 %v4146, %v4257
        %v4259 = vpop.f32.mrf.mxu0
        %4260 = vmatprep.mubr.bf16.mxu0 0
        %4261 = vmatmul.mubr.bf16.gmra.mxu0 %v4113
        %v4262 = vpop.f32.mrf.mxu0
        %v4263 = vadd.f32 %v4146, %v4262
        %v4264 = vpop.f32.mrf.mxu0
        %v4265 = vpop.f32.mrf.mxu0
        %v4266 = vadd.f32 %v4146, %v4265
        %v4267 = vpop.f32.mrf.mxu0
        %4268 = vmatprep.mubr.bf16.mxu0 0
        %4269 = vmatmul.mubr.bf16.gmra.mxu0 %v4114
        %v4270 = vpop.f32.mrf.mxu0
        %v4271 = vadd.f32 %v4146, %v4270
        %v4272 = vpop.f32.mrf.mxu0
        %v4273 = vpop.f32.mrf.mxu0
        %v4274 = vadd.f32 %v4146, %v4273
        %v4275 = vpop.f32.mrf.mxu0
        %4276 = vmatprep.mubr.bf16.mxu0 0
        %4277 = vmatmul.mubr.bf16.gmra.mxu0 %v4115
        %v4278 = vpop.f32.mrf.mxu0
        %v4279 = vadd.f32 %v4146, %v4278
        %v4280 = vpop.f32.mrf.mxu0
        %v4281 = vpop.f32.mrf.mxu0
        %v4282 = vadd.f32 %v4146, %v4281
        %v4283 = vpop.f32.mrf.mxu0
        %4284 = vmatprep.mubr.bf16.mxu0 0
        %4285 = vmatmul.mubr.bf16.gmra.mxu0 %v4116
        %v4286 = vpop.f32.mrf.mxu0
        %v4287 = vadd.f32 %v4146, %v4286
        %v4288 = vpop.f32.mrf.mxu0
        %v4289 = vpop.f32.mrf.mxu0
        %v4290 = vadd.f32 %v4146, %v4289
        %v4291 = vpop.f32.mrf.mxu0
        %4292 = vmatprep.mubr.bf16.mxu0 0
        %4293 = vmatmul.mubr.bf16.gmra.mxu0 %v4117
        %v4294 = vpop.f32.mrf.mxu0
        %v4295 = vadd.f32 %v4146, %v4294
        %v4296 = vpop.f32.mrf.mxu0
        %v4297 = vpop.f32.mrf.mxu0
        %v4298 = vadd.f32 %v4146, %v4297
        %v4299 = vpop.f32.mrf.mxu0
        %4300 = vmatprep.mubr.bf16.mxu0 0
        %4301 = vmatmul.mubr.bf16.gmra.mxu0 %v4118
        %v4302 = vpop.f32.mrf.mxu0
        %v4303 = vadd.f32 %v4146, %v4302
        %v4304 = vpop.f32.mrf.mxu0
        %v4305 = vpop.f32.mrf.mxu0
        %v4306 = vadd.f32 %v4146, %v4305
        %v4307 = vpop.f32.mrf.mxu0
        %4308 = vmatprep.mubr.bf16.mxu0 0
        %4309 = vmatmul.mubr.bf16.gmra.mxu0 %v4119
        %v4310 = vpop.f32.mrf.mxu0
        %v4311 = vadd.f32 %v4146, %v4310
        %v4312 = vpop.f32.mrf.mxu0
        %v4313 = vpop.f32.mrf.mxu0
        %v4314 = vadd.f32 %v4146, %v4313
        %v4315 = vpop.f32.mrf.mxu0
        %4316 = vmatprep.mubr.bf16.mxu0 0
        %4317 = vmatmul.mubr.bf16.gmra.mxu0 %v4120
        %v4318 = vpop.f32.mrf.mxu0
        %v4319 = vadd.f32 %v4146, %v4318
        %v4320 = vpop.f32.mrf.mxu0
        %v4321 = vpop.f32.mrf.mxu0
        %v4322 = vadd.f32 %v4146, %v4321
        %v4323 = vpop.f32.mrf.mxu0
        %4324 = vmatprep.mubr.bf16.mxu0 0
        %4325 = vmatmul.mubr.bf16.gmra.mxu0 %v4121
        %v4326 = vpop.f32.mrf.mxu0
        %v4327 = vadd.f32 %v4146, %v4326
        %v4328 = vpop.f32.mrf.mxu0
        %v4329 = vpop.f32.mrf.mxu0
        %v4330 = vadd.f32 %v4146, %v4329
        %v4331 = vpop.f32.mrf.mxu0
        %4332 = vmatprep.mubr.bf16.mxu0 0
        %4333 = vmatmul.mubr.bf16.gmra.mxu0 %v4122
        %v4334 = vpop.f32.mrf.mxu0
        %v4335 = vadd.f32 %v4146, %v4334
        %v4336 = vpop.f32.mrf.mxu0
        %v4337 = vpop.f32.mrf.mxu0
        %v4338 = vadd.f32 %v4146, %v4337
        %v4339 = vpop.f32.mrf.mxu0
        %4340 = vmatprep.mubr.bf16.mxu0 0
        %4341 = vmatmul.mubr.bf16.gmra.mxu0 %v4123
        %v4342 = vpop.f32.mrf.mxu0
        %v4343 = vadd.f32 %v4146, %v4342
        %v4344 = vpop.f32.mrf.mxu0
        %v4345 = vpop.f32.mrf.mxu0
        %v4346 = vadd.f32 %v4146, %v4345
        %v4347 = vpop.f32.mrf.mxu0
        %4348 = vmatprep.mubr.bf16.mxu0 0
        %4349 = vmatmul.mubr.bf16.gmra.mxu0 %v4124
        %v4350 = vpop.f32.mrf.mxu0
        %v4351 = vadd.f32 %v4146, %v4350
        %v4352 = vpop.f32.mrf.mxu0
        %v4353 = vpop.f32.mrf.mxu0
        %v4354 = vadd.f32 %v4146, %v4353
        %v4355 = vpop.f32.mrf.mxu0
        %4356 = vdwg.mxu0
        %v4357 = vxor.u32 %v4231, 2147483648
        %v4358 = vxor.u32 %v4234, 2147483648
        %v4359 = vxor.u32 %v4239, 2147483648
        %v4360 = vxor.u32 %v4242, 2147483648
        %v4361 = vxor.u32 %v4247, 2147483648
        %v4362 = vxor.u32 %v4250, 2147483648
        %v4363 = vxor.u32 %v4255, 2147483648
        %v4364 = vxor.u32 %v4258, 2147483648
        %v4365 = vxor.u32 %v4263, 2147483648
        %v4366 = vxor.u32 %v4266, 2147483648
        %v4367 = vxor.u32 %v4271, 2147483648
        %v4368 = vxor.u32 %v4274, 2147483648
        %v4369 = vxor.u32 %v4279, 2147483648
        %v4370 = vxor.u32 %v4282, 2147483648
        %v4371 = vxor.u32 %v4287, 2147483648
        %v4372 = vxor.u32 %v4290, 2147483648
        %v4373 = vxor.u32 %v4295, 2147483648
        %v4374 = vxor.u32 %v4298, 2147483648
        %v4375 = vxor.u32 %v4303, 2147483648
        %v4376 = vxor.u32 %v4306, 2147483648
        %v4377 = vxor.u32 %v4311, 2147483648
        %v4378 = vxor.u32 %v4314, 2147483648
        %v4379 = vxor.u32 %v4319, 2147483648
        %v4380 = vxor.u32 %v4322, 2147483648
        %v4381 = vxor.u32 %v4327, 2147483648
        %v4382 = vxor.u32 %v4330, 2147483648
        %v4383 = vxor.u32 %v4335, 2147483648
        %v4384 = vxor.u32 %v4338, 2147483648
        %v4385 = vxor.u32 %v4343, 2147483648
        %v4386 = vxor.u32 %v4346, 2147483648
        %v4387 = vxor.u32 %v4351, 2147483648
        %v4388 = vxor.u32 %v4354, 2147483648
        %v4389 = vmul.f32 %v4357, 1.442695
        %v4390 = vpow.pop %v4389
        %v4391 = vmul.f32 %v4358, 1.442695
        %v4392 = vpow.pop %v4391
        %v4393 = vmul.f32 %v4359, 1.442695
        %v4394 = vpow.pop %v4393
        %v4395 = vmul.f32 %v4360, 1.442695
        %v4396 = vpow.pop %v4395
        %v4397 = vmul.f32 %v4361, 1.442695
        %v4398 = vpow.pop %v4397
        %v4399 = vmul.f32 %v4362, 1.442695
        %v4400 = vpow.pop %v4399
        %v4401 = vmul.f32 %v4363, 1.442695
        %v4402 = vpow.pop %v4401
        %v4403 = vmul.f32 %v4364, 1.442695
        %v4404 = vpow.pop %v4403
        %v4405 = vmul.f32 %v4365, 1.442695
        %v4406 = vpow.pop %v4405
        %v4407 = vmul.f32 %v4366, 1.442695
        %v4408 = vpow.pop %v4407
        %v4409 = vmul.f32 %v4367, 1.442695
        %v4410 = vpow.pop %v4409
        %v4411 = vmul.f32 %v4368, 1.442695
        %v4412 = vpow.pop %v4411
        %v4413 = vmul.f32 %v4369, 1.442695
        %v4414 = vpow.pop %v4413
        %v4415 = vmul.f32 %v4370, 1.442695
        %v4416 = vpow.pop %v4415
        %v4417 = vmul.f32 %v4371, 1.442695
        %v4418 = vpow.pop %v4417
        %v4419 = vmul.f32 %v4372, 1.442695
        %v4420 = vpow.pop %v4419
        %v4421 = vmul.f32 %v4373, 1.442695
        %v4422 = vpow.pop %v4421
        %v4423 = vmul.f32 %v4374, 1.442695
        %v4424 = vpow.pop %v4423
        %v4425 = vmul.f32 %v4375, 1.442695
        %v4426 = vpow.pop %v4425
        %v4427 = vmul.f32 %v4376, 1.442695
        %v4428 = vpow.pop %v4427
        %v4429 = vmul.f32 %v4377, 1.442695
        %v4430 = vpow.pop %v4429
        %v4431 = vmul.f32 %v4378, 1.442695
        %v4432 = vpow.pop %v4431
        %v4433 = vmul.f32 %v4379, 1.442695
        %v4434 = vpow.pop %v4433
        %v4435 = vmul.f32 %v4380, 1.442695
        %v4436 = vpow.pop %v4435
        %v4437 = vmul.f32 %v4381, 1.442695
        %v4438 = vpow.pop %v4437
        %v4439 = vmul.f32 %v4382, 1.442695
        %v4440 = vpow.pop %v4439
        %v4441 = vmul.f32 %v4383, 1.442695
        %v4442 = vpow.pop %v4441
        %v4443 = vmul.f32 %v4384, 1.442695
        %v4444 = vpow.pop %v4443
        %v4445 = vmul.f32 %v4385, 1.442695
        %v4446 = vpow.pop %v4445
        %v4447 = vmul.f32 %v4386, 1.442695
        %v4448 = vpow.pop %v4447
        %v4449 = vmul.f32 %v4387, 1.442695
        %v4450 = vpow.pop %v4449
        %v4451 = vmul.f32 %v4388, 1.442695
        %v4452 = vpow.pop %v4451
        %v4453 = vadd.f32 %v4390, 1.0
        %v4454 = vadd.f32 %v4392, 1.0
        %v4455 = vadd.f32 %v4394, 1.0
        %v4456 = vadd.f32 %v4396, 1.0
        %v4457 = vadd.f32 %v4398, 1.0
        %v4458 = vadd.f32 %v4400, 1.0
        %v4459 = vadd.f32 %v4402, 1.0
        %v4460 = vadd.f32 %v4404, 1.0
        %v4461 = vadd.f32 %v4406, 1.0
        %v4462 = vadd.f32 %v4408, 1.0
        %v4463 = vadd.f32 %v4410, 1.0
        %v4464 = vadd.f32 %v4412, 1.0
        %v4465 = vadd.f32 %v4414, 1.0
        %v4466 = vadd.f32 %v4416, 1.0
        %v4467 = vadd.f32 %v4418, 1.0
        %v4468 = vadd.f32 %v4420, 1.0
        %v4469 = vadd.f32 %v4422, 1.0
        %v4470 = vadd.f32 %v4424, 1.0
        %v4471 = vadd.f32 %v4426, 1.0
        %v4472 = vadd.f32 %v4428, 1.0
        %v4473 = vadd.f32 %v4430, 1.0
        %v4474 = vadd.f32 %v4432, 1.0
        %v4475 = vadd.f32 %v4434, 1.0
        %v4476 = vadd.f32 %v4436, 1.0
        %v4477 = vadd.f32 %v4438, 1.0
        %v4478 = vadd.f32 %v4440, 1.0
        %v4479 = vadd.f32 %v4442, 1.0
        %v4480 = vadd.f32 %v4444, 1.0
        %v4481 = vadd.f32 %v4446, 1.0
        %v4482 = vadd.f32 %v4448, 1.0
        %v4483 = vadd.f32 %v4450, 1.0
        %v4484 = vadd.f32 %v4452, 1.0
        %v4485 = vrcp.pop %v4453
        %v4486 = vmul.f32 1.0, %v4485
        %v4487 = vrcp.pop %v4454
        %v4488 = vmul.f32 1.0, %v4487
        %v4489 = vrcp.pop %v4455
        %v4490 = vmul.f32 1.0, %v4489
        %v4491 = vrcp.pop %v4456
        %v4492 = vmul.f32 1.0, %v4491
        %v4493 = vrcp.pop %v4457
        %v4494 = vmul.f32 1.0, %v4493
        %v4495 = vrcp.pop %v4458
        %v4496 = vmul.f32 1.0, %v4495
        %v4497 = vrcp.pop %v4459
        %v4498 = vmul.f32 1.0, %v4497
        %v4499 = vrcp.pop %v4460
        %v4500 = vmul.f32 1.0, %v4499
        %v4501 = vrcp.pop %v4461
        %v4502 = vmul.f32 1.0, %v4501
        %v4503 = vrcp.pop %v4462
        %v4504 = vmul.f32 1.0, %v4503
        %v4505 = vrcp.pop %v4463
        %v4506 = vmul.f32 1.0, %v4505
        %v4507 = vrcp.pop %v4464
        %v4508 = vmul.f32 1.0, %v4507
        %v4509 = vrcp.pop %v4465
        %v4510 = vmul.f32 1.0, %v4509
        %v4511 = vrcp.pop %v4466
        %v4512 = vmul.f32 1.0, %v4511
        %v4513 = vrcp.pop %v4467
        %v4514 = vmul.f32 1.0, %v4513
        %v4515 = vrcp.pop %v4468
        %v4516 = vmul.f32 1.0, %v4515
        %v4517 = vrcp.pop %v4469
        %v4518 = vmul.f32 1.0, %v4517
        %v4519 = vrcp.pop %v4470
        %v4520 = vmul.f32 1.0, %v4519
        %v4521 = vrcp.pop %v4471
        %v4522 = vmul.f32 1.0, %v4521
        %v4523 = vrcp.pop %v4472
        %v4524 = vmul.f32 1.0, %v4523
        %v4525 = vrcp.pop %v4473
        %v4526 = vmul.f32 1.0, %v4525
        %v4527 = vrcp.pop %v4474
        %v4528 = vmul.f32 1.0, %v4527
        %v4529 = vrcp.pop %v4475
        %v4530 = vmul.f32 1.0, %v4529
        %v4531 = vrcp.pop %v4476
        %v4532 = vmul.f32 1.0, %v4531
        %v4533 = vrcp.pop %v4477
        %v4534 = vmul.f32 1.0, %v4533
        %v4535 = vrcp.pop %v4478
        %v4536 = vmul.f32 1.0, %v4535
        %v4537 = vrcp.pop %v4479
        %v4538 = vmul.f32 1.0, %v4537
        %v4539 = vrcp.pop %v4480
        %v4540 = vmul.f32 1.0, %v4539
        %v4541 = vrcp.pop %v4481
        %v4542 = vmul.f32 1.0, %v4541
        %v4543 = vrcp.pop %v4482
        %v4544 = vmul.f32 1.0, %v4543
        %v4545 = vrcp.pop %v4483
        %v4546 = vmul.f32 1.0, %v4545
        %v4547 = vrcp.pop %v4484
        %v4548 = vmul.f32 1.0, %v4547
        %v4549 = vmul.f32 %v4231, %v4486
        %v4550 = vmul.f32 %v4234, %v4488
        %v4551 = vmul.f32 %v4239, %v4490
        %v4552 = vmul.f32 %v4242, %v4492
        %v4553 = vmul.f32 %v4247, %v4494
        %v4554 = vmul.f32 %v4250, %v4496
        %v4555 = vmul.f32 %v4255, %v4498
        %v4556 = vmul.f32 %v4258, %v4500
        %v4557 = vmul.f32 %v4263, %v4502
        %v4558 = vmul.f32 %v4266, %v4504
        %v4559 = vmul.f32 %v4271, %v4506
        %v4560 = vmul.f32 %v4274, %v4508
        %v4561 = vmul.f32 %v4279, %v4510
        %v4562 = vmul.f32 %v4282, %v4512
        %v4563 = vmul.f32 %v4287, %v4514
        %v4564 = vmul.f32 %v4290, %v4516
        %v4565 = vmul.f32 %v4295, %v4518
        %v4566 = vmul.f32 %v4298, %v4520
        %v4567 = vmul.f32 %v4303, %v4522
        %v4568 = vmul.f32 %v4306, %v4524
        %v4569 = vmul.f32 %v4311, %v4526
        %v4570 = vmul.f32 %v4314, %v4528
        %v4571 = vmul.f32 %v4319, %v4530
        %v4572 = vmul.f32 %v4322, %v4532
        %v4573 = vmul.f32 %v4327, %v4534
        %v4574 = vmul.f32 %v4330, %v4536
        %v4575 = vmul.f32 %v4335, %v4538
        %v4576 = vmul.f32 %v4338, %v4540
        %v4577 = vmul.f32 %v4343, %v4542
        %v4578 = vmul.f32 %v4346, %v4544
        %v4579 = vmul.f32 %v4351, %v4546
        %v4580 = vmul.f32 %v4354, %v4548
        %4581 = vst [vmem:[#allocation2 + $0x10] sm:$0xff] %v4549
        %4582 = vst [vmem:[#allocation2 + $0x18] sm:$0xff] %v4550
        %4583 = vst [vmem:[#allocation2 + $0x20] sm:$0xff] %v4551
        %4584 = vst [vmem:[#allocation2 + $0x28] sm:$0xff] %v4552
        %4585 = vst [vmem:[#allocation2 + $0x30] sm:$0xff] %v4553
        %4586 = vst [vmem:[#allocation2 + $0x38] sm:$0xff] %v4554
        %4587 = vst [vmem:[#allocation2 + $0x40] sm:$0xff] %v4555
        %4588 = vst [vmem:[#allocation2 + $0x48] sm:$0xff] %v4556
        %4589 = vst [vmem:[#allocation2 + $0x50] sm:$0xff] %v4557
        %4590 = vst [vmem:[#allocation2 + $0x58] sm:$0xff] %v4558
        %4591 = vst [vmem:[#allocation2 + $0x60] sm:$0xff] %v4559
        %4592 = vst [vmem:[#allocation2 + $0x68] sm:$0xff] %v4560
        %4593 = vst [vmem:[#allocation2 + $0x70] sm:$0xff] %v4561
        %4594 = vst [vmem:[#allocation2 + $0x78] sm:$0xff] %v4562
        %4595 = vst [vmem:[#allocation2 + $0x80] sm:$0xff] %v4563
        %4596 = vst [vmem:[#allocation2 + $0x88] sm:$0xff] %v4564
        %4597 = vst [vmem:[#allocation2 + $0x90] sm:$0xff] %v4565
        %4598 = vst [vmem:[#allocation2 + $0x98] sm:$0xff] %v4566
        %4599 = vst [vmem:[#allocation2 + $0xa0] sm:$0xff] %v4567
        %4600 = vst [vmem:[#allocation2 + $0xa8] sm:$0xff] %v4568
        %4601 = vst [vmem:[#allocation2 + $0xb0] sm:$0xff] %v4569
        %4602 = vst [vmem:[#allocation2 + $0xb8] sm:$0xff] %v4570
        %4603 = vst [vmem:[#allocation2 + $0xc0] sm:$0xff] %v4571
        %4604 = vst [vmem:[#allocation2 + $0xc8] sm:$0xff] %v4572
        %4605 = vst [vmem:[#allocation2 + $0xd0] sm:$0xff] %v4573
        %4606 = vst [vmem:[#allocation2 + $0xd8] sm:$0xff] %v4574
        %4607 = vst [vmem:[#allocation2 + $0xe0] sm:$0xff] %v4575
        %4608 = vst [vmem:[#allocation2 + $0xe8] sm:$0xff] %v4576
        %4609 = vst [vmem:[#allocation2 + $0xf0] sm:$0xff] %v4577
        %4610 = vst [vmem:[#allocation2 + $0xf8] sm:$0xff] %v4578
        %4611 = vst [vmem:[#allocation2 + $0x100] sm:$0xff] %v4579
        %4612 = vst [vmem:[#allocation2 + $0x108] sm:$0xff] %v4580
        %v4613 = vld [vmem:[#allocation2] sm:$0xff]
        %v4614 = vld [vmem:[#allocation2 + $0x8] sm:$0xff]
        %v4615 = vld [vmem:[#allocation2 + $0x10] sm:$0xff]
        %v4616 = vld [vmem:[#allocation2 + $0x18] sm:$0xff]
        %v4617 = vld [vmem:[#allocation2 + $0x20] sm:$0xff]
        %v4618 = vld [vmem:[#allocation2 + $0x28] sm:$0xff]
        %v4619 = vld [vmem:[#allocation2 + $0x30] sm:$0xff]
        %v4620 = vld [vmem:[#allocation2 + $0x38] sm:$0xff]
        %v4621 = vld [vmem:[#allocation2 + $0x40] sm:$0xff]
        %v4622 = vld [vmem:[#allocation2 + $0x48] sm:$0xff]
        %v4623 = vld [vmem:[#allocation2 + $0x50] sm:$0xff]
        %v4624 = vld [vmem:[#allocation2 + $0x58] sm:$0xff]
        %v4625 = vld [vmem:[#allocation2 + $0x60] sm:$0xff]
        %v4626 = vld [vmem:[#allocation2 + $0x68] sm:$0xff]
        %v4627 = vld [vmem:[#allocation2 + $0x70] sm:$0xff]
        %v4628 = vld [vmem:[#allocation2 + $0x78] sm:$0xff]
        %v4629 = vld [vmem:[#allocation2 + $0x80] sm:$0xff]
        %v4630 = vld [vmem:[#allocation2 + $0x88] sm:$0xff]
        %v4631 = vld [vmem:[#allocation2 + $0x90] sm:$0xff]
        %v4632 = vld [vmem:[#allocation2 + $0x98] sm:$0xff]
        %v4633 = vld [vmem:[#allocation2 + $0xa0] sm:$0xff]
        %v4634 = vld [vmem:[#allocation2 + $0xa8] sm:$0xff]
        %v4635 = vld [vmem:[#allocation2 + $0xb0] sm:$0xff]
        %v4636 = vld [vmem:[#allocation2 + $0xb8] sm:$0xff]
        %v4637 = vld [vmem:[#allocation2 + $0xc0] sm:$0xff]
        %v4638 = vld [vmem:[#allocation2 + $0xc8] sm:$0xff]
        %v4639 = vld [vmem:[#allocation2 + $0xd0] sm:$0xff]
        %v4640 = vld [vmem:[#allocation2 + $0xd8] sm:$0xff]
        %v4641 = vld [vmem:[#allocation2 + $0xe0] sm:$0xff]
        %v4642 = vld [vmem:[#allocation2 + $0xe8] sm:$0xff]
        %v4643 = vld [vmem:[#allocation2 + $0xf0] sm:$0xff]
        %v4644 = vld [vmem:[#allocation2 + $0xf8] sm:$0xff]
        %v4645 = vld [vmem:[%s9] sm:$0x1]
        %v4646 = vlaneseq
        %v4647 = vshrl.u32 %v4646, 7
        %v4648 = vsub.s32 0, %v4647
        %v4649 = vrot.slane %v4645, %v4648
        %v4650 = vmul.f32 %v4613, %v4649
        %v4651 = vmul.f32 %v4614, %v4649
        %v4652 = vmul.f32 %v4615, %v4649
        %v4653 = vmul.f32 %v4616, %v4649
        %v4654 = vmul.f32 %v4617, %v4649
        %v4655 = vmul.f32 %v4618, %v4649
        %v4656 = vmul.f32 %v4619, %v4649
        %v4657 = vmul.f32 %v4620, %v4649
        %v4658 = vmul.f32 %v4621, %v4649
        %v4659 = vmul.f32 %v4622, %v4649
        %v4660 = vmul.f32 %v4623, %v4649
        %v4661 = vmul.f32 %v4624, %v4649
        %v4662 = vmul.f32 %v4625, %v4649
        %v4663 = vmul.f32 %v4626, %v4649
        %v4664 = vmul.f32 %v4627, %v4649
        %v4665 = vmul.f32 %v4628, %v4649
        %v4666 = vmul.f32 %v4629, %v4649
        %v4667 = vmul.f32 %v4630, %v4649
        %v4668 = vmul.f32 %v4631, %v4649
        %v4669 = vmul.f32 %v4632, %v4649
        %v4670 = vmul.f32 %v4633, %v4649
        %v4671 = vmul.f32 %v4634, %v4649
        %v4672 = vmul.f32 %v4635, %v4649
        %v4673 = vmul.f32 %v4636, %v4649
        %v4674 = vmul.f32 %v4637, %v4649
        %v4675 = vmul.f32 %v4638, %v4649
        %v4676 = vmul.f32 %v4639, %v4649
        %v4677 = vmul.f32 %v4640, %v4649
        %v4678 = vmul.f32 %v4641, %v4649
        %v4679 = vmul.f32 %v4642, %v4649
        %v4680 = vmul.f32 %v4643, %v4649
        %v4681 = vmul.f32 %v4644, %v4649
        %v4682 = vld [vmem:[#allocation2 + $0x100] sm:$0xff]
        %v4683 = vld [vmem:[#allocation2 + $0x108] sm:$0xff]
        %v4684 = vld [vmem:[%s9 + $0x3] sm:$0x1]
        %v4685 = vlaneseq
        %v4686 = vshrl.u32 %v4685, 7
        %v4687 = vsub.s32 0, %v4686
        %v4688 = vrot.slane %v4684, %v4687
        %v4689 = vmul.f32 %v4615, %v4688
        %v4690 = vmul.f32 %v4616, %v4688
        %v4691 = vmul.f32 %v4617, %v4688
        %v4692 = vmul.f32 %v4618, %v4688
        %v4693 = vmul.f32 %v4619, %v4688
        %v4694 = vmul.f32 %v4620, %v4688
        %v4695 = vmul.f32 %v4621, %v4688
        %v4696 = vmul.f32 %v4622, %v4688
        %v4697 = vmul.f32 %v4623, %v4688
        %v4698 = vmul.f32 %v4624, %v4688
        %v4699 = vmul.f32 %v4625, %v4688
        %v4700 = vmul.f32 %v4626, %v4688
        %v4701 = vmul.f32 %v4627, %v4688
        %v4702 = vmul.f32 %v4628, %v4688
        %v4703 = vmul.f32 %v4629, %v4688
        %v4704 = vmul.f32 %v4630, %v4688
        %v4705 = vmul.f32 %v4631, %v4688
        %v4706 = vmul.f32 %v4632, %v4688
        %v4707 = vmul.f32 %v4633, %v4688
        %v4708 = vmul.f32 %v4634, %v4688
        %v4709 = vmul.f32 %v4635, %v4688
        %v4710 = vmul.f32 %v4636, %v4688
        %v4711 = vmul.f32 %v4637, %v4688
        %v4712 = vmul.f32 %v4638, %v4688
        %v4713 = vmul.f32 %v4639, %v4688
        %v4714 = vmul.f32 %v4640, %v4688
        %v4715 = vmul.f32 %v4641, %v4688
        %v4716 = vmul.f32 %v4642, %v4688
        %v4717 = vmul.f32 %v4643, %v4688
        %v4718 = vmul.f32 %v4644, %v4688
        %v4719 = vmul.f32 %v4682, %v4688
        %v4720 = vmul.f32 %v4683, %v4688
        %v4721 = vadd.f32 %v4650, %v4689
        %v4722 = vadd.f32 %v4651, %v4690
        %v4723 = vadd.f32 %v4652, %v4691
        %v4724 = vadd.f32 %v4653, %v4692
        %v4725 = vadd.f32 %v4654, %v4693
        %v4726 = vadd.f32 %v4655, %v4694
        %v4727 = vadd.f32 %v4656, %v4695
        %v4728 = vadd.f32 %v4657, %v4696
        %v4729 = vadd.f32 %v4658, %v4697
        %v4730 = vadd.f32 %v4659, %v4698
        %v4731 = vadd.f32 %v4660, %v4699
        %v4732 = vadd.f32 %v4661, %v4700
        %v4733 = vadd.f32 %v4662, %v4701
        %v4734 = vadd.f32 %v4663, %v4702
        %v4735 = vadd.f32 %v4664, %v4703
        %v4736 = vadd.f32 %v4665, %v4704
        %v4737 = vadd.f32 %v4666, %v4705
        %v4738 = vadd.f32 %v4667, %v4706
        %v4739 = vadd.f32 %v4668, %v4707
        %v4740 = vadd.f32 %v4669, %v4708
        %v4741 = vadd.f32 %v4670, %v4709
        %v4742 = vadd.f32 %v4671, %v4710
        %v4743 = vadd.f32 %v4672, %v4711
        %v4744 = vadd.f32 %v4673, %v4712
        %v4745 = vadd.f32 %v4674, %v4713
        %v4746 = vadd.f32 %v4675, %v4714
        %v4747 = vadd.f32 %v4676, %v4715
        %v4748 = vadd.f32 %v4677, %v4716
        %v4749 = vadd.f32 %v4678, %v4717
        %v4750 = vadd.f32 %v4679, %v4718
        %v4751 = vadd.f32 %v4680, %v4719
        %v4752 = vadd.f32 %v4681, %v4720
        %v4753 = vld [vmem:[#allocation2 + $0x20] sm:$0xff]
        %v4754 = vld [vmem:[#allocation2 + $0x28] sm:$0xff]
        %v4755 = vld [vmem:[#allocation2 + $0x30] sm:$0xff]
        %v4756 = vld [vmem:[#allocation2 + $0x38] sm:$0xff]
        %v4757 = vld [vmem:[#allocation2 + $0x40] sm:$0xff]
        %v4758 = vld [vmem:[#allocation2 + $0x48] sm:$0xff]
        %v4759 = vld [vmem:[#allocation2 + $0x50] sm:$0xff]
        %v4760 = vld [vmem:[#allocation2 + $0x58] sm:$0xff]
        %v4761 = vld [vmem:[#allocation2 + $0x60] sm:$0xff]
        %v4762 = vld [vmem:[#allocation2 + $0x68] sm:$0xff]
        %v4763 = vld [vmem:[#allocation2 + $0x70] sm:$0xff]
        %v4764 = vld [vmem:[#allocation2 + $0x78] sm:$0xff]
        %v4765 = vld [vmem:[#allocation2 + $0x80] sm:$0xff]
        %v4766 = vld [vmem:[#allocation2 + $0x88] sm:$0xff]
        %v4767 = vld [vmem:[#allocation2 + $0x90] sm:$0xff]
        %v4768 = vld [vmem:[#allocation2 + $0x98] sm:$0xff]
        %v4769 = vld [vmem:[#allocation2 + $0xa0] sm:$0xff]
        %v4770 = vld [vmem:[#allocation2 + $0xa8] sm:$0xff]
        %v4771 = vld [vmem:[#allocation2 + $0xb0] sm:$0xff]
        %v4772 = vld [vmem:[#allocation2 + $0xb8] sm:$0xff]
        %v4773 = vld [vmem:[#allocation2 + $0xc0] sm:$0xff]
        %v4774 = vld [vmem:[#allocation2 + $0xc8] sm:$0xff]
        %v4775 = vld [vmem:[#allocation2 + $0xd0] sm:$0xff]
        %v4776 = vld [vmem:[#allocation2 + $0xd8] sm:$0xff]
        %v4777 = vld [vmem:[#allocation2 + $0xe0] sm:$0xff]
        %v4778 = vld [vmem:[#allocation2 + $0xe8] sm:$0xff]
        %v4779 = vld [vmem:[#allocation2 + $0xf0] sm:$0xff]
        %v4780 = vld [vmem:[#allocation2 + $0xf8] sm:$0xff]
        %v4781 = vld [vmem:[#allocation2 + $0x100] sm:$0xff]
        %v4782 = vld [vmem:[#allocation2 + $0x108] sm:$0xff]
        %v4783 = vld [vmem:[#allocation2 + $0x110] sm:$0xff]
        %v4784 = vld [vmem:[#allocation2 + $0x118] sm:$0xff]
        %v4785 = vld [vmem:[%s9 + $0x6] sm:$0x1]
        %v4786 = vlaneseq
        %v4787 = vshrl.u32 %v4786, 7
        %v4788 = vsub.s32 0, %v4787
        %v4789 = vrot.slane %v4785, %v4788
        %v4790 = vmul.f32 %v4753, %v4789
        %v4791 = vmul.f32 %v4754, %v4789
        %v4792 = vmul.f32 %v4755, %v4789
        %v4793 = vmul.f32 %v4756, %v4789
        %v4794 = vmul.f32 %v4757, %v4789
        %v4795 = vmul.f32 %v4758, %v4789
        %v4796 = vmul.f32 %v4759, %v4789
        %v4797 = vmul.f32 %v4760, %v4789
        %v4798 = vmul.f32 %v4761, %v4789
        %v4799 = vmul.f32 %v4762, %v4789
        %v4800 = vmul.f32 %v4763, %v4789
        %v4801 = vmul.f32 %v4764, %v4789
        %v4802 = vmul.f32 %v4765, %v4789
        %v4803 = vmul.f32 %v4766, %v4789
        %v4804 = vmul.f32 %v4767, %v4789
        %v4805 = vmul.f32 %v4768, %v4789
        %v4806 = vmul.f32 %v4769, %v4789
        %v4807 = vmul.f32 %v4770, %v4789
        %v4808 = vmul.f32 %v4771, %v4789
        %v4809 = vmul.f32 %v4772, %v4789
        %v4810 = vmul.f32 %v4773, %v4789
        %v4811 = vmul.f32 %v4774, %v4789
        %v4812 = vmul.f32 %v4775, %v4789
        %v4813 = vmul.f32 %v4776, %v4789
        %v4814 = vmul.f32 %v4777, %v4789
        %v4815 = vmul.f32 %v4778, %v4789
        %v4816 = vmul.f32 %v4779, %v4789
        %v4817 = vmul.f32 %v4780, %v4789
        %v4818 = vmul.f32 %v4781, %v4789
        %v4819 = vmul.f32 %v4782, %v4789
        %v4820 = vmul.f32 %v4783, %v4789
        %v4821 = vmul.f32 %v4784, %v4789
        %v4822 = vadd.f32 %v4721, %v4790
        %v4823 = vadd.f32 %v4722, %v4791
        %v4824 = vadd.f32 %v4723, %v4792
        %v4825 = vadd.f32 %v4724, %v4793
        %v4826 = vadd.f32 %v4725, %v4794
        %v4827 = vadd.f32 %v4726, %v4795
        %v4828 = vadd.f32 %v4727, %v4796
        %v4829 = vadd.f32 %v4728, %v4797
        %v4830 = vadd.f32 %v4729, %v4798
        %v4831 = vadd.f32 %v4730, %v4799
        %v4832 = vadd.f32 %v4731, %v4800
        %v4833 = vadd.f32 %v4732, %v4801
        %v4834 = vadd.f32 %v4733, %v4802
        %v4835 = vadd.f32 %v4734, %v4803
        %v4836 = vadd.f32 %v4735, %v4804
        %v4837 = vadd.f32 %v4736, %v4805
        %v4838 = vadd.f32 %v4737, %v4806
        %v4839 = vadd.f32 %v4738, %v4807
        %v4840 = vadd.f32 %v4739, %v4808
        %v4841 = vadd.f32 %v4740, %v4809
        %v4842 = vadd.f32 %v4741, %v4810
        %v4843 = vadd.f32 %v4742, %v4811
        %v4844 = vadd.f32 %v4743, %v4812
        %v4845 = vadd.f32 %v4744, %v4813
        %v4846 = vadd.f32 %v4745, %v4814
        %v4847 = vadd.f32 %v4746, %v4815
        %v4848 = vadd.f32 %v4747, %v4816
        %v4849 = vadd.f32 %v4748, %v4817
        %v4850 = vadd.f32 %v4749, %v4818
        %v4851 = vadd.f32 %v4750, %v4819
        %v4852 = vadd.f32 %v4751, %v4820
        %v4853 = vadd.f32 %v4752, %v4821
        %v4854 = vrot.slane %v4822, 7
        %v4855 = vrot.slane %v4823, 7
        %v4856 = vrot.slane %v4824, 7
        %v4857 = vrot.slane %v4825, 7
        %v4858 = vrot.slane %v4826, 7
        %v4859 = vrot.slane %v4827, 7
        %v4860 = vrot.slane %v4828, 7
        %v4861 = vrot.slane %v4829, 7
        %v4862 = vrot.slane %v4830, 7
        %v4863 = vrot.slane %v4831, 7
        %v4864 = vrot.slane %v4832, 7
        %v4865 = vrot.slane %v4833, 7
        %v4866 = vrot.slane %v4834, 7
        %v4867 = vrot.slane %v4835, 7
        %v4868 = vrot.slane %v4836, 7
        %v4869 = vrot.slane %v4837, 7
        %v4870 = vrot.slane %v4838, 7
        %v4871 = vrot.slane %v4839, 7
        %v4872 = vrot.slane %v4840, 7
        %v4873 = vrot.slane %v4841, 7
        %v4874 = vrot.slane %v4842, 7
        %v4875 = vrot.slane %v4843, 7
        %v4876 = vrot.slane %v4844, 7
        %v4877 = vrot.slane %v4845, 7
        %v4878 = vrot.slane %v4846, 7
        %v4879 = vrot.slane %v4847, 7
        %v4880 = vrot.slane %v4848, 7
        %v4881 = vrot.slane %v4849, 7
        %v4882 = vrot.slane %v4850, 7
        %v4883 = vrot.slane %v4851, 7
        %v4884 = vrot.slane %v4852, 7
        %v4885 = vrot.slane %v4853, 7
        %v4886 = vsel %vm1656, %v4884, %v4885
        %v4887 = vsel %vm1656, %v4883, %v4884
        %v4888 = vsel %vm1656, %v4882, %v4883
        %v4889 = vsel %vm1656, %v4881, %v4882
        %v4890 = vsel %vm1656, %v4880, %v4881
        %v4891 = vsel %vm1656, %v4879, %v4880
        %v4892 = vsel %vm1656, %v4878, %v4879
        %v4893 = vsel %vm1656, %v4877, %v4878
        %v4894 = vsel %vm1656, %v4876, %v4877
        %v4895 = vsel %vm1656, %v4875, %v4876
        %v4896 = vsel %vm1656, %v4874, %v4875
        %v4897 = vsel %vm1656, %v4873, %v4874
        %v4898 = vsel %vm1656, %v4872, %v4873
        %v4899 = vsel %vm1656, %v4871, %v4872
        %v4900 = vsel %vm1656, %v4870, %v4871
        %v4901 = vsel %vm1656, %v4869, %v4870
        %v4902 = vsel %vm1656, %v4868, %v4869
        %v4903 = vsel %vm1656, %v4867, %v4868
        %v4904 = vsel %vm1656, %v4866, %v4867
        %v4905 = vsel %vm1656, %v4865, %v4866
        %v4906 = vsel %vm1656, %v4864, %v4865
        %v4907 = vsel %vm1656, %v4863, %v4864
        %v4908 = vsel %vm1656, %v4862, %v4863
        %v4909 = vsel %vm1656, %v4861, %v4862
        %v4910 = vsel %vm1656, %v4860, %v4861
        %v4911 = vsel %vm1656, %v4859, %v4860
        %v4912 = vsel %vm1656, %v4858, %v4859
        %v4913 = vsel %vm1656, %v4857, %v4858
        %v4914 = vsel %vm1656, %v4856, %v4857
        %v4915 = vsel %vm1656, %v4855, %v4856
        %v4916 = vsel %vm1656, %v4854, %v4855
        %v4917 = vsel %vm1656, %v4885, %v4854
        %v4918 = vmul.f32 %v4917, %v1095
        %v4919 = vmul.f32 %v4916, %v1096
        %v4920 = vmul.f32 %v4915, %v1097
        %v4921 = vmul.f32 %v4914, %v1098
        %v4922 = vmul.f32 %v4913, %v1099
        %v4923 = vmul.f32 %v4912, %v1100
        %v4924 = vmul.f32 %v4911, %v1101
        %v4925 = vmul.f32 %v4910, %v1102
        %v4926 = vmul.f32 %v4909, %v1103
        %v4927 = vmul.f32 %v4908, %v1104
        %v4928 = vmul.f32 %v4907, %v1105
        %v4929 = vmul.f32 %v4906, %v1106
        %v4930 = vmul.f32 %v4905, %v1107
        %v4931 = vmul.f32 %v4904, %v1108
        %v4932 = vmul.f32 %v4903, %v1109
        %v4933 = vmul.f32 %v4902, %v1110
        %v4934 = vmul.f32 %v4901, %v1111
        %v4935 = vmul.f32 %v4900, %v1112
        %v4936 = vmul.f32 %v4899, %v1113
        %v4937 = vmul.f32 %v4898, %v1114
        %v4938 = vmul.f32 %v4897, %v1115
        %v4939 = vmul.f32 %v4896, %v1116
        %v4940 = vmul.f32 %v4895, %v1117
        %v4941 = vmul.f32 %v4894, %v1118
        %v4942 = vmul.f32 %v4893, %v1119
        %v4943 = vmul.f32 %v4892, %v1120
        %v4944 = vmul.f32 %v4891, %v1121
        %v4945 = vmul.f32 %v4890, %v1122
        %v4946 = vmul.f32 %v4889, %v1123
        %v4947 = vmul.f32 %v4888, %v1124
        %v4948 = vmul.f32 %v4887, %v1125
        %v4949 = vmul.f32 %v4886, %v1126
        %v4950 = vld [vmem:[%s9 + $0x1] sm:$0x1]
        %v4951 = vlaneseq
        %v4952 = vshrl.u32 %v4951, 7
        %v4953 = vsub.s32 0, %v4952
        %v4954 = vrot.slane %v4950, %v4953
        %v4955 = vmul.f32 %v4613, %v4954
        %v4956 = vmul.f32 %v4614, %v4954
        %v4957 = vmul.f32 %v4615, %v4954
        %v4958 = vmul.f32 %v4616, %v4954
        %v4959 = vmul.f32 %v4617, %v4954
        %v4960 = vmul.f32 %v4618, %v4954
        %v4961 = vmul.f32 %v4619, %v4954
        %v4962 = vmul.f32 %v4620, %v4954
        %v4963 = vmul.f32 %v4621, %v4954
        %v4964 = vmul.f32 %v4622, %v4954
        %v4965 = vmul.f32 %v4623, %v4954
        %v4966 = vmul.f32 %v4624, %v4954
        %v4967 = vmul.f32 %v4625, %v4954
        %v4968 = vmul.f32 %v4626, %v4954
        %v4969 = vmul.f32 %v4627, %v4954
        %v4970 = vmul.f32 %v4628, %v4954
        %v4971 = vmul.f32 %v4629, %v4954
        %v4972 = vmul.f32 %v4630, %v4954
        %v4973 = vmul.f32 %v4631, %v4954
        %v4974 = vmul.f32 %v4632, %v4954
        %v4975 = vmul.f32 %v4633, %v4954
        %v4976 = vmul.f32 %v4634, %v4954
        %v4977 = vmul.f32 %v4635, %v4954
        %v4978 = vmul.f32 %v4636, %v4954
        %v4979 = vmul.f32 %v4637, %v4954
        %v4980 = vmul.f32 %v4638, %v4954
        %v4981 = vmul.f32 %v4639, %v4954
        %v4982 = vmul.f32 %v4640, %v4954
        %v4983 = vmul.f32 %v4641, %v4954
        %v4984 = vmul.f32 %v4642, %v4954
        %v4985 = vmul.f32 %v4643, %v4954
        %v4986 = vmul.f32 %v4644, %v4954
        %v4987 = vld [vmem:[%s9 + $0x4] sm:$0x1]
        %v4988 = vlaneseq
        %v4989 = vshrl.u32 %v4988, 7
        %v4990 = vsub.s32 0, %v4989
        %v4991 = vrot.slane %v4987, %v4990
        %v4992 = vmul.f32 %v4615, %v4991
        %v4993 = vmul.f32 %v4616, %v4991
        %v4994 = vmul.f32 %v4617, %v4991
        %v4995 = vmul.f32 %v4618, %v4991
        %v4996 = vmul.f32 %v4619, %v4991
        %v4997 = vmul.f32 %v4620, %v4991
        %v4998 = vmul.f32 %v4621, %v4991
        %v4999 = vmul.f32 %v4622, %v4991
        %v5000 = vmul.f32 %v4623, %v4991
        %v5001 = vmul.f32 %v4624, %v4991
        %v5002 = vmul.f32 %v4625, %v4991
        %v5003 = vmul.f32 %v4626, %v4991
        %v5004 = vmul.f32 %v4627, %v4991
        %v5005 = vmul.f32 %v4628, %v4991
        %v5006 = vmul.f32 %v4629, %v4991
        %v5007 = vmul.f32 %v4630, %v4991
        %v5008 = vmul.f32 %v4631, %v4991
        %v5009 = vmul.f32 %v4632, %v4991
        %v5010 = vmul.f32 %v4633, %v4991
        %v5011 = vmul.f32 %v4634, %v4991
        %v5012 = vmul.f32 %v4635, %v4991
        %v5013 = vmul.f32 %v4636, %v4991
        %v5014 = vmul.f32 %v4637, %v4991
        %v5015 = vmul.f32 %v4638, %v4991
        %v5016 = vmul.f32 %v4639, %v4991
        %v5017 = vmul.f32 %v4640, %v4991
        %v5018 = vmul.f32 %v4641, %v4991
        %v5019 = vmul.f32 %v4642, %v4991
        %v5020 = vmul.f32 %v4643, %v4991
        %v5021 = vmul.f32 %v4644, %v4991
        %v5022 = vmul.f32 %v4682, %v4991
        %v5023 = vmul.f32 %v4683, %v4991
        %v5024 = vadd.f32 %v4955, %v4992
        %v5025 = vadd.f32 %v4956, %v4993
        %v5026 = vadd.f32 %v4957, %v4994
        %v5027 = vadd.f32 %v4958, %v4995
        %v5028 = vadd.f32 %v4959, %v4996
        %v5029 = vadd.f32 %v4960, %v4997
        %v5030 = vadd.f32 %v4961, %v4998
        %v5031 = vadd.f32 %v4962, %v4999
        %v5032 = vadd.f32 %v4963, %v5000
        %v5033 = vadd.f32 %v4964, %v5001
        %v5034 = vadd.f32 %v4965, %v5002
        %v5035 = vadd.f32 %v4966, %v5003
        %v5036 = vadd.f32 %v4967, %v5004
        %v5037 = vadd.f32 %v4968, %v5005
        %v5038 = vadd.f32 %v4969, %v5006
        %v5039 = vadd.f32 %v4970, %v5007
        %v5040 = vadd.f32 %v4971, %v5008
        %v5041 = vadd.f32 %v4972, %v5009
        %v5042 = vadd.f32 %v4973, %v5010
        %v5043 = vadd.f32 %v4974, %v5011
        %v5044 = vadd.f32 %v4975, %v5012
        %v5045 = vadd.f32 %v4976, %v5013
        %v5046 = vadd.f32 %v4977, %v5014
        %v5047 = vadd.f32 %v4978, %v5015
        %v5048 = vadd.f32 %v4979, %v5016
        %v5049 = vadd.f32 %v4980, %v5017
        %v5050 = vadd.f32 %v4981, %v5018
        %v5051 = vadd.f32 %v4982, %v5019
        %v5052 = vadd.f32 %v4983, %v5020
        %v5053 = vadd.f32 %v4984, %v5021
        %v5054 = vadd.f32 %v4985, %v5022
        %v5055 = vadd.f32 %v4986, %v5023
        %v5056 = vld [vmem:[%s9 + $0x7] sm:$0x1]
        %v5057 = vlaneseq
        %v5058 = vshrl.u32 %v5057, 7
        %v5059 = vsub.s32 0, %v5058
        %v5060 = vrot.slane %v5056, %v5059
        %v5061 = vmul.f32 %v4753, %v5060
        %v5062 = vmul.f32 %v4754, %v5060
        %v5063 = vmul.f32 %v4755, %v5060
        %v5064 = vmul.f32 %v4756, %v5060
        %v5065 = vmul.f32 %v4757, %v5060
        %v5066 = vmul.f32 %v4758, %v5060
        %v5067 = vmul.f32 %v4759, %v5060
        %v5068 = vmul.f32 %v4760, %v5060
        %v5069 = vmul.f32 %v4761, %v5060
        %v5070 = vmul.f32 %v4762, %v5060
        %v5071 = vmul.f32 %v4763, %v5060
        %v5072 = vmul.f32 %v4764, %v5060
        %v5073 = vmul.f32 %v4765, %v5060
        %v5074 = vmul.f32 %v4766, %v5060
        %v5075 = vmul.f32 %v4767, %v5060
        %v5076 = vmul.f32 %v4768, %v5060
        %v5077 = vmul.f32 %v4769, %v5060
        %v5078 = vmul.f32 %v4770, %v5060
        %v5079 = vmul.f32 %v4771, %v5060
        %v5080 = vmul.f32 %v4772, %v5060
        %v5081 = vmul.f32 %v4773, %v5060
        %v5082 = vmul.f32 %v4774, %v5060
        %v5083 = vmul.f32 %v4775, %v5060
        %v5084 = vmul.f32 %v4776, %v5060
        %v5085 = vmul.f32 %v4777, %v5060
        %v5086 = vmul.f32 %v4778, %v5060
        %v5087 = vmul.f32 %v4779, %v5060
        %v5088 = vmul.f32 %v4780, %v5060
        %v5089 = vmul.f32 %v4781, %v5060
        %v5090 = vmul.f32 %v4782, %v5060
        %v5091 = vmul.f32 %v4783, %v5060
        %v5092 = vmul.f32 %v4784, %v5060
        %v5093 = vadd.f32 %v5024, %v5061
        %v5094 = vadd.f32 %v5025, %v5062
        %v5095 = vadd.f32 %v5026, %v5063
        %v5096 = vadd.f32 %v5027, %v5064
        %v5097 = vadd.f32 %v5028, %v5065
        %v5098 = vadd.f32 %v5029, %v5066
        %v5099 = vadd.f32 %v5030, %v5067
        %v5100 = vadd.f32 %v5031, %v5068
        %v5101 = vadd.f32 %v5032, %v5069
        %v5102 = vadd.f32 %v5033, %v5070
        %v5103 = vadd.f32 %v5034, %v5071
        %v5104 = vadd.f32 %v5035, %v5072
        %v5105 = vadd.f32 %v5036, %v5073
        %v5106 = vadd.f32 %v5037, %v5074
        %v5107 = vadd.f32 %v5038, %v5075
        %v5108 = vadd.f32 %v5039, %v5076
        %v5109 = vadd.f32 %v5040, %v5077
        %v5110 = vadd.f32 %v5041, %v5078
        %v5111 = vadd.f32 %v5042, %v5079
        %v5112 = vadd.f32 %v5043, %v5080
        %v5113 = vadd.f32 %v5044, %v5081
        %v5114 = vadd.f32 %v5045, %v5082
        %v5115 = vadd.f32 %v5046, %v5083
        %v5116 = vadd.f32 %v5047, %v5084
        %v5117 = vadd.f32 %v5048, %v5085
        %v5118 = vadd.f32 %v5049, %v5086
        %v5119 = vadd.f32 %v5050, %v5087
        %v5120 = vadd.f32 %v5051, %v5088
        %v5121 = vadd.f32 %v5052, %v5089
        %v5122 = vadd.f32 %v5053, %v5090
        %v5123 = vadd.f32 %v5054, %v5091
        %v5124 = vadd.f32 %v5055, %v5092
        %v5125 = vadd.f32 %v4918, %v5093
        %v5126 = vadd.f32 %v4919, %v5094
        %v5127 = vadd.f32 %v4920, %v5095
        %v5128 = vadd.f32 %v4921, %v5096
        %v5129 = vadd.f32 %v4922, %v5097
        %v5130 = vadd.f32 %v4923, %v5098
        %v5131 = vadd.f32 %v4924, %v5099
        %v5132 = vadd.f32 %v4925, %v5100
        %v5133 = vadd.f32 %v4926, %v5101
        %v5134 = vadd.f32 %v4927, %v5102
        %v5135 = vadd.f32 %v4928, %v5103
        %v5136 = vadd.f32 %v4929, %v5104
        %v5137 = vadd.f32 %v4930, %v5105
        %v5138 = vadd.f32 %v4931, %v5106
        %v5139 = vadd.f32 %v4932, %v5107
        %v5140 = vadd.f32 %v4933, %v5108
        %v5141 = vadd.f32 %v4934, %v5109
        %v5142 = vadd.f32 %v4935, %v5110
        %v5143 = vadd.f32 %v4936, %v5111
        %v5144 = vadd.f32 %v4937, %v5112
        %v5145 = vadd.f32 %v4938, %v5113
        %v5146 = vadd.f32 %v4939, %v5114
        %v5147 = vadd.f32 %v4940, %v5115
        %v5148 = vadd.f32 %v4941, %v5116
        %v5149 = vadd.f32 %v4942, %v5117
        %v5150 = vadd.f32 %v4943, %v5118
        %v5151 = vadd.f32 %v4944, %v5119
        %v5152 = vadd.f32 %v4945, %v5120
        %v5153 = vadd.f32 %v4946, %v5121
        %v5154 = vadd.f32 %v4947, %v5122
        %v5155 = vadd.f32 %v4948, %v5123
        %v5156 = vadd.f32 %v4949, %v5124
        %v5157 = vld [vmem:[%s9 + $0x2] sm:$0x1]
        %v5158 = vlaneseq
        %v5159 = vshrl.u32 %v5158, 7
        %v5160 = vsub.s32 0, %v5159
        %v5161 = vrot.slane %v5157, %v5160
        %v5162 = vmul.f32 %v4613, %v5161
        %v5163 = vmul.f32 %v4614, %v5161
        %v5164 = vmul.f32 %v4615, %v5161
        %v5165 = vmul.f32 %v4616, %v5161
        %v5166 = vmul.f32 %v4617, %v5161
        %v5167 = vmul.f32 %v4618, %v5161
        %v5168 = vmul.f32 %v4619, %v5161
        %v5169 = vmul.f32 %v4620, %v5161
        %v5170 = vmul.f32 %v4621, %v5161
        %v5171 = vmul.f32 %v4622, %v5161
        %v5172 = vmul.f32 %v4623, %v5161
        %v5173 = vmul.f32 %v4624, %v5161
        %v5174 = vmul.f32 %v4625, %v5161
        %v5175 = vmul.f32 %v4626, %v5161
        %v5176 = vmul.f32 %v4627, %v5161
        %v5177 = vmul.f32 %v4628, %v5161
        %v5178 = vmul.f32 %v4629, %v5161
        %v5179 = vmul.f32 %v4630, %v5161
        %v5180 = vmul.f32 %v4631, %v5161
        %v5181 = vmul.f32 %v4632, %v5161
        %v5182 = vmul.f32 %v4633, %v5161
        %v5183 = vmul.f32 %v4634, %v5161
        %v5184 = vmul.f32 %v4635, %v5161
        %v5185 = vmul.f32 %v4636, %v5161
        %v5186 = vmul.f32 %v4637, %v5161
        %v5187 = vmul.f32 %v4638, %v5161
        %v5188 = vmul.f32 %v4639, %v5161
        %v5189 = vmul.f32 %v4640, %v5161
        %v5190 = vmul.f32 %v4641, %v5161
        %v5191 = vmul.f32 %v4642, %v5161
        %v5192 = vmul.f32 %v4643, %v5161
        %v5193 = vmul.f32 %v4644, %v5161
        %v5194 = vld [vmem:[%s9 + $0x5] sm:$0x1]
        %v5195 = vlaneseq
        %v5196 = vshrl.u32 %v5195, 7
        %v5197 = vsub.s32 0, %v5196
        %v5198 = vrot.slane %v5194, %v5197
        %v5199 = vmul.f32 %v4615, %v5198
        %v5200 = vmul.f32 %v4616, %v5198
        %v5201 = vmul.f32 %v4617, %v5198
        %v5202 = vmul.f32 %v4618, %v5198
        %v5203 = vmul.f32 %v4619, %v5198
        %v5204 = vmul.f32 %v4620, %v5198
        %v5205 = vmul.f32 %v4621, %v5198
        %v5206 = vmul.f32 %v4622, %v5198
        %v5207 = vmul.f32 %v4623, %v5198
        %v5208 = vmul.f32 %v4624, %v5198
        %v5209 = vmul.f32 %v4625, %v5198
        %v5210 = vmul.f32 %v4626, %v5198
        %v5211 = vmul.f32 %v4627, %v5198
        %v5212 = vmul.f32 %v4628, %v5198
        %v5213 = vmul.f32 %v4629, %v5198
        %v5214 = vmul.f32 %v4630, %v5198
        %v5215 = vmul.f32 %v4631, %v5198
        %v5216 = vmul.f32 %v4632, %v5198
        %v5217 = vmul.f32 %v4633, %v5198
        %v5218 = vmul.f32 %v4634, %v5198
        %v5219 = vmul.f32 %v4635, %v5198
        %v5220 = vmul.f32 %v4636, %v5198
        %v5221 = vmul.f32 %v4637, %v5198
        %v5222 = vmul.f32 %v4638, %v5198
        %v5223 = vmul.f32 %v4639, %v5198
        %v5224 = vmul.f32 %v4640, %v5198
        %v5225 = vmul.f32 %v4641, %v5198
        %v5226 = vmul.f32 %v4642, %v5198
        %v5227 = vmul.f32 %v4643, %v5198
        %v5228 = vmul.f32 %v4644, %v5198
        %v5229 = vmul.f32 %v4682, %v5198
        %v5230 = vmul.f32 %v4683, %v5198
        %v5231 = vadd.f32 %v5162, %v5199
        %v5232 = vadd.f32 %v5163, %v5200
        %v5233 = vadd.f32 %v5164, %v5201
        %v5234 = vadd.f32 %v5165, %v5202
        %v5235 = vadd.f32 %v5166, %v5203
        %v5236 = vadd.f32 %v5167, %v5204
        %v5237 = vadd.f32 %v5168, %v5205
        %v5238 = vadd.f32 %v5169, %v5206
        %v5239 = vadd.f32 %v5170, %v5207
        %v5240 = vadd.f32 %v5171, %v5208
        %v5241 = vadd.f32 %v5172, %v5209
        %v5242 = vadd.f32 %v5173, %v5210
        %v5243 = vadd.f32 %v5174, %v5211
        %v5244 = vadd.f32 %v5175, %v5212
        %v5245 = vadd.f32 %v5176, %v5213
        %v5246 = vadd.f32 %v5177, %v5214
        %v5247 = vadd.f32 %v5178, %v5215
        %v5248 = vadd.f32 %v5179, %v5216
        %v5249 = vadd.f32 %v5180, %v5217
        %v5250 = vadd.f32 %v5181, %v5218
        %v5251 = vadd.f32 %v5182, %v5219
        %v5252 = vadd.f32 %v5183, %v5220
        %v5253 = vadd.f32 %v5184, %v5221
        %v5254 = vadd.f32 %v5185, %v5222
        %v5255 = vadd.f32 %v5186, %v5223
        %v5256 = vadd.f32 %v5187, %v5224
        %v5257 = vadd.f32 %v5188, %v5225
        %v5258 = vadd.f32 %v5189, %v5226
        %v5259 = vadd.f32 %v5190, %v5227
        %v5260 = vadd.f32 %v5191, %v5228
        %v5261 = vadd.f32 %v5192, %v5229
        %v5262 = vadd.f32 %v5193, %v5230
        %v5263 = vld [vmem:[%s9 + $0x8] sm:$0x1]
        %v5264 = vlaneseq
        %v5265 = vshrl.u32 %v5264, 7
        %v5266 = vsub.s32 0, %v5265
        %v5267 = vrot.slane %v5263, %v5266
        %v5268 = vmul.f32 %v4753, %v5267
        %v5269 = vmul.f32 %v4754, %v5267
        %v5270 = vmul.f32 %v4755, %v5267
        %v5271 = vmul.f32 %v4756, %v5267
        %v5272 = vmul.f32 %v4757, %v5267
        %v5273 = vmul.f32 %v4758, %v5267
        %v5274 = vmul.f32 %v4759, %v5267
        %v5275 = vmul.f32 %v4760, %v5267
        %v5276 = vmul.f32 %v4761, %v5267
        %v5277 = vmul.f32 %v4762, %v5267
        %v5278 = vmul.f32 %v4763, %v5267
        %v5279 = vmul.f32 %v4764, %v5267
        %v5280 = vmul.f32 %v4765, %v5267
        %v5281 = vmul.f32 %v4766, %v5267
        %v5282 = vmul.f32 %v4767, %v5267
        %v5283 = vmul.f32 %v4768, %v5267
        %v5284 = vmul.f32 %v4769, %v5267
        %v5285 = vmul.f32 %v4770, %v5267
        %v5286 = vmul.f32 %v4771, %v5267
        %v5287 = vmul.f32 %v4772, %v5267
        %v5288 = vmul.f32 %v4773, %v5267
        %v5289 = vmul.f32 %v4774, %v5267
        %v5290 = vmul.f32 %v4775, %v5267
        %v5291 = vmul.f32 %v4776, %v5267
        %v5292 = vmul.f32 %v4777, %v5267
        %v5293 = vmul.f32 %v4778, %v5267
        %v5294 = vmul.f32 %v4779, %v5267
        %v5295 = vmul.f32 %v4780, %v5267
        %v5296 = vmul.f32 %v4781, %v5267
        %v5297 = vmul.f32 %v4782, %v5267
        %v5298 = vmul.f32 %v4783, %v5267
        %v5299 = vmul.f32 %v4784, %v5267
        %v5300 = vadd.f32 %v5231, %v5268
        %v5301 = vadd.f32 %v5232, %v5269
        %v5302 = vadd.f32 %v5233, %v5270
        %v5303 = vadd.f32 %v5234, %v5271
        %v5304 = vadd.f32 %v5235, %v5272
        %v5305 = vadd.f32 %v5236, %v5273
        %v5306 = vadd.f32 %v5237, %v5274
        %v5307 = vadd.f32 %v5238, %v5275
        %v5308 = vadd.f32 %v5239, %v5276
        %v5309 = vadd.f32 %v5240, %v5277
        %v5310 = vadd.f32 %v5241, %v5278
        %v5311 = vadd.f32 %v5242, %v5279
        %v5312 = vadd.f32 %v5243, %v5280
        %v5313 = vadd.f32 %v5244, %v5281
        %v5314 = vadd.f32 %v5245, %v5282
        %v5315 = vadd.f32 %v5246, %v5283
        %v5316 = vadd.f32 %v5247, %v5284
        %v5317 = vadd.f32 %v5248, %v5285
        %v5318 = vadd.f32 %v5249, %v5286
        %v5319 = vadd.f32 %v5250, %v5287
        %v5320 = vadd.f32 %v5251, %v5288
        %v5321 = vadd.f32 %v5252, %v5289
        %v5322 = vadd.f32 %v5253, %v5290
        %v5323 = vadd.f32 %v5254, %v5291
        %v5324 = vadd.f32 %v5255, %v5292
        %v5325 = vadd.f32 %v5256, %v5293
        %v5326 = vadd.f32 %v5257, %v5294
        %v5327 = vadd.f32 %v5258, %v5295
        %v5328 = vadd.f32 %v5259, %v5296
        %v5329 = vadd.f32 %v5260, %v5297
        %v5330 = vadd.f32 %v5261, %v5298
        %v5331 = vadd.f32 %v5262, %v5299
        %v5332 = vrot.slane %v5300, 1
        %v5333 = vrot.slane %v5301, 1
        %v5334 = vrot.slane %v5302, 1
        %v5335 = vrot.slane %v5303, 1
        %v5336 = vrot.slane %v5304, 1
        %v5337 = vrot.slane %v5305, 1
        %v5338 = vrot.slane %v5306, 1
        %v5339 = vrot.slane %v5307, 1
        %v5340 = vrot.slane %v5308, 1
        %v5341 = vrot.slane %v5309, 1
        %v5342 = vrot.slane %v5310, 1
        %v5343 = vrot.slane %v5311, 1
        %v5344 = vrot.slane %v5312, 1
        %v5345 = vrot.slane %v5313, 1
        %v5346 = vrot.slane %v5314, 1
        %v5347 = vrot.slane %v5315, 1
        %v5348 = vrot.slane %v5316, 1
        %v5349 = vrot.slane %v5317, 1
        %v5350 = vrot.slane %v5318, 1
        %v5351 = vrot.slane %v5319, 1
        %v5352 = vrot.slane %v5320, 1
        %v5353 = vrot.slane %v5321, 1
        %v5354 = vrot.slane %v5322, 1
        %v5355 = vrot.slane %v5323, 1
        %v5356 = vrot.slane %v5324, 1
        %v5357 = vrot.slane %v5325, 1
        %v5358 = vrot.slane %v5326, 1
        %v5359 = vrot.slane %v5327, 1
        %v5360 = vrot.slane %v5328, 1
        %v5361 = vrot.slane %v5329, 1
        %v5362 = vrot.slane %v5330, 1
        %v5363 = vrot.slane %v5331, 1
        %v5364 = vsel %vm2135, %v5362, %v5363
        %v5365 = vsel %vm2135, %v5361, %v5362
        %v5366 = vsel %vm2135, %v5360, %v5361
        %v5367 = vsel %vm2135, %v5359, %v5360
        %v5368 = vsel %vm2135, %v5358, %v5359
        %v5369 = vsel %vm2135, %v5357, %v5358
        %v5370 = vsel %vm2135, %v5356, %v5357
        %v5371 = vsel %vm2135, %v5355, %v5356
        %v5372 = vsel %vm2135, %v5354, %v5355
        %v5373 = vsel %vm2135, %v5353, %v5354
        %v5374 = vsel %vm2135, %v5352, %v5353
        %v5375 = vsel %vm2135, %v5351, %v5352
        %v5376 = vsel %vm2135, %v5350, %v5351
        %v5377 = vsel %vm2135, %v5349, %v5350
        %v5378 = vsel %vm2135, %v5348, %v5349
        %v5379 = vsel %vm2135, %v5347, %v5348
        %v5380 = vsel %vm2135, %v5346, %v5347
        %v5381 = vsel %vm2135, %v5345, %v5346
        %v5382 = vsel %vm2135, %v5344, %v5345
        %v5383 = vsel %vm2135, %v5343, %v5344
        %v5384 = vsel %vm2135, %v5342, %v5343
        %v5385 = vsel %vm2135, %v5341, %v5342
        %v5386 = vsel %vm2135, %v5340, %v5341
        %v5387 = vsel %vm2135, %v5339, %v5340
        %v5388 = vsel %vm2135, %v5338, %v5339
        %v5389 = vsel %vm2135, %v5337, %v5338
        %v5390 = vsel %vm2135, %v5336, %v5337
        %v5391 = vsel %vm2135, %v5335, %v5336
        %v5392 = vsel %vm2135, %v5334, %v5335
        %v5393 = vsel %vm2135, %v5333, %v5334
        %v5394 = vsel %vm2135, %v5332, %v5333
        %v5395 = vsel %vm2135, %v5363, %v5332
        %v5396 = vmul.f32 %v5394, %v1287
        %v5397 = vmul.f32 %v5393, %v1288
        %v5398 = vmul.f32 %v5392, %v1289
        %v5399 = vmul.f32 %v5391, %v1290
        %v5400 = vmul.f32 %v5390, %v1291
        %v5401 = vmul.f32 %v5389, %v1292
        %v5402 = vmul.f32 %v5388, %v1293
        %v5403 = vmul.f32 %v5387, %v1294
        %v5404 = vmul.f32 %v5386, %v1295
        %v5405 = vmul.f32 %v5385, %v1296
        %v5406 = vmul.f32 %v5384, %v1297
        %v5407 = vmul.f32 %v5383, %v1298
        %v5408 = vmul.f32 %v5382, %v1299
        %v5409 = vmul.f32 %v5381, %v1300
        %v5410 = vmul.f32 %v5380, %v1301
        %v5411 = vmul.f32 %v5379, %v1302
        %v5412 = vmul.f32 %v5378, %v1303
        %v5413 = vmul.f32 %v5377, %v1304
        %v5414 = vmul.f32 %v5376, %v1305
        %v5415 = vmul.f32 %v5375, %v1306
        %v5416 = vmul.f32 %v5374, %v1307
        %v5417 = vmul.f32 %v5373, %v1308
        %v5418 = vmul.f32 %v5372, %v1309
        %v5419 = vmul.f32 %v5371, %v1310
        %v5420 = vmul.f32 %v5370, %v1311
        %v5421 = vmul.f32 %v5369, %v1312
        %v5422 = vmul.f32 %v5368, %v1313
        %v5423 = vmul.f32 %v5367, %v1314
        %v5424 = vmul.f32 %v5366, %v1315
        %v5425 = vmul.f32 %v5365, %v1316
        %v5426 = vmul.f32 %v5364, %v1317
        %v5427 = vmul.f32 %v5395, %v1318
        %v5428 = vadd.f32 %v5125, %v5396
        %v5429 = vadd.f32 %v5126, %v5397
        %v5430 = vadd.f32 %v5127, %v5398
        %v5431 = vadd.f32 %v5128, %v5399
        %v5432 = vadd.f32 %v5129, %v5400
        %v5433 = vadd.f32 %v5130, %v5401
        %v5434 = vadd.f32 %v5131, %v5402
        %v5435 = vadd.f32 %v5132, %v5403
        %v5436 = vadd.f32 %v5133, %v5404
        %v5437 = vadd.f32 %v5134, %v5405
        %v5438 = vadd.f32 %v5135, %v5406
        %v5439 = vadd.f32 %v5136, %v5407
        %v5440 = vadd.f32 %v5137, %v5408
        %v5441 = vadd.f32 %v5138, %v5409
        %v5442 = vadd.f32 %v5139, %v5410
        %v5443 = vadd.f32 %v5140, %v5411
        %v5444 = vadd.f32 %v5141, %v5412
        %v5445 = vadd.f32 %v5142, %v5413
        %v5446 = vadd.f32 %v5143, %v5414
        %v5447 = vadd.f32 %v5144, %v5415
        %v5448 = vadd.f32 %v5145, %v5416
        %v5449 = vadd.f32 %v5146, %v5417
        %v5450 = vadd.f32 %v5147, %v5418
        %v5451 = vadd.f32 %v5148, %v5419
        %v5452 = vadd.f32 %v5149, %v5420
        %v5453 = vadd.f32 %v5150, %v5421
        %v5454 = vadd.f32 %v5151, %v5422
        %v5455 = vadd.f32 %v5152, %v5423
        %v5456 = vadd.f32 %v5153, %v5424
        %v5457 = vadd.f32 %v5154, %v5425
        %v5458 = vadd.f32 %v5155, %v5426
        %v5459 = vadd.f32 %v5156, %v5427
        %v5460 = vld [vmem:[%s10] sm:$0x1]
        %v5462 = vlaneseq
        %v5463 = vshrl.u32 %v5462, 7
        %v5464 = vsub.s32 0, %v5463
        %v5465 = vrot.slane %v5460, %v5464
        %v5467 = vadd.f32 %v5428, %v5465
        %v5468 = vadd.f32 %v5429, %v5465
        %v5469 = vadd.f32 %v5430, %v5465
        %v5470 = vadd.f32 %v5431, %v5465
        %v5471 = vadd.f32 %v5432, %v5465
        %v5472 = vadd.f32 %v5433, %v5465
        %v5473 = vadd.f32 %v5434, %v5465
        %v5474 = vadd.f32 %v5435, %v5465
        %v5475 = vadd.f32 %v5436, %v5465
        %v5476 = vadd.f32 %v5437, %v5465
        %v5477 = vadd.f32 %v5438, %v5465
        %v5478 = vadd.f32 %v5439, %v5465
        %v5479 = vadd.f32 %v5440, %v5465
        %v5480 = vadd.f32 %v5441, %v5465
        %v5481 = vadd.f32 %v5442, %v5465
        %v5482 = vadd.f32 %v5443, %v5465
        %v5483 = vadd.f32 %v5444, %v5465
        %v5484 = vadd.f32 %v5445, %v5465
        %v5485 = vadd.f32 %v5446, %v5465
        %v5486 = vadd.f32 %v5447, %v5465
        %v5487 = vadd.f32 %v5448, %v5465
        %v5488 = vadd.f32 %v5449, %v5465
        %v5489 = vadd.f32 %v5450, %v5465
        %v5490 = vadd.f32 %v5451, %v5465
        %v5491 = vadd.f32 %v5452, %v5465
        %v5492 = vadd.f32 %v5453, %v5465
        %v5493 = vadd.f32 %v5454, %v5465
        %v5494 = vadd.f32 %v5455, %v5465
        %v5495 = vadd.f32 %v5456, %v5465
        %v5496 = vadd.f32 %v5457, %v5465
        %v5497 = vadd.f32 %v5458, %v5465
        %v5498 = vadd.f32 %v5459, %v5465
        %v5499 = vxor.u32 %v5467, 2147483648
        %v5500 = vxor.u32 %v5468, 2147483648
        %v5501 = vxor.u32 %v5469, 2147483648
        %v5502 = vxor.u32 %v5470, 2147483648
        %v5503 = vxor.u32 %v5471, 2147483648
        %v5504 = vxor.u32 %v5472, 2147483648
        %v5505 = vxor.u32 %v5473, 2147483648
        %v5506 = vxor.u32 %v5474, 2147483648
        %v5507 = vxor.u32 %v5475, 2147483648
        %v5508 = vxor.u32 %v5476, 2147483648
        %v5509 = vxor.u32 %v5477, 2147483648
        %v5510 = vxor.u32 %v5478, 2147483648
        %v5511 = vxor.u32 %v5479, 2147483648
        %v5512 = vxor.u32 %v5480, 2147483648
        %v5513 = vxor.u32 %v5481, 2147483648
        %v5514 = vxor.u32 %v5482, 2147483648
        %v5515 = vxor.u32 %v5483, 2147483648
        %v5516 = vxor.u32 %v5484, 2147483648
        %v5517 = vxor.u32 %v5485, 2147483648
        %v5518 = vxor.u32 %v5486, 2147483648
        %v5519 = vxor.u32 %v5487, 2147483648
        %v5520 = vxor.u32 %v5488, 2147483648
        %v5521 = vxor.u32 %v5489, 2147483648
        %v5522 = vxor.u32 %v5490, 2147483648
        %v5523 = vxor.u32 %v5491, 2147483648
        %v5524 = vxor.u32 %v5492, 2147483648
        %v5525 = vxor.u32 %v5493, 2147483648
        %v5526 = vxor.u32 %v5494, 2147483648
        %v5527 = vxor.u32 %v5495, 2147483648
        %v5528 = vxor.u32 %v5496, 2147483648
        %v5529 = vxor.u32 %v5497, 2147483648
        %v5530 = vxor.u32 %v5498, 2147483648
        %v5531 = vmul.f32 %v5499, 1.442695
        %v5532 = vpow.pop %v5531
        %v5533 = vmul.f32 %v5500, 1.442695
        %v5534 = vpow.pop %v5533
        %v5535 = vmul.f32 %v5501, 1.442695
        %v5536 = vpow.pop %v5535
        %v5537 = vmul.f32 %v5502, 1.442695
        %v5538 = vpow.pop %v5537
        %v5539 = vmul.f32 %v5503, 1.442695
        %v5540 = vpow.pop %v5539
        %v5541 = vmul.f32 %v5504, 1.442695
        %v5542 = vpow.pop %v5541
        %v5543 = vmul.f32 %v5505, 1.442695
        %v5544 = vpow.pop %v5543
        %v5545 = vmul.f32 %v5506, 1.442695
        %v5546 = vpow.pop %v5545
        %v5547 = vmul.f32 %v5507, 1.442695
        %v5548 = vpow.pop %v5547
        %v5549 = vmul.f32 %v5508, 1.442695
        %v5550 = vpow.pop %v5549
        %v5551 = vmul.f32 %v5509, 1.442695
        %v5552 = vpow.pop %v5551
        %v5553 = vmul.f32 %v5510, 1.442695
        %v5554 = vpow.pop %v5553
        %v5555 = vmul.f32 %v5511, 1.442695
        %v5556 = vpow.pop %v5555
        %v5557 = vmul.f32 %v5512, 1.442695
        %v5558 = vpow.pop %v5557
        %v5559 = vmul.f32 %v5513, 1.442695
        %v5560 = vpow.pop %v5559
        %v5561 = vmul.f32 %v5514, 1.442695
        %v5562 = vpow.pop %v5561
        %v5563 = vmul.f32 %v5515, 1.442695
        %v5564 = vpow.pop %v5563
        %v5565 = vmul.f32 %v5516, 1.442695
        %v5566 = vpow.pop %v5565
        %v5567 = vmul.f32 %v5517, 1.442695
        %v5568 = vpow.pop %v5567
        %v5569 = vmul.f32 %v5518, 1.442695
        %v5570 = vpow.pop %v5569
        %v5571 = vmul.f32 %v5519, 1.442695
        %v5572 = vpow.pop %v5571
        %v5573 = vmul.f32 %v5520, 1.442695
        %v5574 = vpow.pop %v5573
        %v5575 = vmul.f32 %v5521, 1.442695
        %v5576 = vpow.pop %v5575
        %v5577 = vmul.f32 %v5522, 1.442695
        %v5578 = vpow.pop %v5577
        %v5579 = vmul.f32 %v5523, 1.442695
        %v5580 = vpow.pop %v5579
        %v5581 = vmul.f32 %v5524, 1.442695
        %v5582 = vpow.pop %v5581
        %v5583 = vmul.f32 %v5525, 1.442695
        %v5584 = vpow.pop %v5583
        %v5585 = vmul.f32 %v5526, 1.442695
        %v5586 = vpow.pop %v5585
        %v5587 = vmul.f32 %v5527, 1.442695
        %v5588 = vpow.pop %v5587
        %v5589 = vmul.f32 %v5528, 1.442695
        %v5590 = vpow.pop %v5589
        %v5591 = vmul.f32 %v5529, 1.442695
        %v5592 = vpow.pop %v5591
        %v5593 = vmul.f32 %v5530, 1.442695
        %v5594 = vpow.pop %v5593
        %v5595 = vadd.f32 %v5532, 1.0
        %v5596 = vadd.f32 %v5534, 1.0
        %v5597 = vadd.f32 %v5536, 1.0
        %v5598 = vadd.f32 %v5538, 1.0
        %v5599 = vadd.f32 %v5540, 1.0
        %v5600 = vadd.f32 %v5542, 1.0
        %v5601 = vadd.f32 %v5544, 1.0
        %v5602 = vadd.f32 %v5546, 1.0
        %v5603 = vadd.f32 %v5548, 1.0
        %v5604 = vadd.f32 %v5550, 1.0
        %v5605 = vadd.f32 %v5552, 1.0
        %v5606 = vadd.f32 %v5554, 1.0
        %v5607 = vadd.f32 %v5556, 1.0
        %v5608 = vadd.f32 %v5558, 1.0
        %v5609 = vadd.f32 %v5560, 1.0
        %v5610 = vadd.f32 %v5562, 1.0
        %v5611 = vadd.f32 %v5564, 1.0
        %v5612 = vadd.f32 %v5566, 1.0
        %v5613 = vadd.f32 %v5568, 1.0
        %v5614 = vadd.f32 %v5570, 1.0
        %v5615 = vadd.f32 %v5572, 1.0
        %v5616 = vadd.f32 %v5574, 1.0
        %v5617 = vadd.f32 %v5576, 1.0
        %v5618 = vadd.f32 %v5578, 1.0
        %v5619 = vadd.f32 %v5580, 1.0
        %v5620 = vadd.f32 %v5582, 1.0
        %v5621 = vadd.f32 %v5584, 1.0
        %v5622 = vadd.f32 %v5586, 1.0
        %v5623 = vadd.f32 %v5588, 1.0
        %v5624 = vadd.f32 %v5590, 1.0
        %v5625 = vadd.f32 %v5592, 1.0
        %v5626 = vadd.f32 %v5594, 1.0
        %v5627 = vrcp.pop %v5595
        %v5628 = vmul.f32 1.0, %v5627
        %v5629 = vrcp.pop %v5596
        %v5630 = vmul.f32 1.0, %v5629
        %v5631 = vrcp.pop %v5597
        %v5632 = vmul.f32 1.0, %v5631
        %v5633 = vrcp.pop %v5598
        %v5634 = vmul.f32 1.0, %v5633
        %v5635 = vrcp.pop %v5599
        %v5636 = vmul.f32 1.0, %v5635
        %v5637 = vrcp.pop %v5600
        %v5638 = vmul.f32 1.0, %v5637
        %v5639 = vrcp.pop %v5601
        %v5640 = vmul.f32 1.0, %v5639
        %v5641 = vrcp.pop %v5602
        %v5642 = vmul.f32 1.0, %v5641
        %v5643 = vrcp.pop %v5603
        %v5644 = vmul.f32 1.0, %v5643
        %v5645 = vrcp.pop %v5604
        %v5646 = vmul.f32 1.0, %v5645
        %v5647 = vrcp.pop %v5605
        %v5648 = vmul.f32 1.0, %v5647
        %v5649 = vrcp.pop %v5606
        %v5650 = vmul.f32 1.0, %v5649
        %v5651 = vrcp.pop %v5607
        %v5652 = vmul.f32 1.0, %v5651
        %v5653 = vrcp.pop %v5608
        %v5654 = vmul.f32 1.0, %v5653
        %v5655 = vrcp.pop %v5609
        %v5656 = vmul.f32 1.0, %v5655
        %v5657 = vrcp.pop %v5610
        %v5658 = vmul.f32 1.0, %v5657
        %v5659 = vrcp.pop %v5611
        %v5660 = vmul.f32 1.0, %v5659
        %v5661 = vrcp.pop %v5612
        %v5662 = vmul.f32 1.0, %v5661
        %v5663 = vrcp.pop %v5613
        %v5664 = vmul.f32 1.0, %v5663
        %v5665 = vrcp.pop %v5614
        %v5666 = vmul.f32 1.0, %v5665
        %v5667 = vrcp.pop %v5615
        %v5668 = vmul.f32 1.0, %v5667
        %v5669 = vrcp.pop %v5616
        %v5670 = vmul.f32 1.0, %v5669
        %v5671 = vrcp.pop %v5617
        %v5672 = vmul.f32 1.0, %v5671
        %v5673 = vrcp.pop %v5618
        %v5674 = vmul.f32 1.0, %v5673
        %v5675 = vrcp.pop %v5619
        %v5676 = vmul.f32 1.0, %v5675
        %v5677 = vrcp.pop %v5620
        %v5678 = vmul.f32 1.0, %v5677
        %v5679 = vrcp.pop %v5621
        %v5680 = vmul.f32 1.0, %v5679
        %v5681 = vrcp.pop %v5622
        %v5682 = vmul.f32 1.0, %v5681
        %v5683 = vrcp.pop %v5623
        %v5684 = vmul.f32 1.0, %v5683
        %v5685 = vrcp.pop %v5624
        %v5686 = vmul.f32 1.0, %v5685
        %v5687 = vrcp.pop %v5625
        %v5688 = vmul.f32 1.0, %v5687
        %v5689 = vrcp.pop %v5626
        %v5690 = vmul.f32 1.0, %v5689
        %v5691 = vmul.f32 %v5467, %v5628
        %v5692 = vmul.f32 %v5468, %v5630
        %v5693 = vmul.f32 %v5469, %v5632
        %v5694 = vmul.f32 %v5470, %v5634
        %v5695 = vmul.f32 %v5471, %v5636
        %v5696 = vmul.f32 %v5472, %v5638
        %v5697 = vmul.f32 %v5473, %v5640
        %v5698 = vmul.f32 %v5474, %v5642
        %v5699 = vmul.f32 %v5475, %v5644
        %v5700 = vmul.f32 %v5476, %v5646
        %v5701 = vmul.f32 %v5477, %v5648
        %v5702 = vmul.f32 %v5478, %v5650
        %v5703 = vmul.f32 %v5479, %v5652
        %v5704 = vmul.f32 %v5480, %v5654
        %v5705 = vmul.f32 %v5481, %v5656
        %v5706 = vmul.f32 %v5482, %v5658
        %v5707 = vmul.f32 %v5483, %v5660
        %v5708 = vmul.f32 %v5484, %v5662
        %v5709 = vmul.f32 %v5485, %v5664
        %v5710 = vmul.f32 %v5486, %v5666
        %v5711 = vmul.f32 %v5487, %v5668
        %v5712 = vmul.f32 %v5488, %v5670
        %v5713 = vmul.f32 %v5489, %v5672
        %v5714 = vmul.f32 %v5490, %v5674
        %v5715 = vmul.f32 %v5491, %v5676
        %v5716 = vmul.f32 %v5492, %v5678
        %v5717 = vmul.f32 %v5493, %v5680
        %v5718 = vmul.f32 %v5494, %v5682
        %v5719 = vmul.f32 %v5495, %v5684
        %v5720 = vmul.f32 %v5496, %v5686
        %v5721 = vmul.f32 %v5497, %v5688
        %v5722 = vmul.f32 %v5498, %v5690
        %v5723 = vld [vmem:[%s442] sm:$0xff]
        %v5724 = vld [vmem:[%s442 + $0x8] sm:$0xff]
        %v5725 = vld [vmem:[%s442 + $0x10] sm:$0xff]
        %v5726 = vld [vmem:[%s442 + $0x18] sm:$0xff]
        %v5727 = vld [vmem:[%s442 + $0x20] sm:$0xff]
        %v5728 = vld [vmem:[%s442 + $0x28] sm:$0xff]
        %v5729 = vld [vmem:[%s442 + $0x30] sm:$0xff]
        %v5730 = vld [vmem:[%s442 + $0x38] sm:$0xff]
        %v5731 = vld [vmem:[%s442 + $0x40] sm:$0xff]
        %v5732 = vld [vmem:[%s442 + $0x48] sm:$0xff]
        %v5733 = vld [vmem:[%s442 + $0x50] sm:$0xff]
        %v5734 = vld [vmem:[%s442 + $0x58] sm:$0xff]
        %v5735 = vld [vmem:[%s442 + $0x60] sm:$0xff]
        %v5736 = vld [vmem:[%s442 + $0x68] sm:$0xff]
        %v5737 = vld [vmem:[%s442 + $0x70] sm:$0xff]
        %v5738 = vld [vmem:[%s442 + $0x78] sm:$0xff]
        %v5739 = vld [vmem:[%s442 + $0x80] sm:$0xff]
        %v5740 = vld [vmem:[%s442 + $0x88] sm:$0xff]
        %v5741 = vld [vmem:[%s442 + $0x90] sm:$0xff]
        %v5742 = vld [vmem:[%s442 + $0x98] sm:$0xff]
        %v5743 = vld [vmem:[%s442 + $0xa0] sm:$0xff]
        %v5744 = vld [vmem:[%s442 + $0xa8] sm:$0xff]
        %v5745 = vld [vmem:[%s442 + $0xb0] sm:$0xff]
        %v5746 = vld [vmem:[%s442 + $0xb8] sm:$0xff]
        %v5747 = vld [vmem:[%s442 + $0xc0] sm:$0xff]
        %v5748 = vld [vmem:[%s442 + $0xc8] sm:$0xff]
        %v5749 = vld [vmem:[%s442 + $0xd0] sm:$0xff]
        %v5750 = vld [vmem:[%s442 + $0xd8] sm:$0xff]
        %v5751 = vld [vmem:[%s442 + $0xe0] sm:$0xff]
        %v5752 = vld [vmem:[%s442 + $0xe8] sm:$0xff]
        %v5753 = vld [vmem:[%s442 + $0xf0] sm:$0xff]
        %v5754 = vld [vmem:[%s442 + $0xf8] sm:$0xff]
        %v5755 = vadd.f32 %v5691, %v5723
        %v5756 = vadd.f32 %v5692, %v5724
        %v5757 = vadd.f32 %v5693, %v5725
        %v5758 = vadd.f32 %v5694, %v5726
        %v5759 = vadd.f32 %v5695, %v5727
        %v5760 = vadd.f32 %v5696, %v5728
        %v5761 = vadd.f32 %v5697, %v5729
        %v5762 = vadd.f32 %v5698, %v5730
        %v5763 = vadd.f32 %v5699, %v5731
        %v5764 = vadd.f32 %v5700, %v5732
        %v5765 = vadd.f32 %v5701, %v5733
        %v5766 = vadd.f32 %v5702, %v5734
        %v5767 = vadd.f32 %v5703, %v5735
        %v5768 = vadd.f32 %v5704, %v5736
        %v5769 = vadd.f32 %v5705, %v5737
        %v5770 = vadd.f32 %v5706, %v5738
        %v5771 = vadd.f32 %v5707, %v5739
        %v5772 = vadd.f32 %v5708, %v5740
        %v5773 = vadd.f32 %v5709, %v5741
        %v5774 = vadd.f32 %v5710, %v5742
        %v5775 = vadd.f32 %v5711, %v5743
        %v5776 = vadd.f32 %v5712, %v5744
        %v5777 = vadd.f32 %v5713, %v5745
        %v5778 = vadd.f32 %v5714, %v5746
        %v5779 = vadd.f32 %v5715, %v5747
        %v5780 = vadd.f32 %v5716, %v5748
        %v5781 = vadd.f32 %v5717, %v5749
        %v5782 = vadd.f32 %v5718, %v5750
        %v5783 = vadd.f32 %v5719, %v5751
        %v5784 = vadd.f32 %v5720, %v5752
        %v5785 = vadd.f32 %v5721, %v5753
        %v5786 = vadd.f32 %v5722, %v5754
        %5787 = vst [vmem:[%s512] sm:$0xff] %v5755
        %5788 = vst [vmem:[%s512 + $0x8] sm:$0xff] %v5756
        %5789 = vst [vmem:[%s512 + $0x10] sm:$0xff] %v5757
        %5790 = vst [vmem:[%s512 + $0x18] sm:$0xff] %v5758
        %5791 = vst [vmem:[%s512 + $0x20] sm:$0xff] %v5759
        %5792 = vst [vmem:[%s512 + $0x28] sm:$0xff] %v5760
        %5793 = vst [vmem:[%s512 + $0x30] sm:$0xff] %v5761
        %5794 = vst [vmem:[%s512 + $0x38] sm:$0xff] %v5762
        %5795 = vst [vmem:[%s512 + $0x40] sm:$0xff] %v5763
        %5796 = vst [vmem:[%s512 + $0x48] sm:$0xff] %v5764
        %5797 = vst [vmem:[%s512 + $0x50] sm:$0xff] %v5765
        %5798 = vst [vmem:[%s512 + $0x58] sm:$0xff] %v5766
        %5799 = vst [vmem:[%s512 + $0x60] sm:$0xff] %v5767
        %5800 = vst [vmem:[%s512 + $0x68] sm:$0xff] %v5768
        %5801 = vst [vmem:[%s512 + $0x70] sm:$0xff] %v5769
        %5802 = vst [vmem:[%s512 + $0x78] sm:$0xff] %v5770
        %5803 = vst [vmem:[%s512 + $0x80] sm:$0xff] %v5771
        %5804 = vst [vmem:[%s512 + $0x88] sm:$0xff] %v5772
        %5805 = vst [vmem:[%s512 + $0x90] sm:$0xff] %v5773
        %5806 = vst [vmem:[%s512 + $0x98] sm:$0xff] %v5774
        %5807 = vst [vmem:[%s512 + $0xa0] sm:$0xff] %v5775
        %5808 = vst [vmem:[%s512 + $0xa8] sm:$0xff] %v5776
        %5809 = vst [vmem:[%s512 + $0xb0] sm:$0xff] %v5777
        %5810 = vst [vmem:[%s512 + $0xb8] sm:$0xff] %v5778
        %5811 = vst [vmem:[%s512 + $0xc0] sm:$0xff] %v5779
        %5812 = vst [vmem:[%s512 + $0xc8] sm:$0xff] %v5780
        %5813 = vst [vmem:[%s512 + $0xd0] sm:$0xff] %v5781
        %5814 = vst [vmem:[%s512 + $0xd8] sm:$0xff] %v5782
        %5815 = vst [vmem:[%s512 + $0xe0] sm:$0xff] %v5783
        %5816 = vst [vmem:[%s512 + $0xe8] sm:$0xff] %v5784
        %5817 = vst [vmem:[%s512 + $0xf0] sm:$0xff] %v5785
        %5818 = vst [vmem:[%s512 + $0xf8] sm:$0xff] %v5786
        %s5819 = sand.u32 %s276, 1
        %s5820 = scalar_lea.sflag [#allocation5], %s5819
        %s5821 = sand.u32 %s276, 1
        %s5822 = smul.addr %s5821, 256
        %s5823 = scalar_lea.vmem [#allocation18], %s5822
        // Predicated region
        $region101: #{tpu_custom_call.1} parent=63 // pred_check
          %p5824 = pneg %p286
        $region102: #{tpu_custom_call.1} parent=63 // pred_check_branch
          %5826 = sbr.rel (%p5824) target = $region104
        $region103: #{tpu_custom_call.1} parent=63 // pred_region
          %s5828 = ssub.s32 4096, 4096
          %5829 = vsyncadd %s5820, %s5828
          %s5830 = smul.addr %s32, 32
          %s5831 = smul.addr %s5830, 128
          %s5832 = scalar_lea.hbm %s11, %s5831
          %s5833 = sshll.u32 %s5823, 4
          %s5834 = int_to_ptr.vmem [resolvable:$true] %s5833
          %5839 = dma.vmem_to_hbm [thread:$0]  %s5834, 4096, %s5832, %s5820, 128, 128, 8
        $region104: #{tpu_custom_call.1} parent=63 // pred_fallthru
          _
      $region64: #{tpu_custom_call.1} parent=5 // pred_fallthru
        _
      %p5840 = scmp.le.s32.totalorder 2, %s27
      // Predicated region
      $region105: #{tpu_custom_call.1} parent=5 // pred_check
        %p5841 = pneg %p5840
      $region106: #{tpu_custom_call.1} parent=5 // pred_check_branch
        %5843 = sbr.rel (%p5841) target = $region108
      $region107: #{tpu_custom_call.1} parent=5 // pred_region
        %s5844 = ssub.s32 %s27, 2
        // Predicated region
        $region109: #{tpu_custom_call.1} parent=107 // pred_check
          %p5845 = pneg %p292
        $region110: #{tpu_custom_call.1} parent=107 // pred_check_branch
          %5847 = sbr.rel (%p5845) target = $region112
        $region111: #{tpu_custom_call.1} parent=107 // pred_region
          %s5848 = sand.u32 %s277, 1
          %s5849 = scalar_lea.sflag [#allocation5], %s5848
          %s5850 = sand.u32 %s277, 1
          %s5851 = smul.addr %s5850, 256
          %s5852 = scalar_lea.vmem [#allocation18], %s5851
          %5853 = dma.done %s5849, 4096
        $region112: #{tpu_custom_call.1} parent=107 // pred_fallthru
          _
      $region108: #{tpu_custom_call.1} parent=5 // pred_fallthru
        _
    $region6: #{tpu_custom_call.1} parent=1 // loop_footer
      %s31 = sadd.s32 1, %s27
    $region7: #{tpu_custom_call.1} parent=1 // loop_footer_branch
      %26 = sbr.rel target = $region3
    $region8: #{tpu_custom_call.1} parent=1 // loop_exit
      _
    %5854 = vsyncpa [#allocation4], 1
    %s5855 = scalar_lea.sflag [#allocation4], 1
    %5856 = vsyncpa %s5855, 1
    %5857 = vsyncpa [#allocation7], 1
    %5858 = vsyncpa [#allocation10], 1
    %5859 = vsyncpa [#allocation13], 1
    %5860 = vsyncpa [#allocation16], 1
    %5861 = vsyncpa [#allocation5], 1
    %s5862 = scalar_lea.sflag [#allocation5], 1
    %5863 = vsyncpa %s5862, 1

</llo_original>
